<compile_context>
chip_gen: v7x
topology: tpu7x:2x2x1
jax: 0.10.0
libtpu: 0.0.40
codegen_flags: <defaults>
</compile_context>

<pallas_src>
import functools

import jax
import jax.numpy as jnp
from jax.experimental import pallas as pl
from jax.experimental.pallas import tpu as pltpu

_LANE = 128


# ---------------------------------------------------------------------------
# Pallas kernel: fused patch extraction + matmul + folded-BN bias + ReLU
# ---------------------------------------------------------------------------
def _convblock_kernel(x_ref, w_ref, b_ref, o_ref, *, kh, kw, stride, tr, wo, cin_g):
    # x_ref: (1, 1, Hp, Wp, Cin_g) bf16  -- full padded image of (n, g), resident
    # w_ref: (1, kh*kw, Cin_g, Cpad) bf16 -- BN-scale-folded weights (HWIO-flat)
    # b_ref: (1, 1, Cpad) f32             -- folded BN bias
    # o_ref: (1, 1, tr, wo, Cpad) bf16    -- one output row-band
    band = pl.program_id(2)
    row0 = band * tr * stride
    cpad = o_ref.shape[-1]

    rspan = (tr - 1) * stride + 1
    wspan = (wo - 1) * stride + 1

    acc = jnp.zeros((tr * wo, cpad), jnp.float32)
    for i in range(kh):
        for j in range(kw):
            # rows/cols needed by kernel tap (i, j) for this output row band
            tap = x_ref[0, 0, pl.ds(row0 + i, rspan), pl.ds(j, wspan), :]
            if stride > 1:
                # TODO(synk): stride>1 path uses strided in-register slicing;
                # only stride==1 is exercised by the test below.
                tap = tap[::stride, ::stride, :]
            patch = tap.reshape(tr * wo, cin_g)                 # bf16 (tr*wo, Cin_g)
            acc += jnp.dot(patch, w_ref[0, i * kw + j],
                           preferred_element_type=jnp.float32)  # MXU, f32 acc
    y = acc + b_ref[0]                    # folded BatchNorm bias (f32 epilogue)
    y = jnp.maximum(y, 0.0)               # ReLU in f32
    o_ref[...] = y.reshape(1, 1, tr, wo, cpad).astype(o_ref.dtype)


def _pick_row_band(ho, wo, target_rows=256):
    """Largest divisor of ho with band*wo <= max(target_rows, wo)."""
    best = 1
    for d in range(1, ho + 1):
        if ho % d == 0 and d * wo <= max(target_rows, wo):
            best = d
    return best


# ---------------------------------------------------------------------------
# Wrapper: layout prep (NCHW -> group-split NHWC), BN fold, single pallas_call
# ---------------------------------------------------------------------------
@functools.partial(jax.jit, static_argnames=("stride", "padding", "groups"))
def conv_block_forward(x, params, *, stride, padding, groups):
    """Forward of _ConvBlock.  x: (N, C_in, H, W) NCHW -> (N, C_out, Ho, Wo) bf16."""
    w = params["conv_weight"]                 # (C_out, C_in//groups, kh, kw) f32
    gamma = params["bn_weight"]
    beta = params["bn_bias"]
    rmean = params["bn_running_mean"]
    rvar = params["bn_running_var"]
    eps = 1e-5

    scale = gamma / jnp.sqrt(rvar + eps)      # folded BN (eval mode)
    bias = beta - rmean * scale
    w_folded = w * scale[:, None, None, None]  # fold scale into weights

    c_out, cin_g, kh, kw = w.shape
    n, c_in, h, wdt = x.shape
    cout_g = c_out // groups
    cpad = ((cout_g + _LANE - 1) // _LANE) * _LANE

    ho = (h + 2 * padding - kh) // stride + 1
    wo = (wdt + 2 * padding - kw) // stride + 1
    hp, wp = h + 2 * padding, wdt + 2 * padding

    # Input: NCHW f32 -> (N, G, Hp, Wp, Cin_g) bf16 (cast early, pad spatially)
    xb = x.astype(jnp.bfloat16)
    xb = jnp.pad(xb, ((0, 0), (0, 0), (padding, padding), (padding, padding)))
    xg = xb.reshape(n, groups, cin_g, hp, wp).transpose(0, 1, 3, 4, 2)

    # Weights: (C_out, Cin_g, kh, kw) -> (G, kh*kw, Cin_g, Cpad) bf16
    wg = w_folded.reshape(groups, cout_g, cin_g, kh, kw)
    wg = wg.transpose(0, 3, 4, 2, 1).reshape(groups, kh * kw, cin_g, cout_g)
    wg = jnp.pad(wg, ((0, 0), (0, 0), (0, 0), (0, cpad - cout_g))).astype(jnp.bfloat16)

    # Bias: (C_out,) -> (G, 1, Cpad) f32
    bg = jnp.pad(bias.reshape(groups, 1, cout_g),
                 ((0, 0), (0, 0), (0, cpad - cout_g))).astype(jnp.float32)

    tr = _pick_row_band(ho, wo)
    nbands = ho // tr

    kern = functools.partial(_convblock_kernel, kh=kh, kw=kw, stride=stride,
                             tr=tr, wo=wo, cin_g=cin_g)

    out = pl.pallas_call(
        kern,
        out_shape=jax.ShapeDtypeStruct((n, groups, ho, wo, cpad), jnp.bfloat16),
        grid_spec=pltpu.PrefetchScalarGridSpec(
            num_scalar_prefetch=0,
            grid=(n, groups, nbands),
            in_specs=[
                # full padded image of (n, g): resident across row bands
                pl.BlockSpec((1, 1, hp, wp, cin_g), lambda ni, gi, bi: (ni, gi, 0, 0, 0)),
                # folded weights of group g
                pl.BlockSpec((1, kh * kw, cin_g, cpad), lambda ni, gi, bi: (gi, 0, 0, 0)),
                # folded BN bias of group g
                pl.BlockSpec((1, 1, cpad), lambda ni, gi, bi: (gi, 0, 0)),
            ],
            out_specs=pl.BlockSpec((1, 1, tr, wo, cpad),
                                   lambda ni, gi, bi: (ni, gi, bi, 0, 0)),
        ),
        compiler_params=pltpu.CompilerParams(
            dimension_semantics=("parallel", "parallel", "parallel"),
            vmem_limit_bytes=48 * 1024 * 1024,
        ),
    )(xg, wg, bg)

    # (N, G, Ho, Wo, Cpad) -> NCHW (N, C_out, Ho, Wo); drop lane padding.
    y = out[..., :cout_g]
    y = y.transpose(0, 2, 3, 1, 4).reshape(n, ho, wo, c_out)
    y = y.transpose(0, 3, 1, 2)
    return y


# ---------------------------------------------------------------------------
# Deterministic parameter init (shapes from the module __init__)
# ---------------------------------------------------------------------------
def init_params(key, in_channels, out_channels, kernel_size, groups):
    k0, k1, k2, k3, k4 = jax.random.split(key, 5)
    w = 0.1 * jax.random.normal(
        k0, (out_channels, in_channels // groups, kernel_size, kernel_size),
        dtype=jnp.float32)
    return {
        "conv_weight": w,
        "bn_weight": 1.0 + 0.1 * jax.random.normal(k1, (out_channels,), jnp.float32),
        "bn_bias": 0.1 * jax.random.normal(k2, (out_channels,), jnp.float32),
        "bn_running_mean": 0.1 * jax.random.normal(k3, (out_channels,), jnp.float32),
        "bn_running_var": jnp.abs(jax.random.normal(k4, (out_channels,), jnp.float32)) + 0.5,
    }


def _reference(x, params, *, stride, padding, groups):
    """Pure-JAX reference with the same bf16-input / f32-accumulate numerics."""
    eps = 1e-5
    scale = params["bn_weight"] / jnp.sqrt(params["bn_running_var"] + eps)
    bias = params["bn_bias"] - params["bn_running_mean"] * scale
    w_folded = (params["conv_weight"] * scale[:, None, None, None]).astype(jnp.bfloat16)
    y = jax.lax.conv_general_dilated(
        x.astype(jnp.bfloat16), w_folded,
        window_strides=(stride, stride),
        padding=[(padding, padding), (padding, padding)],
        dimension_numbers=("NCHW", "OIHW", "NCHW"),
        feature_group_count=groups,
        preferred_element_type=jnp.float32)
    y = y + bias[None, :, None, None]
    return jnp.maximum(y, 0.0)


if __name__ == "__main__":
    key = jax.random.PRNGKey(0)
    kx, kp = jax.random.split(key)

    # Small shapes consistent with the module: Conv2d(4 -> 8, k=3, stride=1, pad=1)
    N, C_IN, H, W = 2, 4, 16, 16
    C_OUT, KSIZE, STRIDE, PAD, GROUPS = 8, 3, 1, 1, 1

    x = jax.random.normal(kx, (N, C_IN, H, W), dtype=jnp.float32)
    params = init_params(kp, C_IN, C_OUT, KSIZE, GROUPS)

    y = conv_block_forward(x, params, stride=STRIDE, padding=PAD, groups=GROUPS)
    y = jax.block_until_ready(y)

    y_ref = _reference(x, params, stride=STRIDE, padding=PAD, groups=GROUPS)
    assert y.shape == (N, C_OUT, H, W), y.shape
    err = float(jnp.max(jnp.abs(y.astype(jnp.float32) - y_ref)))
    assert jnp.allclose(y.astype(jnp.float32), y_ref, rtol=2e-2, atol=2e-2), \
        f"mismatch vs reference (max abs err {err})"

    print("KERNEL_OK")
</pallas_src>

<mosaic_0001>
module attributes {stable_mosaic.version = 11 : i64} {
  func.func @_convblock_kernel(%arg0: i32, %arg1: i32, %arg2: i32, %arg3: memref<1x1x18x18x4xbf16, #tpu.memory_space<vmem>>, %arg4: memref<1x9x4x128xbf16, #tpu.memory_space<vmem>>, %arg5: memref<1x1x128xf32, #tpu.memory_space<vmem>>, %arg6: memref<1x1x16x16x128xbf16, #tpu.memory_space<vmem>>) attributes {dimension_semantics = [#tpu.dimension_semantics<parallel>, #tpu.dimension_semantics<parallel>, #tpu.dimension_semantics<parallel>], iteration_bounds = array<i64: 2, 1, 1>, scalar_prefetch = 0 : i64, scratch_operands = 0 : i64, tpu.core_type = #tpu.core_type<tc>, window_params = [{transform_indices = @transform_0, window_bounds = array<i64: 1, 1, 18, 18, 4>}, {transform_indices = @transform_1, window_bounds = array<i64: 1, 9, 4, 128>}, {transform_indices = @transform_2, window_bounds = array<i64: 1, 1, 128>}, {transform_indices = @transform_3, window_bounds = array<i64: 1, 1, 16, 16, 128>}]} {
    %c16_i32 = arith.constant 16 : i32
    %0 = arith.muli %arg2, %c16_i32 : i32
    %c1_i32 = arith.constant 1 : i32
    %1 = arith.muli %0, %c1_i32 : i32
    %cst = arith.constant 0.000000e+00 : f32
    %2 = vector.broadcast %cst : f32 to vector<256x128xf32>
    %c0_i32 = arith.constant 0 : i32
    %3 = arith.addi %1, %c0_i32 : i32
    %c0 = arith.constant 0 : index
    %c0_0 = arith.constant 0 : index
    %4 = arith.index_cast %3 : i32 to index
    %c0_1 = arith.constant 0 : index
    %c0_2 = arith.constant 0 : index
    %5 = vector.load %arg3[%c0, %c0_0, %4, %c0_1, %c0_2] : memref<1x1x18x18x4xbf16, #tpu.memory_space<vmem>>, vector<1x1x16x16x4xbf16>
    %6 = vector.shape_cast %5 : vector<1x1x16x16x4xbf16> to vector<16x16x4xbf16>
    %7 = vector.shape_cast %6 : vector<16x16x4xbf16> to vector<256x4xbf16>
    %c0_3 = arith.constant 0 : index
    %c0_4 = arith.constant 0 : index
    %c0_5 = arith.constant 0 : index
    %c0_6 = arith.constant 0 : index
    %8 = vector.load %arg4[%c0_3, %c0_4, %c0_5, %c0_6] : memref<1x9x4x128xbf16, #tpu.memory_space<vmem>>, vector<1x1x4x128xbf16>
    %9 = vector.shape_cast %8 : vector<1x1x4x128xbf16> to vector<4x128xbf16>
    %cst_7 = arith.constant dense<0.000000e+00> : vector<256x128xf32>
    %10 = tpu.matmul %7, %9, %cst_7 {dimension_numbers = #tpu.dot_dimension_numbers<[1], [0], [0], [1], [0, 0, 1, 1], [], []>} : vector<256x4xbf16>, vector<4x128xbf16>, vector<256x128xf32> -> vector<256x128xf32>
    %11 = arith.addf %2, %10 : vector<256x128xf32>
    %c0_i32_8 = arith.constant 0 : i32
    %12 = arith.addi %1, %c0_i32_8 : i32
    %c0_9 = arith.constant 0 : index
    %c0_10 = arith.constant 0 : index
    %13 = arith.index_cast %12 : i32 to index
    %c1 = arith.constant 1 : index
    %c0_11 = arith.constant 0 : index
    %14 = vector.load %arg3[%c0_9, %c0_10, %13, %c1, %c0_11] : memref<1x1x18x18x4xbf16, #tpu.memory_space<vmem>>, vector<1x1x16x16x4xbf16>
    %15 = vector.shape_cast %14 : vector<1x1x16x16x4xbf16> to vector<16x16x4xbf16>
    %16 = vector.shape_cast %15 : vector<16x16x4xbf16> to vector<256x4xbf16>
    %c0_12 = arith.constant 0 : index
    %c1_13 = arith.constant 1 : index
    %c0_14 = arith.constant 0 : index
    %c0_15 = arith.constant 0 : index
    %17 = vector.load %arg4[%c0_12, %c1_13, %c0_14, %c0_15] : memref<1x9x4x128xbf16, #tpu.memory_space<vmem>>, vector<1x1x4x128xbf16>
    %18 = vector.shape_cast %17 : vector<1x1x4x128xbf16> to vector<4x128xbf16>
    %cst_16 = arith.constant dense<0.000000e+00> : vector<256x128xf32>
    %19 = tpu.matmul %16, %18, %cst_16 {dimension_numbers = #tpu.dot_dimension_numbers<[1], [0], [0], [1], [0, 0, 1, 1], [], []>} : vector<256x4xbf16>, vector<4x128xbf16>, vector<256x128xf32> -> vector<256x128xf32>
    %20 = arith.addf %11, %19 : vector<256x128xf32>
    %c0_i32_17 = arith.constant 0 : i32
    %21 = arith.addi %1, %c0_i32_17 : i32
    %c0_18 = arith.constant 0 : index
    %c0_19 = arith.constant 0 : index
    %22 = arith.index_cast %21 : i32 to index
    %c2 = arith.constant 2 : index
    %c0_20 = arith.constant 0 : index
    %23 = vector.load %arg3[%c0_18, %c0_19, %22, %c2, %c0_20] : memref<1x1x18x18x4xbf16, #tpu.memory_space<vmem>>, vector<1x1x16x16x4xbf16>
    %24 = vector.shape_cast %23 : vector<1x1x16x16x4xbf16> to vector<16x16x4xbf16>
    %25 = vector.shape_cast %24 : vector<16x16x4xbf16> to vector<256x4xbf16>
    %c0_21 = arith.constant 0 : index
    %c2_22 = arith.constant 2 : index
    %c0_23 = arith.constant 0 : index
    %c0_24 = arith.constant 0 : index
    %26 = vector.load %arg4[%c0_21, %c2_22, %c0_23, %c0_24] : memref<1x9x4x128xbf16, #tpu.memory_space<vmem>>, vector<1x1x4x128xbf16>
    %27 = vector.shape_cast %26 : vector<1x1x4x128xbf16> to vector<4x128xbf16>
    %cst_25 = arith.constant dense<0.000000e+00> : vector<256x128xf32>
    %28 = tpu.matmul %25, %27, %cst_25 {dimension_numbers = #tpu.dot_dimension_numbers<[1], [0], [0], [1], [0, 0, 1, 1], [], []>} : vector<256x4xbf16>, vector<4x128xbf16>, vector<256x128xf32> -> vector<256x128xf32>
    %29 = arith.addf %20, %28 : vector<256x128xf32>
    %c1_i32_26 = arith.constant 1 : i32
    %30 = arith.addi %1, %c1_i32_26 : i32
    %c0_27 = arith.constant 0 : index
    %c0_28 = arith.constant 0 : index
    %31 = arith.index_cast %30 : i32 to index
    %c0_29 = arith.constant 0 : index
    %c0_30 = arith.constant 0 : index
    %32 = vector.load %arg3[%c0_27, %c0_28, %31, %c0_29, %c0_30] : memref<1x1x18x18x4xbf16, #tpu.memory_space<vmem>>, vector<1x1x16x16x4xbf16>
    %33 = vector.shape_cast %32 : vector<1x1x16x16x4xbf16> to vector<16x16x4xbf16>
    %34 = vector.shape_cast %33 : vector<16x16x4xbf16> to vector<256x4xbf16>
    %c0_31 = arith.constant 0 : index
    %c3 = arith.constant 3 : index
    %c0_32 = arith.constant 0 : index
    %c0_33 = arith.constant 0 : index
    %35 = vector.load %arg4[%c0_31, %c3, %c0_32, %c0_33] : memref<1x9x4x128xbf16, #tpu.memory_space<vmem>>, vector<1x1x4x128xbf16>
    %36 = vector.shape_cast %35 : vector<1x1x4x128xbf16> to vector<4x128xbf16>
    %cst_34 = arith.constant dense<0.000000e+00> : vector<256x128xf32>
    %37 = tpu.matmul %34, %36, %cst_34 {dimension_numbers = #tpu.dot_dimension_numbers<[1], [0], [0], [1], [0, 0, 1, 1], [], []>} : vector<256x4xbf16>, vector<4x128xbf16>, vector<256x128xf32> -> vector<256x128xf32>
    %38 = arith.addf %29, %37 : vector<256x128xf32>
    %c1_i32_35 = arith.constant 1 : i32
    %39 = arith.addi %1, %c1_i32_35 : i32
    %c0_36 = arith.constant 0 : index
    %c0_37 = arith.constant 0 : index
    %40 = arith.index_cast %39 : i32 to index
    %c1_38 = arith.constant 1 : index
    %c0_39 = arith.constant 0 : index
    %41 = vector.load %arg3[%c0_36, %c0_37, %40, %c1_38, %c0_39] : memref<1x1x18x18x4xbf16, #tpu.memory_space<vmem>>, vector<1x1x16x16x4xbf16>
    %42 = vector.shape_cast %41 : vector<1x1x16x16x4xbf16> to vector<16x16x4xbf16>
    %43 = vector.shape_cast %42 : vector<16x16x4xbf16> to vector<256x4xbf16>
    %c0_40 = arith.constant 0 : index
    %c4 = arith.constant 4 : index
    %c0_41 = arith.constant 0 : index
    %c0_42 = arith.constant 0 : index
    %44 = vector.load %arg4[%c0_40, %c4, %c0_41, %c0_42] : memref<1x9x4x128xbf16, #tpu.memory_space<vmem>>, vector<1x1x4x128xbf16>
    %45 = vector.shape_cast %44 : vector<1x1x4x128xbf16> to vector<4x128xbf16>
    %cst_43 = arith.constant dense<0.000000e+00> : vector<256x128xf32>
    %46 = tpu.matmul %43, %45, %cst_43 {dimension_numbers = #tpu.dot_dimension_numbers<[1], [0], [0], [1], [0, 0, 1, 1], [], []>} : vector<256x4xbf16>, vector<4x128xbf16>, vector<256x128xf32> -> vector<256x128xf32>
    %47 = arith.addf %38, %46 : vector<256x128xf32>
    %c1_i32_44 = arith.constant 1 : i32
    %48 = arith.addi %1, %c1_i32_44 : i32
    %c0_45 = arith.constant 0 : index
    %c0_46 = arith.constant 0 : index
    %49 = arith.index_cast %48 : i32 to index
    %c2_47 = arith.constant 2 : index
    %c0_48 = arith.constant 0 : index
    %50 = vector.load %arg3[%c0_45, %c0_46, %49, %c2_47, %c0_48] : memref<1x1x18x18x4xbf16, #tpu.memory_space<vmem>>, vector<1x1x16x16x4xbf16>
    %51 = vector.shape_cast %50 : vector<1x1x16x16x4xbf16> to vector<16x16x4xbf16>
    %52 = vector.shape_cast %51 : vector<16x16x4xbf16> to vector<256x4xbf16>
    %c0_49 = arith.constant 0 : index
    %c5 = arith.constant 5 : index
    %c0_50 = arith.constant 0 : index
    %c0_51 = arith.constant 0 : index
    %53 = vector.load %arg4[%c0_49, %c5, %c0_50, %c0_51] : memref<1x9x4x128xbf16, #tpu.memory_space<vmem>>, vector<1x1x4x128xbf16>
    %54 = vector.shape_cast %53 : vector<1x1x4x128xbf16> to vector<4x128xbf16>
    %cst_52 = arith.constant dense<0.000000e+00> : vector<256x128xf32>
    %55 = tpu.matmul %52, %54, %cst_52 {dimension_numbers = #tpu.dot_dimension_numbers<[1], [0], [0], [1], [0, 0, 1, 1], [], []>} : vector<256x4xbf16>, vector<4x128xbf16>, vector<256x128xf32> -> vector<256x128xf32>
    %56 = arith.addf %47, %55 : vector<256x128xf32>
    %c2_i32 = arith.constant 2 : i32
    %57 = arith.addi %1, %c2_i32 : i32
    %c0_53 = arith.constant 0 : index
    %c0_54 = arith.constant 0 : index
    %58 = arith.index_cast %57 : i32 to index
    %c0_55 = arith.constant 0 : index
    %c0_56 = arith.constant 0 : index
    %59 = vector.load %arg3[%c0_53, %c0_54, %58, %c0_55, %c0_56] : memref<1x1x18x18x4xbf16, #tpu.memory_space<vmem>>, vector<1x1x16x16x4xbf16>
    %60 = vector.shape_cast %59 : vector<1x1x16x16x4xbf16> to vector<16x16x4xbf16>
    %61 = vector.shape_cast %60 : vector<16x16x4xbf16> to vector<256x4xbf16>
    %c0_57 = arith.constant 0 : index
    %c6 = arith.constant 6 : index
    %c0_58 = arith.constant 0 : index
    %c0_59 = arith.constant 0 : index
    %62 = vector.load %arg4[%c0_57, %c6, %c0_58, %c0_59] : memref<1x9x4x128xbf16, #tpu.memory_space<vmem>>, vector<1x1x4x128xbf16>
    %63 = vector.shape_cast %62 : vector<1x1x4x128xbf16> to vector<4x128xbf16>
    %cst_60 = arith.constant dense<0.000000e+00> : vector<256x128xf32>
    %64 = tpu.matmul %61, %63, %cst_60 {dimension_numbers = #tpu.dot_dimension_numbers<[1], [0], [0], [1], [0, 0, 1, 1], [], []>} : vector<256x4xbf16>, vector<4x128xbf16>, vector<256x128xf32> -> vector<256x128xf32>
    %65 = arith.addf %56, %64 : vector<256x128xf32>
    %c2_i32_61 = arith.constant 2 : i32
    %66 = arith.addi %1, %c2_i32_61 : i32
    %c0_62 = arith.constant 0 : index
    %c0_63 = arith.constant 0 : index
    %67 = arith.index_cast %66 : i32 to index
    %c1_64 = arith.constant 1 : index
    %c0_65 = arith.constant 0 : index
    %68 = vector.load %arg3[%c0_62, %c0_63, %67, %c1_64, %c0_65] : memref<1x1x18x18x4xbf16, #tpu.memory_space<vmem>>, vector<1x1x16x16x4xbf16>
    %69 = vector.shape_cast %68 : vector<1x1x16x16x4xbf16> to vector<16x16x4xbf16>
    %70 = vector.shape_cast %69 : vector<16x16x4xbf16> to vector<256x4xbf16>
    %c0_66 = arith.constant 0 : index
    %c7 = arith.constant 7 : index
    %c0_67 = arith.constant 0 : index
    %c0_68 = arith.constant 0 : index
    %71 = vector.load %arg4[%c0_66, %c7, %c0_67, %c0_68] : memref<1x9x4x128xbf16, #tpu.memory_space<vmem>>, vector<1x1x4x128xbf16>
    %72 = vector.shape_cast %71 : vector<1x1x4x128xbf16> to vector<4x128xbf16>
    %cst_69 = arith.constant dense<0.000000e+00> : vector<256x128xf32>
    %73 = tpu.matmul %70, %72, %cst_69 {dimension_numbers = #tpu.dot_dimension_numbers<[1], [0], [0], [1], [0, 0, 1, 1], [], []>} : vector<256x4xbf16>, vector<4x128xbf16>, vector<256x128xf32> -> vector<256x128xf32>
    %74 = arith.addf %65, %73 : vector<256x128xf32>
    %c2_i32_70 = arith.constant 2 : i32
    %75 = arith.addi %1, %c2_i32_70 : i32
    %c0_71 = arith.constant 0 : index
    %c0_72 = arith.constant 0 : index
    %76 = arith.index_cast %75 : i32 to index
    %c2_73 = arith.constant 2 : index
    %c0_74 = arith.constant 0 : index
    %77 = vector.load %arg3[%c0_71, %c0_72, %76, %c2_73, %c0_74] : memref<1x1x18x18x4xbf16, #tpu.memory_space<vmem>>, vector<1x1x16x16x4xbf16>
    %78 = vector.shape_cast %77 : vector<1x1x16x16x4xbf16> to vector<16x16x4xbf16>
    %79 = vector.shape_cast %78 : vector<16x16x4xbf16> to vector<256x4xbf16>
    %c0_75 = arith.constant 0 : index
    %c8 = arith.constant 8 : index
    %c0_76 = arith.constant 0 : index
    %c0_77 = arith.constant 0 : index
    %80 = vector.load %arg4[%c0_75, %c8, %c0_76, %c0_77] : memref<1x9x4x128xbf16, #tpu.memory_space<vmem>>, vector<1x1x4x128xbf16>
    %81 = vector.shape_cast %80 : vector<1x1x4x128xbf16> to vector<4x128xbf16>
    %cst_78 = arith.constant dense<0.000000e+00> : vector<256x128xf32>
    %82 = tpu.matmul %79, %81, %cst_78 {dimension_numbers = #tpu.dot_dimension_numbers<[1], [0], [0], [1], [0, 0, 1, 1], [], []>} : vector<256x4xbf16>, vector<4x128xbf16>, vector<256x128xf32> -> vector<256x128xf32>
    %83 = arith.addf %74, %82 : vector<256x128xf32>
    %c0_79 = arith.constant 0 : index
    %c0_80 = arith.constant 0 : index
    %c0_81 = arith.constant 0 : index
    %84 = vector.load %arg5[%c0_79, %c0_80, %c0_81] : memref<1x1x128xf32, #tpu.memory_space<vmem>>, vector<1x1x128xf32>
    %85 = vector.shape_cast %84 : vector<1x1x128xf32> to vector<1x128xf32>
    %86 = vector.broadcast %85 : vector<1x128xf32> to vector<256x128xf32>
    %87 = arith.addf %83, %86 : vector<256x128xf32>
    %cst_82 = arith.constant 0.000000e+00 : f32
    %88 = vector.broadcast %cst_82 : f32 to vector<256x128xf32>
    %89 = arith.maximumf %87, %88 : vector<256x128xf32>
    %90 = vector.shape_cast %89 : vector<256x128xf32> to vector<1x1x16x16x128xf32>
    %91 = arith.truncf %90 : vector<1x1x16x16x128xf32> to vector<1x1x16x16x128xbf16>
    %c0_83 = arith.constant 0 : index
    %c0_84 = arith.constant 0 : index
    %c0_85 = arith.constant 0 : index
    %c0_86 = arith.constant 0 : index
    %c0_87 = arith.constant 0 : index
    %92 = vector.load %arg6[%c0_83, %c0_84, %c0_85, %c0_86, %c0_87] : memref<1x1x16x16x128xbf16, #tpu.memory_space<vmem>>, vector<1x1x16x16x128xbf16>
    tpu.vector_store %arg6[%c0_83, %c0_84, %c0_85, %c0_86, %c0_87], %91 {strides = array<i32>} : memref<1x1x16x16x128xbf16, #tpu.memory_space<vmem>>, vector<1x1x16x16x128xbf16>,
    return
  }
  func.func @transform_0(%arg0: i32, %arg1: i32, %arg2: i32) -> (i32, i32, i32, i32, i32) {
    %c0_i32 = arith.constant 0 : i32
    %c0_i32_0 = arith.constant 0 : i32
    %c0_i32_1 = arith.constant 0 : i32
    %c0_i32_2 = arith.constant 0 : i32
    return %arg0, %arg1, %c0_i32, %c0_i32_0, %c0_i32_1 : i32, i32, i32, i32, i32
  }
  func.func @transform_1(%arg0: i32, %arg1: i32, %arg2: i32) -> (i32, i32, i32, i32) {
    %c0_i32 = arith.constant 0 : i32
    %c0_i32_0 = arith.constant 0 : i32
    %c0_i32_1 = arith.constant 0 : i32
    %c0_i32_2 = arith.constant 0 : i32
    return %arg1, %c0_i32, %c0_i32_0, %c0_i32_1 : i32, i32, i32, i32
  }
  func.func @transform_2(%arg0: i32, %arg1: i32, %arg2: i32) -> (i32, i32, i32) {
    %c0_i32 = arith.constant 0 : i32
    %c0_i32_0 = arith.constant 0 : i32
    %c0_i32_1 = arith.constant 0 : i32
    return %arg1, %c0_i32, %c0_i32_0 : i32, i32, i32
  }
  func.func @transform_3(%arg0: i32, %arg1: i32, %arg2: i32) -> (i32, i32, i32, i32, i32) {
    %c0_i32 = arith.constant 0 : i32
    %c0_i32_0 = arith.constant 0 : i32
    %c0_i32_1 = arith.constant 0 : i32
    return %arg0, %arg1, %arg2, %c0_i32, %c0_i32_0 : i32, i32, i32, i32, i32
  }
}

</mosaic_0001>

<llo_original>
// kernel: conv_block_forward.1
$region0: #{conv_block_forward.1}
  #allocation0 [shape = 'u32[]', space=smem, size = 0x4, offset = 0x4, fixed_abs, tag = 'smem constant byte address 0x4 - core index']
  #allocation1 [shape = 'u32[144,128]{1,0:T(1,128)}', space=vmem, size = 0x12000, scoped, tag = 'internal scratch']
  %s0 = inlined_call_operand.vmem [shape: bf16[2,1,18,18,4], index: 0, kind: input, shape index: {}]
  %s1 = inlined_call_operand.vmem [shape: bf16[1,9,4,128], index: 1, kind: input, shape index: {}]
  %s2 = inlined_call_operand.vmem [shape: f32[1,1,128], index: 2, kind: input, shape index: {}]
  %s3 = inlined_call_operand.vmem [shape: bf16[2,1,16,16,128], index: 3, kind: output, shape index: {}]
  %s4 = sld [smem:[#allocation0]]
  $region45: #{conv_block_forward.1} parent=0
    _
  %s6 = ssub.s32 1, %s4
  %s7 = scalar_select 0, %s6, %s4
  loop: start=0, step=1, limit=4
  $region2: #{conv_block_forward.1} parent=0 // loop_pre_header
    _
  $region3: #{conv_block_forward.1} parent=0 // loop_header
    %s9 = sphi 0, %s13
    %p10 = scmp.ge.s32.totalorder %s9, 4
    %s16 = sphi 0, %s35
    %s17 = sphi 0, %s31
    %s18 = sphi 0, %s27
    %s19 = sphi 0, %s16
    %s20 = sphi 0, %s17
    %s21 = sphi 0, %s18
    %s22 = sphi 0, %s19
    %s23 = sphi 0, %s20
    %s24 = sphi 0, %s21
    %s40 = sphi 0, %s42
    %s43 = sphi 0, %s40
    %s44 = sphi 0, %s43
    %s60 = sphi 0, %s44
    %s66 = sphi 0, %s68
    %s69 = sphi 0, %s66
    %s70 = sphi 0, %s69
    %s86 = sphi 0, %s70
    %s92 = sphi 0, %s94
    %s95 = sphi 0, %s92
    %s96 = sphi 0, %s95
    %s112 = sphi 0, %s96
    %s122 = sphi 0, %s124
    %s125 = sphi 0, %s122
    %s126 = sphi 0, %s125
    %s142 = sphi 0, %s126
  $region4: #{conv_block_forward.1} parent=0 // loop_header_branch
    %12 = sbr.rel (%p10) target = $region8
  $region5: #{conv_block_forward.1} parent=0 // loop_body
    %s14 = ssub.s32 %s9, 1
    %s15 = ssub.s32 %s9, 2
    %s25 = sadd.s32 1, %s18
    %p26 = scmp.ge.s32.totalorder %s25, 1
    %s27 = scalar_select %p26, 0, %s25
    %s28 = sadd.s32 1, %s17
    %s29 = scalar_select %p26, %s28, %s17
    %p30 = scmp.ge.s32.totalorder %s29, 1
    %s31 = scalar_select %p30, 0, %s29
    %s32 = sadd.s32 1, %s16
    %s33 = scalar_select %p30, %s32, %s16
    %p34 = scmp.ge.s32.totalorder %s33, 2
    %s35 = scalar_select %p34, 0, %s33
    %s36 = ssub.s32 %s16, %s35
    %s37 = ssub.s32 %s17, %s31
    %s38 = sor.u32 %s36, %s37
    %p39 = scmp.eq.s32.totalorder %s38, 0
    %s41 = sadd.s32 %s40, 1
    %s42 = scalar_select %p39, %s40, %s41
    %p45 = pneg %p39
    %p46 = scmp.eq.s32.totalorder %s9, 1
    %p47 = por %p45, %p46
    %p48 = scmp.ne.s32.totalorder %s40, %s43
    %p49 = scmp.eq.s32.totalorder %s9, 0
    %p50 = por %p48, %p49
    %p51 = scmp.ne.s32.totalorder %s40, %s43
    %p52 = scmp.eq.s32.totalorder %s14, 1
    %p53 = por %p51, %p52
    %p54 = scmp.ne.s32.totalorder %s43, %s44
    %p55 = scmp.eq.s32.totalorder %s14, 0
    %p56 = por %p54, %p55
    %p57 = scmp.ne.s32.totalorder %s43, %s44
    %p58 = scmp.eq.s32.totalorder %s15, 1
    %p59 = por %p57, %p58
    %p61 = scmp.ne.s32.totalorder %s44, %s60
    %p62 = scmp.eq.s32.totalorder %s15, 0
    %p63 = por %p61, %p62
    %s64 = ssub.s32 %s17, %s31
    %p65 = scmp.eq.s32.totalorder %s64, 0
    %s67 = sadd.s32 %s66, 1
    %s68 = scalar_select %p65, %s66, %s67
    %p71 = pneg %p65
    %p72 = scmp.eq.s32.totalorder %s9, 1
    %p73 = por %p71, %p72
    %p74 = scmp.ne.s32.totalorder %s66, %s69
    %p75 = scmp.eq.s32.totalorder %s9, 0
    %p76 = por %p74, %p75
    %p77 = scmp.ne.s32.totalorder %s66, %s69
    %p78 = scmp.eq.s32.totalorder %s14, 1
    %p79 = por %p77, %p78
    %p80 = scmp.ne.s32.totalorder %s69, %s70
    %p81 = scmp.eq.s32.totalorder %s14, 0
    %p82 = por %p80, %p81
    %p83 = scmp.ne.s32.totalorder %s69, %s70
    %p84 = scmp.eq.s32.totalorder %s15, 1
    %p85 = por %p83, %p84
    %p87 = scmp.ne.s32.totalorder %s70, %s86
    %p88 = scmp.eq.s32.totalorder %s15, 0
    %p89 = por %p87, %p88
    %s90 = ssub.s32 %s17, %s31
    %p91 = scmp.eq.s32.totalorder %s90, 0
    %s93 = sadd.s32 %s92, 1
    %s94 = scalar_select %p91, %s92, %s93
    %p97 = pneg %p91
    %p98 = scmp.eq.s32.totalorder %s9, 1
    %p99 = por %p97, %p98
    %p100 = scmp.ne.s32.totalorder %s92, %s95
    %p101 = scmp.eq.s32.totalorder %s9, 0
    %p102 = por %p100, %p101
    %p103 = scmp.ne.s32.totalorder %s92, %s95
    %p104 = scmp.eq.s32.totalorder %s14, 1
    %p105 = por %p103, %p104
    %p106 = scmp.ne.s32.totalorder %s95, %s96
    %p107 = scmp.eq.s32.totalorder %s14, 0
    %p108 = por %p106, %p107
    %p109 = scmp.ne.s32.totalorder %s95, %s96
    %p110 = scmp.eq.s32.totalorder %s15, 1
    %p111 = por %p109, %p110
    %p113 = scmp.ne.s32.totalorder %s96, %s112
    %p114 = scmp.eq.s32.totalorder %s15, 0
    %p115 = por %p113, %p114
    %s116 = ssub.s32 %s16, %s35
    %s117 = ssub.s32 %s17, %s31
    %s118 = sor.u32 %s116, %s117
    %s119 = ssub.s32 %s18, %s27
    %s120 = sor.u32 %s118, %s119
    %p121 = scmp.eq.s32.totalorder %s120, 0
    %s123 = sadd.s32 %s122, 1
    %s124 = scalar_select %p121, %s122, %s123
    %p127 = pneg %p121
    %p128 = scmp.eq.s32.totalorder %s9, 1
    %p129 = por %p127, %p128
    %p130 = scmp.ne.s32.totalorder %s122, %s125
    %p131 = scmp.eq.s32.totalorder %s9, 0
    %p132 = por %p130, %p131
    %p133 = scmp.ne.s32.totalorder %s122, %s125
    %p134 = scmp.eq.s32.totalorder %s14, 1
    %p135 = por %p133, %p134
    %p136 = scmp.ne.s32.totalorder %s125, %s126
    %p137 = scmp.eq.s32.totalorder %s14, 0
    %p138 = por %p136, %p137
    %p139 = scmp.ne.s32.totalorder %s125, %s126
    %p140 = scmp.eq.s32.totalorder %s15, 1
    %p141 = por %p139, %p140
    %p143 = scmp.ne.s32.totalorder %s126, %s142
    %p144 = scmp.eq.s32.totalorder %s15, 0
    %p145 = por %p143, %p144
    %p146 = scmp.le.s32.totalorder 1, %s9
    %p147 = scmp.lt.s32.totalorder %s9, 3
    %p148 = pnand %p146, %p147
    %p149 = pneg %p148
    // Predicated region
    $region9: #{conv_block_forward.1} parent=5 // pred_check
      _
    $region10: #{conv_block_forward.1} parent=5 // pred_check_branch
      %151 = sbr.rel (%p148) target = $region12
    $region11: #{conv_block_forward.1} parent=5 // pred_region
      %s152 = ssub.s32 %s9, 1
      // Predicated region
      $region13: #{conv_block_forward.1} parent=11 // pred_check
        %p153 = pneg %p82
      $region14: #{conv_block_forward.1} parent=11 // pred_check_branch
        %155 = sbr.rel (%p153) target = $region16
      $region15: #{conv_block_forward.1} parent=11 // pred_region
        %p156 = scmp.lt.s32.totalorder %s20, 0
        %s157 = scalar_select %p156, %s20, 0
        %s158 = smul.addr %s157, 9
        %s159 = smul.addr %s158, 2
        %s160 = scalar_lea.vmem %s1, %s159
      $region16: #{conv_block_forward.1} parent=11 // pred_fallthru
        _
      // Predicated region
      $region17: #{conv_block_forward.1} parent=11 // pred_check
        %p161 = pneg %p108
      $region18: #{conv_block_forward.1} parent=11 // pred_check_branch
        %163 = sbr.rel (%p161) target = $region20
      $region19: #{conv_block_forward.1} parent=11 // pred_region
        %p164 = scmp.lt.s32.totalorder %s20, 0
        %s165 = scalar_select %p164, %s20, 0
        %s166 = scalar_lea.vmem %s2, %s165
      $region20: #{conv_block_forward.1} parent=11 // pred_fallthru
        _
    $region12: #{conv_block_forward.1} parent=5 // pred_fallthru
      _
    %p167 = scmp.lt.s32.totalorder %s9, 2
    // Predicated region
    $region21: #{conv_block_forward.1} parent=5 // pred_check
      %p168 = pneg %p167
    $region22: #{conv_block_forward.1} parent=5 // pred_check_branch
      %170 = sbr.rel (%p168) target = $region24
    $region23: #{conv_block_forward.1} parent=5 // pred_region
      // Predicated region
      $region25: #{conv_block_forward.1} parent=23 // pred_check
        %p171 = pneg %p50
      $region26: #{conv_block_forward.1} parent=23 // pred_check_branch
        %173 = sbr.rel (%p171) target = $region28
      $region27: #{conv_block_forward.1} parent=23 // pred_region
        %p174 = scmp.lt.s32.totalorder %s16, 1
        %s175 = scalar_select %p174, %s16, 1
        %p176 = scmp.lt.s32.totalorder %s17, 0
        %s177 = scalar_select %p176, %s17, 0
        %s178 = smul.addr %s177, 54
        %s179 = smul.addr %s175, 54
        %s180 = sadd.s32 %s178, %s179
        %s181 = smul.addr %s180, 4
        %s182 = scalar_lea.vmem %s0, %s181
      $region28: #{conv_block_forward.1} parent=23 // pred_fallthru
        _
    $region24: #{conv_block_forward.1} parent=5 // pred_fallthru
      _
    %p183 = scmp.le.s32.totalorder 1, %s9
    %p184 = scmp.lt.s32.totalorder %s9, 3
    %p185 = pnand %p183, %p184
    %p186 = pneg %p185
    // Predicated region
    $region29: #{conv_block_forward.1} parent=5 // pred_check
      _
    $region30: #{conv_block_forward.1} parent=5 // pred_check_branch
      %188 = sbr.rel (%p185) target = $region32
    $region31: #{conv_block_forward.1} parent=5 // pred_region
      %s189 = ssub.s32 %s9, 1
      %p190 = scmp.lt.s32.totalorder %s19, 1
      %s191 = scalar_select %p190, %s19, 1
      %p192 = scmp.lt.s32.totalorder %s20, 0
      %s193 = scalar_select %p192, %s20, 0
      %s194 = smul.addr %s193, 54
      %s195 = smul.addr %s191, 54
      %s196 = sadd.s32 %s194, %s195
      %s197 = smul.addr %s196, 4
      %s198 = scalar_lea.vmem %s0, %s197
      %p199 = pneg %p56
      %p200 = pneg %p53
      %p201 = scmp.lt.s32.totalorder %s20, 0
      %s202 = scalar_select %p201, %s20, 0
      %s203 = smul.addr %s202, 9
      %s204 = smul.addr %s203, 2
      %s205 = scalar_lea.vmem %s1, %s204
      %p206 = pneg %p82
      %p207 = pneg %p79
      %p208 = scmp.lt.s32.totalorder %s20, 0
      %s209 = scalar_select %p208, %s20, 0
      %s210 = scalar_lea.vmem %s2, %s209
      %p211 = pneg %p108
      %p212 = pneg %p105
      %p213 = pneg %p138
      %p214 = pneg %p135
      %s215 = smul.u32 16, %s21
      %p216 = scmp.lt.s32.totalorder %s19, 1
      %s217 = scalar_select %p216, %s19, 1
      %p218 = scmp.lt.s32.totalorder %s20, 0
      %s219 = scalar_select %p218, %s20, 0
      %p220 = scmp.lt.s32.totalorder %s215, 15
      %s221 = scalar_select %p220, %s215, 15
      %s222 = smul.addr %s221, 2
      %s223 = smul.addr %s219, 32
      %s224 = sadd.s32 %s222, %s223
      %s225 = smul.addr %s217, 32
      %s226 = sadd.s32 %s224, %s225
      %s227 = smul.addr %s226, 4
      %s228 = scalar_lea.vmem %s3, %s227
      %p229 = scmp.lt.s32.totalorder %s19, 1
      %s230 = scalar_select %p229, %s19, 1
      %p231 = scmp.lt.s32.totalorder %s20, 0
      %s232 = scalar_select %p231, %s20, 0
      %s233 = smul.addr %s232, 54
      %s234 = smul.addr %s230, 54
      %s235 = sadd.s32 %s233, %s234
      %s236 = smul.addr %s235, 4
      %s237 = scalar_lea.vmem %s0, %s236
      %p238 = scmp.lt.s32.totalorder %s20, 0
      %s239 = scalar_select %p238, %s20, 0
      %s240 = smul.addr %s239, 9
      %s241 = smul.addr %s240, 2
      %s242 = scalar_lea.vmem %s1, %s241
      %p243 = scmp.lt.s32.totalorder %s20, 0
      %s244 = scalar_select %p243, %s20, 0
      %s245 = scalar_lea.vmem %s2, %s244
      %s246 = smul.u32 16, %s21
      %p247 = scmp.lt.s32.totalorder %s19, 1
      %s248 = scalar_select %p247, %s19, 1
      %p249 = scmp.lt.s32.totalorder %s20, 0
      %s250 = scalar_select %p249, %s20, 0
      %p251 = scmp.lt.s32.totalorder %s246, 15
      %s252 = scalar_select %p251, %s246, 15
      %s253 = smul.addr %s252, 2
      %s254 = smul.addr %s250, 32
      %s255 = sadd.s32 %s253, %s254
      %s256 = smul.addr %s248, 32
      %s257 = sadd.s32 %s255, %s256
      %s258 = smul.addr %s257, 4
      %s259 = scalar_lea.vmem %s3, %s258
      %s260 = smul.u32 16, %s21
      %s262 = smul.u32 %s21, 16
      %s263 = smul.u32 %s262, 3
      %s264 = smul.addr %s263, 4
      %s265 = scalar_lea.vmem %s237, %s264
      %v266 = vld [vmem:[%s265] sm:$0xf]
      %v267 = vld [vmem:[%s265 + $0x4] sm:$0xf]
      %v268 = vld [vmem:[%s265 + $0xc] sm:$0xf]
      %v269 = vld [vmem:[%s265 + $0x10] sm:$0xf]
      %v270 = vld [vmem:[%s265 + $0x18] sm:$0xf]
      %v271 = vld [vmem:[%s265 + $0x1c] sm:$0xf]
      %v272 = vld [vmem:[%s265 + $0x24] sm:$0xf]
      %v273 = vld [vmem:[%s265 + $0x28] sm:$0xf]
      %v274 = vld [vmem:[%s265 + $0x30] sm:$0xf]
      %v275 = vld [vmem:[%s265 + $0x34] sm:$0xf]
      %v276 = vld [vmem:[%s265 + $0x3c] sm:$0xf]
      %v277 = vld [vmem:[%s265 + $0x40] sm:$0xf]
      %v278 = vld [vmem:[%s265 + $0x48] sm:$0xf]
      %v279 = vld [vmem:[%s265 + $0x4c] sm:$0xf]
      %v280 = vld [vmem:[%s265 + $0x54] sm:$0xf]
      %v281 = vld [vmem:[%s265 + $0x58] sm:$0xf]
      %v282 = vld [vmem:[%s265 + $0x60] sm:$0xf]
      %v283 = vld [vmem:[%s265 + $0x64] sm:$0xf]
      %v284 = vld [vmem:[%s265 + $0x6c] sm:$0xf]
      %v285 = vld [vmem:[%s265 + $0x70] sm:$0xf]
      %v286 = vld [vmem:[%s265 + $0x78] sm:$0xf]
      %v287 = vld [vmem:[%s265 + $0x7c] sm:$0xf]
      %v288 = vld [vmem:[%s265 + $0x84] sm:$0xf]
      %v289 = vld [vmem:[%s265 + $0x88] sm:$0xf]
      %v290 = vld [vmem:[%s265 + $0x90] sm:$0xf]
      %v291 = vld [vmem:[%s265 + $0x94] sm:$0xf]
      %v292 = vld [vmem:[%s265 + $0x9c] sm:$0xf]
      %v293 = vld [vmem:[%s265 + $0xa0] sm:$0xf]
      %v294 = vld [vmem:[%s265 + $0xa8] sm:$0xf]
      %v295 = vld [vmem:[%s265 + $0xac] sm:$0xf]
      %v296 = vld [vmem:[%s265 + $0xb4] sm:$0xf]
      %v297 = vld [vmem:[%s265 + $0xb8] sm:$0xf]
      %v298 = vld [vmem:[%s242] sm:$0x3]
      %v299 = vld [vmem:[%s265 + $0x8] sm:$0x1]
      %v300 = vld [vmem:[%s265 + $0x14] sm:$0x1]
      %v301 = vld [vmem:[%s265 + $0x20] sm:$0x1]
      %v302 = vld [vmem:[%s265 + $0x2c] sm:$0x1]
      %v303 = vld [vmem:[%s265 + $0x38] sm:$0x1]
      %v304 = vld [vmem:[%s265 + $0x44] sm:$0x1]
      %v305 = vld [vmem:[%s265 + $0x50] sm:$0x1]
      %v306 = vld [vmem:[%s265 + $0x5c] sm:$0x1]
      %v307 = vld [vmem:[%s265 + $0x68] sm:$0x1]
      %v308 = vld [vmem:[%s265 + $0x74] sm:$0x1]
      %v309 = vld [vmem:[%s265 + $0x80] sm:$0x1]
      %v310 = vld [vmem:[%s265 + $0x8c] sm:$0x1]
      %v311 = vld [vmem:[%s265 + $0x98] sm:$0x1]
      %v312 = vld [vmem:[%s265 + $0xa4] sm:$0x1]
      %v313 = vld [vmem:[%s265 + $0xb0] sm:$0x1]
      %v314 = vld [vmem:[%s265 + $0xbc] sm:$0x1]
      %vm315 = vsmask.f32 3328
      %vm316 = vsmask.f32 7440
      %vm317 = vmor %vm315, %vm316
      %v319 = vshrl.u32 %v266, 16
      %v321 = vrot.slane %v319, 4
      %v322 = vshll.u32 %v266, 16
      %v324 = vrot.slane %v322, 5
      %v325 = vor.u32 %v321, %v324
      %v326 = vrot.slane %v325, 4
      %v328 = vshll.u32 %v267, 16
      %v330 = vrot.slane %v328, 5
      %v331 = vsel %vm317, %v326, %v330
      %v332 = vshrl.u32 %v267, 16
      %v334 = vrot.slane %v332, 4
      %v335 = vor.u32 %v334, %v330
      %v336 = vrot.slane %v335, 4
      %v338 = vshll.u32 %v299, 16
      %v340 = vrot.slane %v338, 5
      %v341 = vsel %vm317, %v336, %v340
      %v343 = vshrl.u32 %v268, 16
      %v345 = vrot.slane %v343, 4
      %v346 = vshll.u32 %v268, 16
      %v348 = vrot.slane %v346, 5
      %v349 = vor.u32 %v345, %v348
      %v350 = vrot.slane %v349, 4
      %v352 = vshll.u32 %v269, 16
      %v354 = vrot.slane %v352, 5
      %v355 = vsel %vm317, %v350, %v354
      %v356 = vshrl.u32 %v269, 16
      %v358 = vrot.slane %v356, 4
      %v359 = vor.u32 %v358, %v354
      %v360 = vrot.slane %v359, 4
      %v362 = vshll.u32 %v300, 16
      %v364 = vrot.slane %v362, 5
      %v365 = vsel %vm317, %v360, %v364
      %v367 = vshrl.u32 %v270, 16
      %v369 = vrot.slane %v367, 4
      %v370 = vshll.u32 %v270, 16
      %v372 = vrot.slane %v370, 5
      %v373 = vor.u32 %v369, %v372
      %v374 = vrot.slane %v373, 4
      %v376 = vshll.u32 %v271, 16
      %v378 = vrot.slane %v376, 5
      %v379 = vsel %vm317, %v374, %v378
      %v380 = vshrl.u32 %v271, 16
      %v382 = vrot.slane %v380, 4
      %v383 = vor.u32 %v382, %v378
      %v384 = vrot.slane %v383, 4
      %v386 = vshll.u32 %v301, 16
      %v388 = vrot.slane %v386, 5
      %v389 = vsel %vm317, %v384, %v388
      %v391 = vshrl.u32 %v272, 16
      %v393 = vrot.slane %v391, 4
      %v394 = vshll.u32 %v272, 16
      %v396 = vrot.slane %v394, 5
      %v397 = vor.u32 %v393, %v396
      %v398 = vrot.slane %v397, 4
      %v400 = vshll.u32 %v273, 16
      %v402 = vrot.slane %v400, 5
      %v403 = vsel %vm317, %v398, %v402
      %v404 = vshrl.u32 %v273, 16
      %v406 = vrot.slane %v404, 4
      %v407 = vor.u32 %v406, %v402
      %v408 = vrot.slane %v407, 4
      %v410 = vshll.u32 %v302, 16
      %v412 = vrot.slane %v410, 5
      %v413 = vsel %vm317, %v408, %v412
      %v415 = vshrl.u32 %v274, 16
      %v417 = vrot.slane %v415, 4
      %v418 = vshll.u32 %v274, 16
      %v420 = vrot.slane %v418, 5
      %v421 = vor.u32 %v417, %v420
      %v422 = vrot.slane %v421, 4
      %v424 = vshll.u32 %v275, 16
      %v426 = vrot.slane %v424, 5
      %v427 = vsel %vm317, %v422, %v426
      %v428 = vshrl.u32 %v275, 16
      %v430 = vrot.slane %v428, 4
      %v431 = vor.u32 %v430, %v426
      %v432 = vrot.slane %v431, 4
      %v434 = vshll.u32 %v303, 16
      %v436 = vrot.slane %v434, 5
      %v437 = vsel %vm317, %v432, %v436
      %v439 = vshrl.u32 %v276, 16
      %v441 = vrot.slane %v439, 4
      %v442 = vshll.u32 %v276, 16
      %v444 = vrot.slane %v442, 5
      %v445 = vor.u32 %v441, %v444
      %v446 = vrot.slane %v445, 4
      %v448 = vshll.u32 %v277, 16
      %v450 = vrot.slane %v448, 5
      %v451 = vsel %vm317, %v446, %v450
      %v452 = vshrl.u32 %v277, 16
      %v454 = vrot.slane %v452, 4
      %v455 = vor.u32 %v454, %v450
      %v456 = vrot.slane %v455, 4
      %v458 = vshll.u32 %v304, 16
      %v460 = vrot.slane %v458, 5
      %v461 = vsel %vm317, %v456, %v460
      %v463 = vshrl.u32 %v278, 16
      %v465 = vrot.slane %v463, 4
      %v466 = vshll.u32 %v278, 16
      %v468 = vrot.slane %v466, 5
      %v469 = vor.u32 %v465, %v468
      %v470 = vrot.slane %v469, 4
      %v472 = vshll.u32 %v279, 16
      %v474 = vrot.slane %v472, 5
      %v475 = vsel %vm317, %v470, %v474
      %v476 = vshrl.u32 %v279, 16
      %v478 = vrot.slane %v476, 4
      %v479 = vor.u32 %v478, %v474
      %v480 = vrot.slane %v479, 4
      %v482 = vshll.u32 %v305, 16
      %v484 = vrot.slane %v482, 5
      %v485 = vsel %vm317, %v480, %v484
      %v487 = vshrl.u32 %v280, 16
      %v489 = vrot.slane %v487, 4
      %v490 = vshll.u32 %v280, 16
      %v492 = vrot.slane %v490, 5
      %v493 = vor.u32 %v489, %v492
      %v494 = vrot.slane %v493, 4
      %v496 = vshll.u32 %v281, 16
      %v498 = vrot.slane %v496, 5
      %v499 = vsel %vm317, %v494, %v498
      %v500 = vshrl.u32 %v281, 16
      %v502 = vrot.slane %v500, 4
      %v503 = vor.u32 %v502, %v498
      %v504 = vrot.slane %v503, 4
      %v506 = vshll.u32 %v306, 16
      %v508 = vrot.slane %v506, 5
      %v509 = vsel %vm317, %v504, %v508
      %v511 = vshrl.u32 %v282, 16
      %v513 = vrot.slane %v511, 4
      %v514 = vshll.u32 %v282, 16
      %v516 = vrot.slane %v514, 5
      %v517 = vor.u32 %v513, %v516
      %v518 = vrot.slane %v517, 4
      %v520 = vshll.u32 %v283, 16
      %v522 = vrot.slane %v520, 5
      %v523 = vsel %vm317, %v518, %v522
      %v524 = vshrl.u32 %v283, 16
      %v526 = vrot.slane %v524, 4
      %v527 = vor.u32 %v526, %v522
      %v528 = vrot.slane %v527, 4
      %v530 = vshll.u32 %v307, 16
      %v532 = vrot.slane %v530, 5
      %v533 = vsel %vm317, %v528, %v532
      %v535 = vshrl.u32 %v284, 16
      %v537 = vrot.slane %v535, 4
      %v538 = vshll.u32 %v284, 16
      %v540 = vrot.slane %v538, 5
      %v541 = vor.u32 %v537, %v540
      %v542 = vrot.slane %v541, 4
      %v544 = vshll.u32 %v285, 16
      %v546 = vrot.slane %v544, 5
      %v547 = vsel %vm317, %v542, %v546
      %v548 = vshrl.u32 %v285, 16
      %v550 = vrot.slane %v548, 4
      %v551 = vor.u32 %v550, %v546
      %v552 = vrot.slane %v551, 4
      %v554 = vshll.u32 %v308, 16
      %v556 = vrot.slane %v554, 5
      %v557 = vsel %vm317, %v552, %v556
      %v559 = vshrl.u32 %v286, 16
      %v561 = vrot.slane %v559, 4
      %v562 = vshll.u32 %v286, 16
      %v564 = vrot.slane %v562, 5
      %v565 = vor.u32 %v561, %v564
      %v566 = vrot.slane %v565, 4
      %v568 = vshll.u32 %v287, 16
      %v570 = vrot.slane %v568, 5
      %v571 = vsel %vm317, %v566, %v570
      %v572 = vshrl.u32 %v287, 16
      %v574 = vrot.slane %v572, 4
      %v575 = vor.u32 %v574, %v570
      %v576 = vrot.slane %v575, 4
      %v578 = vshll.u32 %v309, 16
      %v580 = vrot.slane %v578, 5
      %v581 = vsel %vm317, %v576, %v580
      %v583 = vshrl.u32 %v288, 16
      %v585 = vrot.slane %v583, 4
      %v586 = vshll.u32 %v288, 16
      %v588 = vrot.slane %v586, 5
      %v589 = vor.u32 %v585, %v588
      %v590 = vrot.slane %v589, 4
      %v592 = vshll.u32 %v289, 16
      %v594 = vrot.slane %v592, 5
      %v595 = vsel %vm317, %v590, %v594
      %v596 = vshrl.u32 %v289, 16
      %v598 = vrot.slane %v596, 4
      %v599 = vor.u32 %v598, %v594
      %v600 = vrot.slane %v599, 4
      %v602 = vshll.u32 %v310, 16
      %v604 = vrot.slane %v602, 5
      %v605 = vsel %vm317, %v600, %v604
      %v607 = vshrl.u32 %v290, 16
      %v609 = vrot.slane %v607, 4
      %v610 = vshll.u32 %v290, 16
      %v612 = vrot.slane %v610, 5
      %v613 = vor.u32 %v609, %v612
      %v614 = vrot.slane %v613, 4
      %v616 = vshll.u32 %v291, 16
      %v618 = vrot.slane %v616, 5
      %v619 = vsel %vm317, %v614, %v618
      %v620 = vshrl.u32 %v291, 16
      %v622 = vrot.slane %v620, 4
      %v623 = vor.u32 %v622, %v618
      %v624 = vrot.slane %v623, 4
      %v626 = vshll.u32 %v311, 16
      %v628 = vrot.slane %v626, 5
      %v629 = vsel %vm317, %v624, %v628
      %v631 = vshrl.u32 %v292, 16
      %v633 = vrot.slane %v631, 4
      %v634 = vshll.u32 %v292, 16
      %v636 = vrot.slane %v634, 5
      %v637 = vor.u32 %v633, %v636
      %v638 = vrot.slane %v637, 4
      %v640 = vshll.u32 %v293, 16
      %v642 = vrot.slane %v640, 5
      %v643 = vsel %vm317, %v638, %v642
      %v644 = vshrl.u32 %v293, 16
      %v646 = vrot.slane %v644, 4
      %v647 = vor.u32 %v646, %v642
      %v648 = vrot.slane %v647, 4
      %v650 = vshll.u32 %v312, 16
      %v652 = vrot.slane %v650, 5
      %v653 = vsel %vm317, %v648, %v652
      %v655 = vshrl.u32 %v294, 16
      %v657 = vrot.slane %v655, 4
      %v658 = vshll.u32 %v294, 16
      %v660 = vrot.slane %v658, 5
      %v661 = vor.u32 %v657, %v660
      %v662 = vrot.slane %v661, 4
      %v664 = vshll.u32 %v295, 16
      %v666 = vrot.slane %v664, 5
      %v667 = vsel %vm317, %v662, %v666
      %v668 = vshrl.u32 %v295, 16
      %v670 = vrot.slane %v668, 4
      %v671 = vor.u32 %v670, %v666
      %v672 = vrot.slane %v671, 4
      %v674 = vshll.u32 %v313, 16
      %v676 = vrot.slane %v674, 5
      %v677 = vsel %vm317, %v672, %v676
      %v679 = vshrl.u32 %v296, 16
      %v681 = vrot.slane %v679, 4
      %v682 = vshll.u32 %v296, 16
      %v684 = vrot.slane %v682, 5
      %v685 = vor.u32 %v681, %v684
      %v686 = vrot.slane %v685, 4
      %v688 = vshll.u32 %v297, 16
      %v690 = vrot.slane %v688, 5
      %v691 = vsel %vm317, %v686, %v690
      %v692 = vshrl.u32 %v297, 16
      %v694 = vrot.slane %v692, 4
      %v695 = vor.u32 %v694, %v690
      %v696 = vrot.slane %v695, 4
      %v698 = vshll.u32 %v314, 16
      %v700 = vrot.slane %v698, 5
      %v701 = vsel %vm317, %v696, %v700
      %s702 = scalar_lea.vmem %s242, 2
      %v703 = vld [vmem:[%s702] sm:$0x3]
      %v704 = vunpack.c.l.b16 %v331
      %v705 = vunpack.c.l.b16 %v341
      %v706 = vunpack.c.l.b16 %v355
      %v707 = vunpack.c.l.b16 %v365
      %v708 = vunpack.c.l.b16 %v379
      %v709 = vunpack.c.l.b16 %v389
      %v710 = vunpack.c.l.b16 %v403
      %v711 = vunpack.c.l.b16 %v413
      %v712 = vunpack.c.l.b16 %v427
      %v713 = vunpack.c.l.b16 %v437
      %v714 = vunpack.c.l.b16 %v451
      %v715 = vunpack.c.l.b16 %v461
      %v716 = vunpack.c.l.b16 %v475
      %v717 = vunpack.c.l.b16 %v485
      %v718 = vunpack.c.l.b16 %v499
      %v719 = vunpack.c.l.b16 %v509
      %v720 = vunpack.c.l.b16 %v523
      %v721 = vunpack.c.l.b16 %v533
      %v722 = vunpack.c.l.b16 %v547
      %v723 = vunpack.c.l.b16 %v557
      %v724 = vunpack.c.l.b16 %v571
      %v725 = vunpack.c.l.b16 %v581
      %v726 = vunpack.c.l.b16 %v595
      %v727 = vunpack.c.l.b16 %v605
      %v728 = vunpack.c.l.b16 %v619
      %v729 = vunpack.c.l.b16 %v629
      %v730 = vunpack.c.l.b16 %v643
      %v731 = vunpack.c.l.b16 %v653
      %v732 = vunpack.c.l.b16 %v667
      %v733 = vunpack.c.l.b16 %v677
      %v734 = vunpack.c.l.b16 %v691
      %v735 = vunpack.c.l.b16 %v701
      %v736 = vpack.c.b16 %v705, %v704
      %v737 = vpack.c.b16 %v707, %v706
      %v738 = vpack.c.b16 %v709, %v708
      %v739 = vpack.c.b16 %v711, %v710
      %v740 = vpack.c.b16 %v713, %v712
      %v741 = vpack.c.b16 %v715, %v714
      %v742 = vpack.c.b16 %v717, %v716
      %v743 = vpack.c.b16 %v719, %v718
      %v744 = vpack.c.b16 %v721, %v720
      %v745 = vpack.c.b16 %v723, %v722
      %v746 = vpack.c.b16 %v725, %v724
      %v747 = vpack.c.b16 %v727, %v726
      %v748 = vpack.c.b16 %v729, %v728
      %v749 = vpack.c.b16 %v731, %v730
      %v750 = vpack.c.b16 %v733, %v732
      %v751 = vpack.c.b16 %v735, %v734
      %vm752 = vcmask 31744
      %v754 = vsel %vm752, %v736, 0
      %v757 = vsel %vm752, %v737, 0
      %v760 = vsel %vm752, %v738, 0
      %v763 = vsel %vm752, %v739, 0
      %v766 = vsel %vm752, %v740, 0
      %v769 = vsel %vm752, %v741, 0
      %v772 = vsel %vm752, %v742, 0
      %v775 = vsel %vm752, %v743, 0
      %v778 = vsel %vm752, %v744, 0
      %v781 = vsel %vm752, %v745, 0
      %v784 = vsel %vm752, %v746, 0
      %v787 = vsel %vm752, %v747, 0
      %v790 = vsel %vm752, %v748, 0
      %v793 = vsel %vm752, %v749, 0
      %v796 = vsel %vm752, %v750, 0
      %v799 = vsel %vm752, %v751, 0
      %vm801 = vcmask 1041408
      %v803 = vsel %vm801, %v703, 0
      %805 = vmatprep.subr.bf16.mxu0 0
      %806 = vmatpush1.bf16.msra.mxu0 %v803
      %807 = vmatprep.subr.bf16.mxu0 0
      %808 = vmatpush1.bf16.msra.mxu0 0
      %809 = vmatprep.subr.bf16.mxu0 0
      %810 = vmatpush1.bf16.msra.mxu0 0
      %811 = vmatprep.subr.bf16.mxu0 0
      %812 = vmatpush1.bf16.msra.mxu0 0
      %813 = vmatprep.subr.bf16.mxu0 0
      %814 = vmatpush1.bf16.msra.mxu0 0
      %815 = vmatprep.subr.bf16.mxu0 0
      %816 = vmatpush1.bf16.msra.mxu0 0
      %817 = vmatprep.subr.bf16.mxu0 0
      %818 = vmatpush1.bf16.msra.mxu0 0
      %819 = vmatprep.subr.bf16.mxu0 0
      %820 = vmatpush1.bf16.msra.mxu0 0
      %821 = vmatprep.subr.bf16.mxu0 0
      %822 = vmatpush1.bf16.msra.mxu0 0
      %823 = vmatprep.subr.bf16.mxu0 0
      %824 = vmatpush1.bf16.msra.mxu0 0
      %825 = vmatprep.subr.bf16.mxu0 0
      %826 = vmatpush1.bf16.msra.mxu0 0
      %827 = vmatprep.subr.bf16.mxu0 0
      %828 = vmatpush1.bf16.msra.mxu0 0
      %829 = vmatprep.subr.bf16.mxu0 0
      %830 = vmatpush1.bf16.msra.mxu0 0
      %831 = vmatprep.subr.bf16.mxu0 0
      %832 = vmatpush1.bf16.msra.mxu0 0
      %833 = vmatprep.subr.bf16.mxu0 0
      %834 = vmatpush1.bf16.msra.mxu0 0
      %835 = vmatprep.subr.bf16.mxu0 0
      %836 = vmatpush1.bf16.msra.mxu0 0
      %837 = vmatprep.mubr.bf16.mxu0 0
      %838 = vmatmul.mubr.bf16.gmra.mrb[0].mxu0 %v754
      %v839 = vpop.f32.mrb[0].mxu0
      %v840 = vadd.f32 0.0, %v839
      %v841 = vpop.f32.mrb[0].mxu0
      %v842 = vpop.f32.mrb[0].mxu0
      %v843 = vadd.f32 0.0, %v842
      %v844 = vpop.f32.mrb[0].mxu0
      %845 = vmatprep.mubr.bf16.mxu0 0
      %846 = vmatmul.mubr.bf16.gmra.mrb[0].mxu0 %v757
      %v847 = vpop.f32.mrb[0].mxu0
      %v848 = vadd.f32 0.0, %v847
      %v849 = vpop.f32.mrb[0].mxu0
      %v850 = vpop.f32.mrb[0].mxu0
      %v851 = vadd.f32 0.0, %v850
      %v852 = vpop.f32.mrb[0].mxu0
      %853 = vmatprep.mubr.bf16.mxu0 0
      %854 = vmatmul.mubr.bf16.gmra.mrb[0].mxu0 %v760
      %v855 = vpop.f32.mrb[0].mxu0
      %v856 = vadd.f32 0.0, %v855
      %v857 = vpop.f32.mrb[0].mxu0
      %v858 = vpop.f32.mrb[0].mxu0
      %v859 = vadd.f32 0.0, %v858
      %v860 = vpop.f32.mrb[0].mxu0
      %861 = vmatprep.mubr.bf16.mxu0 0
      %862 = vmatmul.mubr.bf16.gmra.mrb[0].mxu0 %v763
      %v863 = vpop.f32.mrb[0].mxu0
      %v864 = vadd.f32 0.0, %v863
      %v865 = vpop.f32.mrb[0].mxu0
      %v866 = vpop.f32.mrb[0].mxu0
      %v867 = vadd.f32 0.0, %v866
      %v868 = vpop.f32.mrb[0].mxu0
      %869 = vmatprep.mubr.bf16.mxu0 0
      %870 = vmatmul.mubr.bf16.gmra.mrb[0].mxu0 %v766
      %v871 = vpop.f32.mrb[0].mxu0
      %v872 = vadd.f32 0.0, %v871
      %v873 = vpop.f32.mrb[0].mxu0
      %v874 = vpop.f32.mrb[0].mxu0
      %v875 = vadd.f32 0.0, %v874
      %v876 = vpop.f32.mrb[0].mxu0
      %877 = vmatprep.mubr.bf16.mxu0 0
      %878 = vmatmul.mubr.bf16.gmra.mrb[0].mxu0 %v769
      %v879 = vpop.f32.mrb[0].mxu0
      %v880 = vadd.f32 0.0, %v879
      %v881 = vpop.f32.mrb[0].mxu0
      %v882 = vpop.f32.mrb[0].mxu0
      %v883 = vadd.f32 0.0, %v882
      %v884 = vpop.f32.mrb[0].mxu0
      %885 = vmatprep.mubr.bf16.mxu0 0
      %886 = vmatmul.mubr.bf16.gmra.mrb[0].mxu0 %v772
      %v887 = vpop.f32.mrb[0].mxu0
      %v888 = vadd.f32 0.0, %v887
      %v889 = vpop.f32.mrb[0].mxu0
      %v890 = vpop.f32.mrb[0].mxu0
      %v891 = vadd.f32 0.0, %v890
      %v892 = vpop.f32.mrb[0].mxu0
      %893 = vmatprep.mubr.bf16.mxu0 0
      %894 = vmatmul.mubr.bf16.gmra.mrb[0].mxu0 %v775
      %v895 = vpop.f32.mrb[0].mxu0
      %v896 = vadd.f32 0.0, %v895
      %v897 = vpop.f32.mrb[0].mxu0
      %v898 = vpop.f32.mrb[0].mxu0
      %v899 = vadd.f32 0.0, %v898
      %v900 = vpop.f32.mrb[0].mxu0
      %901 = vmatprep.mubr.bf16.mxu0 0
      %902 = vmatmul.mubr.bf16.gmra.mrb[0].mxu0 %v778
      %v903 = vpop.f32.mrb[0].mxu0
      %v904 = vadd.f32 0.0, %v903
      %v905 = vpop.f32.mrb[0].mxu0
      %v906 = vpop.f32.mrb[0].mxu0
      %v907 = vadd.f32 0.0, %v906
      %v908 = vpop.f32.mrb[0].mxu0
      %909 = vmatprep.mubr.bf16.mxu0 0
      %910 = vmatmul.mubr.bf16.gmra.mrb[0].mxu0 %v781
      %v911 = vpop.f32.mrb[0].mxu0
      %v912 = vadd.f32 0.0, %v911
      %v913 = vpop.f32.mrb[0].mxu0
      %v914 = vpop.f32.mrb[0].mxu0
      %v915 = vadd.f32 0.0, %v914
      %v916 = vpop.f32.mrb[0].mxu0
      %917 = vmatprep.mubr.bf16.mxu0 0
      %918 = vmatmul.mubr.bf16.gmra.mrb[0].mxu0 %v784
      %v919 = vpop.f32.mrb[0].mxu0
      %v920 = vadd.f32 0.0, %v919
      %v921 = vpop.f32.mrb[0].mxu0
      %v922 = vpop.f32.mrb[0].mxu0
      %v923 = vadd.f32 0.0, %v922
      %v924 = vpop.f32.mrb[0].mxu0
      %925 = vmatprep.mubr.bf16.mxu0 0
      %926 = vmatmul.mubr.bf16.gmra.mrb[0].mxu0 %v787
      %v927 = vpop.f32.mrb[0].mxu0
      %v928 = vadd.f32 0.0, %v927
      %v929 = vpop.f32.mrb[0].mxu0
      %v930 = vpop.f32.mrb[0].mxu0
      %v931 = vadd.f32 0.0, %v930
      %v932 = vpop.f32.mrb[0].mxu0
      %933 = vmatprep.mubr.bf16.mxu0 0
      %934 = vmatmul.mubr.bf16.gmra.mrb[0].mxu0 %v790
      %v935 = vpop.f32.mrb[0].mxu0
      %v936 = vadd.f32 0.0, %v935
      %v937 = vpop.f32.mrb[0].mxu0
      %v938 = vpop.f32.mrb[0].mxu0
      %v939 = vadd.f32 0.0, %v938
      %v940 = vpop.f32.mrb[0].mxu0
      %941 = vmatprep.mubr.bf16.mxu0 0
      %942 = vmatmul.mubr.bf16.gmra.mrb[0].mxu0 %v793
      %v943 = vpop.f32.mrb[0].mxu0
      %v944 = vadd.f32 0.0, %v943
      %v945 = vpop.f32.mrb[0].mxu0
      %v946 = vpop.f32.mrb[0].mxu0
      %v947 = vadd.f32 0.0, %v946
      %v948 = vpop.f32.mrb[0].mxu0
      %949 = vmatprep.mubr.bf16.mxu0 0
      %950 = vmatmul.mubr.bf16.gmra.mrb[0].mxu0 %v796
      %v951 = vpop.f32.mrb[0].mxu0
      %v952 = vadd.f32 0.0, %v951
      %v953 = vpop.f32.mrb[0].mxu0
      %v954 = vpop.f32.mrb[0].mxu0
      %v955 = vadd.f32 0.0, %v954
      %v956 = vpop.f32.mrb[0].mxu0
      %957 = vmatprep.mubr.bf16.mxu0 0
      %958 = vmatmul.mubr.bf16.gmra.mrb[0].mxu0 %v799
      %v959 = vpop.f32.mrb[0].mxu0
      %v960 = vadd.f32 0.0, %v959
      %v961 = vpop.f32.mrb[0].mxu0
      %v962 = vpop.f32.mrb[0].mxu0
      %v963 = vadd.f32 0.0, %v962
      %v964 = vpop.f32.mrb[0].mxu0
      %965 = vdwg.mxu0
      %v998 = vunpack.c.l.b16 %v266
      %v999 = vunpack.c.l.b16 %v267
      %v1000 = vunpack.c.l.b16 %v268
      %v1001 = vunpack.c.l.b16 %v269
      %v1002 = vunpack.c.l.b16 %v270
      %v1003 = vunpack.c.l.b16 %v271
      %v1004 = vunpack.c.l.b16 %v272
      %v1005 = vunpack.c.l.b16 %v273
      %v1006 = vunpack.c.l.b16 %v274
      %v1007 = vunpack.c.l.b16 %v275
      %v1008 = vunpack.c.l.b16 %v276
      %v1009 = vunpack.c.l.b16 %v277
      %v1010 = vunpack.c.l.b16 %v278
      %v1011 = vunpack.c.l.b16 %v279
      %v1012 = vunpack.c.l.b16 %v280
      %v1013 = vunpack.c.l.b16 %v281
      %v1014 = vunpack.c.l.b16 %v282
      %v1015 = vunpack.c.l.b16 %v283
      %v1016 = vunpack.c.l.b16 %v284
      %v1017 = vunpack.c.l.b16 %v285
      %v1018 = vunpack.c.l.b16 %v286
      %v1019 = vunpack.c.l.b16 %v287
      %v1020 = vunpack.c.l.b16 %v288
      %v1021 = vunpack.c.l.b16 %v289
      %v1022 = vunpack.c.l.b16 %v290
      %v1023 = vunpack.c.l.b16 %v291
      %v1024 = vunpack.c.l.b16 %v292
      %v1025 = vunpack.c.l.b16 %v293
      %v1026 = vunpack.c.l.b16 %v294
      %v1027 = vunpack.c.l.b16 %v295
      %v1028 = vunpack.c.l.b16 %v296
      %v1029 = vunpack.c.l.b16 %v297
      %v1030 = vpack.c.b16 %v999, %v998
      %v1031 = vpack.c.b16 %v1001, %v1000
      %v1032 = vpack.c.b16 %v1003, %v1002
      %v1033 = vpack.c.b16 %v1005, %v1004
      %v1034 = vpack.c.b16 %v1007, %v1006
      %v1035 = vpack.c.b16 %v1009, %v1008
      %v1036 = vpack.c.b16 %v1011, %v1010
      %v1037 = vpack.c.b16 %v1013, %v1012
      %v1038 = vpack.c.b16 %v1015, %v1014
      %v1039 = vpack.c.b16 %v1017, %v1016
      %v1040 = vpack.c.b16 %v1019, %v1018
      %v1041 = vpack.c.b16 %v1021, %v1020
      %v1042 = vpack.c.b16 %v1023, %v1022
      %v1043 = vpack.c.b16 %v1025, %v1024
      %v1044 = vpack.c.b16 %v1027, %v1026
      %v1045 = vpack.c.b16 %v1029, %v1028
      %v1047 = vsel %vm752, %v1030, 0
      %v1050 = vsel %vm752, %v1031, 0
      %v1053 = vsel %vm752, %v1032, 0
      %v1056 = vsel %vm752, %v1033, 0
      %v1059 = vsel %vm752, %v1034, 0
      %v1062 = vsel %vm752, %v1035, 0
      %v1065 = vsel %vm752, %v1036, 0
      %v1068 = vsel %vm752, %v1037, 0
      %v1071 = vsel %vm752, %v1038, 0
      %v1074 = vsel %vm752, %v1039, 0
      %v1077 = vsel %vm752, %v1040, 0
      %v1080 = vsel %vm752, %v1041, 0
      %v1083 = vsel %vm752, %v1042, 0
      %v1086 = vsel %vm752, %v1043, 0
      %v1089 = vsel %vm752, %v1044, 0
      %v1092 = vsel %vm752, %v1045, 0
      %v1095 = vsel %vm801, %v298, 0
      %1097 = vmatprep.subr.bf16.mxu0 0
      %1098 = vmatpush1.bf16.msra.mxu0 %v1095
      %1099 = vmatprep.subr.bf16.mxu0 0
      %1100 = vmatpush1.bf16.msra.mxu0 0
      %1101 = vmatprep.subr.bf16.mxu0 0
      %1102 = vmatpush1.bf16.msra.mxu0 0
      %1103 = vmatprep.subr.bf16.mxu0 0
      %1104 = vmatpush1.bf16.msra.mxu0 0
      %1105 = vmatprep.subr.bf16.mxu0 0
      %1106 = vmatpush1.bf16.msra.mxu0 0
      %1107 = vmatprep.subr.bf16.mxu0 0
      %1108 = vmatpush1.bf16.msra.mxu0 0
      %1109 = vmatprep.subr.bf16.mxu0 0
      %1110 = vmatpush1.bf16.msra.mxu0 0
      %1111 = vmatprep.subr.bf16.mxu0 0
      %1112 = vmatpush1.bf16.msra.mxu0 0
      %1113 = vmatprep.subr.bf16.mxu0 0
      %1114 = vmatpush1.bf16.msra.mxu0 0
      %1115 = vmatprep.subr.bf16.mxu0 0
      %1116 = vmatpush1.bf16.msra.mxu0 0
      %1117 = vmatprep.subr.bf16.mxu0 0
      %1118 = vmatpush1.bf16.msra.mxu0 0
      %1119 = vmatprep.subr.bf16.mxu0 0
      %1120 = vmatpush1.bf16.msra.mxu0 0
      %1121 = vmatprep.subr.bf16.mxu0 0
      %1122 = vmatpush1.bf16.msra.mxu0 0
      %1123 = vmatprep.subr.bf16.mxu0 0
      %1124 = vmatpush1.bf16.msra.mxu0 0
      %1125 = vmatprep.subr.bf16.mxu0 0
      %1126 = vmatpush1.bf16.msra.mxu0 0
      %1127 = vmatprep.subr.bf16.mxu0 0
      %1128 = vmatpush1.bf16.msra.mxu0 0
      %1129 = vmatprep.mubr.bf16.mxu0 0
      %1130 = vmatmul.mubr.bf16.gmra.mrb[0].mxu0 %v1047
      %v1131 = vpop.f32.mrb[0].mxu0
      %v1132 = vadd.f32 %v840, %v1131
      %v1133 = vpop.f32.mrb[0].mxu0
      %v1134 = vpop.f32.mrb[0].mxu0
      %v1135 = vadd.f32 %v843, %v1134
      %v1136 = vpop.f32.mrb[0].mxu0
      %1137 = vmatprep.mubr.bf16.mxu0 0
      %1138 = vmatmul.mubr.bf16.gmra.mrb[0].mxu0 %v1050
      %v1139 = vpop.f32.mrb[0].mxu0
      %v1140 = vadd.f32 %v848, %v1139
      %v1141 = vpop.f32.mrb[0].mxu0
      %v1142 = vpop.f32.mrb[0].mxu0
      %v1143 = vadd.f32 %v851, %v1142
      %v1144 = vpop.f32.mrb[0].mxu0
      %1145 = vmatprep.mubr.bf16.mxu0 0
      %1146 = vmatmul.mubr.bf16.gmra.mrb[0].mxu0 %v1053
      %v1147 = vpop.f32.mrb[0].mxu0
      %v1148 = vadd.f32 %v856, %v1147
      %v1149 = vpop.f32.mrb[0].mxu0
      %v1150 = vpop.f32.mrb[0].mxu0
      %v1151 = vadd.f32 %v859, %v1150
      %v1152 = vpop.f32.mrb[0].mxu0
      %1153 = vmatprep.mubr.bf16.mxu0 0
      %1154 = vmatmul.mubr.bf16.gmra.mrb[0].mxu0 %v1056
      %v1155 = vpop.f32.mrb[0].mxu0
      %v1156 = vadd.f32 %v864, %v1155
      %v1157 = vpop.f32.mrb[0].mxu0
      %v1158 = vpop.f32.mrb[0].mxu0
      %v1159 = vadd.f32 %v867, %v1158
      %v1160 = vpop.f32.mrb[0].mxu0
      %1161 = vmatprep.mubr.bf16.mxu0 0
      %1162 = vmatmul.mubr.bf16.gmra.mrb[0].mxu0 %v1059
      %v1163 = vpop.f32.mrb[0].mxu0
      %v1164 = vadd.f32 %v872, %v1163
      %v1165 = vpop.f32.mrb[0].mxu0
      %v1166 = vpop.f32.mrb[0].mxu0
      %v1167 = vadd.f32 %v875, %v1166
      %v1168 = vpop.f32.mrb[0].mxu0
      %1169 = vmatprep.mubr.bf16.mxu0 0
      %1170 = vmatmul.mubr.bf16.gmra.mrb[0].mxu0 %v1062
      %v1171 = vpop.f32.mrb[0].mxu0
      %v1172 = vadd.f32 %v880, %v1171
      %v1173 = vpop.f32.mrb[0].mxu0
      %v1174 = vpop.f32.mrb[0].mxu0
      %v1175 = vadd.f32 %v883, %v1174
      %v1176 = vpop.f32.mrb[0].mxu0
      %1177 = vmatprep.mubr.bf16.mxu0 0
      %1178 = vmatmul.mubr.bf16.gmra.mrb[0].mxu0 %v1065
      %v1179 = vpop.f32.mrb[0].mxu0
      %v1180 = vadd.f32 %v888, %v1179
      %v1181 = vpop.f32.mrb[0].mxu0
      %v1182 = vpop.f32.mrb[0].mxu0
      %v1183 = vadd.f32 %v891, %v1182
      %v1184 = vpop.f32.mrb[0].mxu0
      %1185 = vmatprep.mubr.bf16.mxu0 0
      %1186 = vmatmul.mubr.bf16.gmra.mrb[0].mxu0 %v1068
      %v1187 = vpop.f32.mrb[0].mxu0
      %v1188 = vadd.f32 %v896, %v1187
      %v1189 = vpop.f32.mrb[0].mxu0
      %v1190 = vpop.f32.mrb[0].mxu0
      %v1191 = vadd.f32 %v899, %v1190
      %v1192 = vpop.f32.mrb[0].mxu0
      %1193 = vmatprep.mubr.bf16.mxu0 0
      %1194 = vmatmul.mubr.bf16.gmra.mrb[0].mxu0 %v1071
      %v1195 = vpop.f32.mrb[0].mxu0
      %v1196 = vadd.f32 %v904, %v1195
      %v1197 = vpop.f32.mrb[0].mxu0
      %v1198 = vpop.f32.mrb[0].mxu0
      %v1199 = vadd.f32 %v907, %v1198
      %v1200 = vpop.f32.mrb[0].mxu0
      %1201 = vmatprep.mubr.bf16.mxu0 0
      %1202 = vmatmul.mubr.bf16.gmra.mrb[0].mxu0 %v1074
      %v1203 = vpop.f32.mrb[0].mxu0
      %v1204 = vadd.f32 %v912, %v1203
      %v1205 = vpop.f32.mrb[0].mxu0
      %v1206 = vpop.f32.mrb[0].mxu0
      %v1207 = vadd.f32 %v915, %v1206
      %v1208 = vpop.f32.mrb[0].mxu0
      %1209 = vmatprep.mubr.bf16.mxu0 0
      %1210 = vmatmul.mubr.bf16.gmra.mrb[0].mxu0 %v1077
      %v1211 = vpop.f32.mrb[0].mxu0
      %v1212 = vadd.f32 %v920, %v1211
      %v1213 = vpop.f32.mrb[0].mxu0
      %v1214 = vpop.f32.mrb[0].mxu0
      %v1215 = vadd.f32 %v923, %v1214
      %v1216 = vpop.f32.mrb[0].mxu0
      %1217 = vmatprep.mubr.bf16.mxu0 0
      %1218 = vmatmul.mubr.bf16.gmra.mrb[0].mxu0 %v1080
      %v1219 = vpop.f32.mrb[0].mxu0
      %v1220 = vadd.f32 %v928, %v1219
      %v1221 = vpop.f32.mrb[0].mxu0
      %v1222 = vpop.f32.mrb[0].mxu0
      %v1223 = vadd.f32 %v931, %v1222
      %v1224 = vpop.f32.mrb[0].mxu0
      %1225 = vmatprep.mubr.bf16.mxu0 0
      %1226 = vmatmul.mubr.bf16.gmra.mrb[0].mxu0 %v1083
      %v1227 = vpop.f32.mrb[0].mxu0
      %v1228 = vadd.f32 %v936, %v1227
      %v1229 = vpop.f32.mrb[0].mxu0
      %v1230 = vpop.f32.mrb[0].mxu0
      %v1231 = vadd.f32 %v939, %v1230
      %v1232 = vpop.f32.mrb[0].mxu0
      %1233 = vmatprep.mubr.bf16.mxu0 0
      %1234 = vmatmul.mubr.bf16.gmra.mrb[0].mxu0 %v1086
      %v1235 = vpop.f32.mrb[0].mxu0
      %v1236 = vadd.f32 %v944, %v1235
      %v1237 = vpop.f32.mrb[0].mxu0
      %v1238 = vpop.f32.mrb[0].mxu0
      %v1239 = vadd.f32 %v947, %v1238
      %v1240 = vpop.f32.mrb[0].mxu0
      %1241 = vmatprep.mubr.bf16.mxu0 0
      %1242 = vmatmul.mubr.bf16.gmra.mrb[0].mxu0 %v1089
      %v1243 = vpop.f32.mrb[0].mxu0
      %v1244 = vadd.f32 %v952, %v1243
      %v1245 = vpop.f32.mrb[0].mxu0
      %v1246 = vpop.f32.mrb[0].mxu0
      %v1247 = vadd.f32 %v955, %v1246
      %v1248 = vpop.f32.mrb[0].mxu0
      %1249 = vmatprep.mubr.bf16.mxu0 0
      %1250 = vmatmul.mubr.bf16.gmra.mrb[0].mxu0 %v1092
      %v1251 = vpop.f32.mrb[0].mxu0
      %v1252 = vadd.f32 %v960, %v1251
      %v1253 = vpop.f32.mrb[0].mxu0
      %v1254 = vpop.f32.mrb[0].mxu0
      %v1255 = vadd.f32 %v963, %v1254
      %v1256 = vpop.f32.mrb[0].mxu0
      %1257 = vdwg.mxu0
      %v1258 = vld [vmem:[%s265] sm:$0xe]
      %v1259 = vld [vmem:[%s265 + $0xc] sm:$0xe]
      %v1260 = vld [vmem:[%s265 + $0x18] sm:$0xe]
      %v1261 = vld [vmem:[%s265 + $0x24] sm:$0xe]
      %v1262 = vld [vmem:[%s265 + $0x30] sm:$0xe]
      %v1263 = vld [vmem:[%s265 + $0x3c] sm:$0xe]
      %v1264 = vld [vmem:[%s265 + $0x48] sm:$0xe]
      %v1265 = vld [vmem:[%s265 + $0x54] sm:$0xe]
      %v1266 = vld [vmem:[%s265 + $0x60] sm:$0xe]
      %v1267 = vld [vmem:[%s265 + $0x6c] sm:$0xe]
      %v1268 = vld [vmem:[%s265 + $0x78] sm:$0xe]
      %v1269 = vld [vmem:[%s265 + $0x84] sm:$0xe]
      %v1270 = vld [vmem:[%s265 + $0x90] sm:$0xe]
      %v1271 = vld [vmem:[%s265 + $0x9c] sm:$0xe]
      %v1272 = vld [vmem:[%s265 + $0xa8] sm:$0xe]
      %v1273 = vld [vmem:[%s265 + $0xb4] sm:$0xe]
      %vm1306 = vcmask 1042432
      %vm1307 = vcmask 1046532
      %vm1308 = vmor %vm1306, %vm1307
      %v1309 = vrot.slane %v1258, 5
      %v1310 = vrot.slane %v1309, 4
      %v1311 = vrot.slane %v267, 5
      %v1312 = vsel %vm1308, %v1310, %v1311
      %v1313 = vrot.slane %v1311, 4
      %v1314 = vrot.slane %v299, 5
      %v1315 = vsel %vm1308, %v1313, %v1314
      %v1316 = vrot.slane %v1259, 5
      %v1317 = vrot.slane %v1316, 4
      %v1318 = vrot.slane %v269, 5
      %v1319 = vsel %vm1308, %v1317, %v1318
      %v1320 = vrot.slane %v1318, 4
      %v1321 = vrot.slane %v300, 5
      %v1322 = vsel %vm1308, %v1320, %v1321
      %v1323 = vrot.slane %v1260, 5
      %v1324 = vrot.slane %v1323, 4
      %v1325 = vrot.slane %v271, 5
      %v1326 = vsel %vm1308, %v1324, %v1325
      %v1327 = vrot.slane %v1325, 4
      %v1328 = vrot.slane %v301, 5
      %v1329 = vsel %vm1308, %v1327, %v1328
      %v1330 = vrot.slane %v1261, 5
      %v1331 = vrot.slane %v1330, 4
      %v1332 = vrot.slane %v273, 5
      %v1333 = vsel %vm1308, %v1331, %v1332
      %v1334 = vrot.slane %v1332, 4
      %v1335 = vrot.slane %v302, 5
      %v1336 = vsel %vm1308, %v1334, %v1335
      %v1337 = vrot.slane %v1262, 5
      %v1338 = vrot.slane %v1337, 4
      %v1339 = vrot.slane %v275, 5
      %v1340 = vsel %vm1308, %v1338, %v1339
      %v1341 = vrot.slane %v1339, 4
      %v1342 = vrot.slane %v303, 5
      %v1343 = vsel %vm1308, %v1341, %v1342
      %v1344 = vrot.slane %v1263, 5
      %v1345 = vrot.slane %v1344, 4
      %v1346 = vrot.slane %v277, 5
      %v1347 = vsel %vm1308, %v1345, %v1346
      %v1348 = vrot.slane %v1346, 4
      %v1349 = vrot.slane %v304, 5
      %v1350 = vsel %vm1308, %v1348, %v1349
      %v1351 = vrot.slane %v1264, 5
      %v1352 = vrot.slane %v1351, 4
      %v1353 = vrot.slane %v279, 5
      %v1354 = vsel %vm1308, %v1352, %v1353
      %v1355 = vrot.slane %v1353, 4
      %v1356 = vrot.slane %v305, 5
      %v1357 = vsel %vm1308, %v1355, %v1356
      %v1358 = vrot.slane %v1265, 5
      %v1359 = vrot.slane %v1358, 4
      %v1360 = vrot.slane %v281, 5
      %v1361 = vsel %vm1308, %v1359, %v1360
      %v1362 = vrot.slane %v1360, 4
      %v1363 = vrot.slane %v306, 5
      %v1364 = vsel %vm1308, %v1362, %v1363
      %v1365 = vrot.slane %v1266, 5
      %v1366 = vrot.slane %v1365, 4
      %v1367 = vrot.slane %v283, 5
      %v1368 = vsel %vm1308, %v1366, %v1367
      %v1369 = vrot.slane %v1367, 4
      %v1370 = vrot.slane %v307, 5
      %v1371 = vsel %vm1308, %v1369, %v1370
      %v1372 = vrot.slane %v1267, 5
      %v1373 = vrot.slane %v1372, 4
      %v1374 = vrot.slane %v285, 5
      %v1375 = vsel %vm1308, %v1373, %v1374
      %v1376 = vrot.slane %v1374, 4
      %v1377 = vrot.slane %v308, 5
      %v1378 = vsel %vm1308, %v1376, %v1377
      %v1379 = vrot.slane %v1268, 5
      %v1380 = vrot.slane %v1379, 4
      %v1381 = vrot.slane %v287, 5
      %v1382 = vsel %vm1308, %v1380, %v1381
      %v1383 = vrot.slane %v1381, 4
      %v1384 = vrot.slane %v309, 5
      %v1385 = vsel %vm1308, %v1383, %v1384
      %v1386 = vrot.slane %v1269, 5
      %v1387 = vrot.slane %v1386, 4
      %v1388 = vrot.slane %v289, 5
      %v1389 = vsel %vm1308, %v1387, %v1388
      %v1390 = vrot.slane %v1388, 4
      %v1391 = vrot.slane %v310, 5
      %v1392 = vsel %vm1308, %v1390, %v1391
      %v1393 = vrot.slane %v1270, 5
      %v1394 = vrot.slane %v1393, 4
      %v1395 = vrot.slane %v291, 5
      %v1396 = vsel %vm1308, %v1394, %v1395
      %v1397 = vrot.slane %v1395, 4
      %v1398 = vrot.slane %v311, 5
      %v1399 = vsel %vm1308, %v1397, %v1398
      %v1400 = vrot.slane %v1271, 5
      %v1401 = vrot.slane %v1400, 4
      %v1402 = vrot.slane %v293, 5
      %v1403 = vsel %vm1308, %v1401, %v1402
      %v1404 = vrot.slane %v1402, 4
      %v1405 = vrot.slane %v312, 5
      %v1406 = vsel %vm1308, %v1404, %v1405
      %v1407 = vrot.slane %v1272, 5
      %v1408 = vrot.slane %v1407, 4
      %v1409 = vrot.slane %v295, 5
      %v1410 = vsel %vm1308, %v1408, %v1409
      %v1411 = vrot.slane %v1409, 4
      %v1412 = vrot.slane %v313, 5
      %v1413 = vsel %vm1308, %v1411, %v1412
      %v1414 = vrot.slane %v1273, 5
      %v1415 = vrot.slane %v1414, 4
      %v1416 = vrot.slane %v297, 5
      %v1417 = vsel %vm1308, %v1415, %v1416
      %v1418 = vrot.slane %v1416, 4
      %v1419 = vrot.slane %v314, 5
      %v1420 = vsel %vm1308, %v1418, %v1419
      %s1421 = scalar_lea.vmem %s242, 4
      %v1422 = vld [vmem:[%s1421] sm:$0x3]
      %v1423 = vunpack.c.l.b16 %v1312
      %v1424 = vunpack.c.l.b16 %v1315
      %v1425 = vunpack.c.l.b16 %v1319
      %v1426 = vunpack.c.l.b16 %v1322
      %v1427 = vunpack.c.l.b16 %v1326
      %v1428 = vunpack.c.l.b16 %v1329
      %v1429 = vunpack.c.l.b16 %v1333
      %v1430 = vunpack.c.l.b16 %v1336
      %v1431 = vunpack.c.l.b16 %v1340
      %v1432 = vunpack.c.l.b16 %v1343
      %v1433 = vunpack.c.l.b16 %v1347
      %v1434 = vunpack.c.l.b16 %v1350
      %v1435 = vunpack.c.l.b16 %v1354
      %v1436 = vunpack.c.l.b16 %v1357
      %v1437 = vunpack.c.l.b16 %v1361
      %v1438 = vunpack.c.l.b16 %v1364
      %v1439 = vunpack.c.l.b16 %v1368
      %v1440 = vunpack.c.l.b16 %v1371
      %v1441 = vunpack.c.l.b16 %v1375
      %v1442 = vunpack.c.l.b16 %v1378
      %v1443 = vunpack.c.l.b16 %v1382
      %v1444 = vunpack.c.l.b16 %v1385
      %v1445 = vunpack.c.l.b16 %v1389
      %v1446 = vunpack.c.l.b16 %v1392
      %v1447 = vunpack.c.l.b16 %v1396
      %v1448 = vunpack.c.l.b16 %v1399
      %v1449 = vunpack.c.l.b16 %v1403
      %v1450 = vunpack.c.l.b16 %v1406
      %v1451 = vunpack.c.l.b16 %v1410
      %v1452 = vunpack.c.l.b16 %v1413
      %v1453 = vunpack.c.l.b16 %v1417
      %v1454 = vunpack.c.l.b16 %v1420
      %v1455 = vpack.c.b16 %v1424, %v1423
      %v1456 = vpack.c.b16 %v1426, %v1425
      %v1457 = vpack.c.b16 %v1428, %v1427
      %v1458 = vpack.c.b16 %v1430, %v1429
      %v1459 = vpack.c.b16 %v1432, %v1431
      %v1460 = vpack.c.b16 %v1434, %v1433
      %v1461 = vpack.c.b16 %v1436, %v1435
      %v1462 = vpack.c.b16 %v1438, %v1437
      %v1463 = vpack.c.b16 %v1440, %v1439
      %v1464 = vpack.c.b16 %v1442, %v1441
      %v1465 = vpack.c.b16 %v1444, %v1443
      %v1466 = vpack.c.b16 %v1446, %v1445
      %v1467 = vpack.c.b16 %v1448, %v1447
      %v1468 = vpack.c.b16 %v1450, %v1449
      %v1469 = vpack.c.b16 %v1452, %v1451
      %v1470 = vpack.c.b16 %v1454, %v1453
      %v1472 = vsel %vm752, %v1455, 0
      %v1475 = vsel %vm752, %v1456, 0
      %v1478 = vsel %vm752, %v1457, 0
      %v1481 = vsel %vm752, %v1458, 0
      %v1484 = vsel %vm752, %v1459, 0
      %v1487 = vsel %vm752, %v1460, 0
      %v1490 = vsel %vm752, %v1461, 0
      %v1493 = vsel %vm752, %v1462, 0
      %v1496 = vsel %vm752, %v1463, 0
      %v1499 = vsel %vm752, %v1464, 0
      %v1502 = vsel %vm752, %v1465, 0
      %v1505 = vsel %vm752, %v1466, 0
      %v1508 = vsel %vm752, %v1467, 0
      %v1511 = vsel %vm752, %v1468, 0
      %v1514 = vsel %vm752, %v1469, 0
      %v1517 = vsel %vm752, %v1470, 0
      %v1520 = vsel %vm801, %v1422, 0
      %1522 = vmatprep.subr.bf16.mxu0 0
      %1523 = vmatpush1.bf16.msra.mxu0 %v1520
      %1524 = vmatprep.subr.bf16.mxu0 0
      %1525 = vmatpush1.bf16.msra.mxu0 0
      %1526 = vmatprep.subr.bf16.mxu0 0
      %1527 = vmatpush1.bf16.msra.mxu0 0
      %1528 = vmatprep.subr.bf16.mxu0 0
      %1529 = vmatpush1.bf16.msra.mxu0 0
      %1530 = vmatprep.subr.bf16.mxu0 0
      %1531 = vmatpush1.bf16.msra.mxu0 0
      %1532 = vmatprep.subr.bf16.mxu0 0
      %1533 = vmatpush1.bf16.msra.mxu0 0
      %1534 = vmatprep.subr.bf16.mxu0 0
      %1535 = vmatpush1.bf16.msra.mxu0 0
      %1536 = vmatprep.subr.bf16.mxu0 0
      %1537 = vmatpush1.bf16.msra.mxu0 0
      %1538 = vmatprep.subr.bf16.mxu0 0
      %1539 = vmatpush1.bf16.msra.mxu0 0
      %1540 = vmatprep.subr.bf16.mxu0 0
      %1541 = vmatpush1.bf16.msra.mxu0 0
      %1542 = vmatprep.subr.bf16.mxu0 0
      %1543 = vmatpush1.bf16.msra.mxu0 0
      %1544 = vmatprep.subr.bf16.mxu0 0
      %1545 = vmatpush1.bf16.msra.mxu0 0
      %1546 = vmatprep.subr.bf16.mxu0 0
      %1547 = vmatpush1.bf16.msra.mxu0 0
      %1548 = vmatprep.subr.bf16.mxu0 0
      %1549 = vmatpush1.bf16.msra.mxu0 0
      %1550 = vmatprep.subr.bf16.mxu0 0
      %1551 = vmatpush1.bf16.msra.mxu0 0
      %1552 = vmatprep.subr.bf16.mxu0 0
      %1553 = vmatpush1.bf16.msra.mxu0 0
      %1554 = vmatprep.mubr.bf16.mxu0 0
      %1555 = vmatmul.mubr.bf16.gmra.mrb[0].mxu0 %v1472
      %v1556 = vpop.f32.mrb[0].mxu0
      %v1557 = vadd.f32 0.0, %v1556
      %v1558 = vpop.f32.mrb[0].mxu0
      %v1559 = vpop.f32.mrb[0].mxu0
      %v1560 = vadd.f32 0.0, %v1559
      %v1561 = vpop.f32.mrb[0].mxu0
      %1562 = vmatprep.mubr.bf16.mxu0 0
      %1563 = vmatmul.mubr.bf16.gmra.mrb[0].mxu0 %v1475
      %v1564 = vpop.f32.mrb[0].mxu0
      %v1565 = vadd.f32 0.0, %v1564
      %v1566 = vpop.f32.mrb[0].mxu0
      %v1567 = vpop.f32.mrb[0].mxu0
      %v1568 = vadd.f32 0.0, %v1567
      %v1569 = vpop.f32.mrb[0].mxu0
      %1570 = vmatprep.mubr.bf16.mxu0 0
      %1571 = vmatmul.mubr.bf16.gmra.mrb[0].mxu0 %v1478
      %v1572 = vpop.f32.mrb[0].mxu0
      %v1573 = vadd.f32 0.0, %v1572
      %v1574 = vpop.f32.mrb[0].mxu0
      %v1575 = vpop.f32.mrb[0].mxu0
      %v1576 = vadd.f32 0.0, %v1575
      %v1577 = vpop.f32.mrb[0].mxu0
      %1578 = vmatprep.mubr.bf16.mxu0 0
      %1579 = vmatmul.mubr.bf16.gmra.mrb[0].mxu0 %v1481
      %v1580 = vpop.f32.mrb[0].mxu0
      %v1581 = vadd.f32 0.0, %v1580
      %v1582 = vpop.f32.mrb[0].mxu0
      %v1583 = vpop.f32.mrb[0].mxu0
      %v1584 = vadd.f32 0.0, %v1583
      %v1585 = vpop.f32.mrb[0].mxu0
      %1586 = vmatprep.mubr.bf16.mxu0 0
      %1587 = vmatmul.mubr.bf16.gmra.mrb[0].mxu0 %v1484
      %v1588 = vpop.f32.mrb[0].mxu0
      %v1589 = vadd.f32 0.0, %v1588
      %v1590 = vpop.f32.mrb[0].mxu0
      %v1591 = vpop.f32.mrb[0].mxu0
      %v1592 = vadd.f32 0.0, %v1591
      %v1593 = vpop.f32.mrb[0].mxu0
      %1594 = vmatprep.mubr.bf16.mxu0 0
      %1595 = vmatmul.mubr.bf16.gmra.mrb[0].mxu0 %v1487
      %v1596 = vpop.f32.mrb[0].mxu0
      %v1597 = vadd.f32 0.0, %v1596
      %v1598 = vpop.f32.mrb[0].mxu0
      %v1599 = vpop.f32.mrb[0].mxu0
      %v1600 = vadd.f32 0.0, %v1599
      %v1601 = vpop.f32.mrb[0].mxu0
      %1602 = vmatprep.mubr.bf16.mxu0 0
      %1603 = vmatmul.mubr.bf16.gmra.mrb[0].mxu0 %v1490
      %v1604 = vpop.f32.mrb[0].mxu0
      %v1605 = vadd.f32 0.0, %v1604
      %v1606 = vpop.f32.mrb[0].mxu0
      %v1607 = vpop.f32.mrb[0].mxu0
      %v1608 = vadd.f32 0.0, %v1607
      %v1609 = vpop.f32.mrb[0].mxu0
      %1610 = vmatprep.mubr.bf16.mxu0 0
      %1611 = vmatmul.mubr.bf16.gmra.mrb[0].mxu0 %v1493
      %v1612 = vpop.f32.mrb[0].mxu0
      %v1613 = vadd.f32 0.0, %v1612
      %v1614 = vpop.f32.mrb[0].mxu0
      %v1615 = vpop.f32.mrb[0].mxu0
      %v1616 = vadd.f32 0.0, %v1615
      %v1617 = vpop.f32.mrb[0].mxu0
      %1618 = vmatprep.mubr.bf16.mxu0 0
      %1619 = vmatmul.mubr.bf16.gmra.mrb[0].mxu0 %v1496
      %v1620 = vpop.f32.mrb[0].mxu0
      %v1621 = vadd.f32 0.0, %v1620
      %v1622 = vpop.f32.mrb[0].mxu0
      %v1623 = vpop.f32.mrb[0].mxu0
      %v1624 = vadd.f32 0.0, %v1623
      %v1625 = vpop.f32.mrb[0].mxu0
      %1626 = vmatprep.mubr.bf16.mxu0 0
      %1627 = vmatmul.mubr.bf16.gmra.mrb[0].mxu0 %v1499
      %v1628 = vpop.f32.mrb[0].mxu0
      %v1629 = vadd.f32 0.0, %v1628
      %v1630 = vpop.f32.mrb[0].mxu0
      %v1631 = vpop.f32.mrb[0].mxu0
      %v1632 = vadd.f32 0.0, %v1631
      %v1633 = vpop.f32.mrb[0].mxu0
      %1634 = vmatprep.mubr.bf16.mxu0 0
      %1635 = vmatmul.mubr.bf16.gmra.mrb[0].mxu0 %v1502
      %v1636 = vpop.f32.mrb[0].mxu0
      %v1637 = vadd.f32 0.0, %v1636
      %v1638 = vpop.f32.mrb[0].mxu0
      %v1639 = vpop.f32.mrb[0].mxu0
      %v1640 = vadd.f32 0.0, %v1639
      %v1641 = vpop.f32.mrb[0].mxu0
      %1642 = vmatprep.mubr.bf16.mxu0 0
      %1643 = vmatmul.mubr.bf16.gmra.mrb[0].mxu0 %v1505
      %v1644 = vpop.f32.mrb[0].mxu0
      %v1645 = vadd.f32 0.0, %v1644
      %v1646 = vpop.f32.mrb[0].mxu0
      %v1647 = vpop.f32.mrb[0].mxu0
      %v1648 = vadd.f32 0.0, %v1647
      %v1649 = vpop.f32.mrb[0].mxu0
      %1650 = vmatprep.mubr.bf16.mxu0 0
      %1651 = vmatmul.mubr.bf16.gmra.mrb[0].mxu0 %v1508
      %v1652 = vpop.f32.mrb[0].mxu0
      %v1653 = vadd.f32 0.0, %v1652
      %v1654 = vpop.f32.mrb[0].mxu0
      %v1655 = vpop.f32.mrb[0].mxu0
      %v1656 = vadd.f32 0.0, %v1655
      %v1657 = vpop.f32.mrb[0].mxu0
      %1658 = vmatprep.mubr.bf16.mxu0 0
      %1659 = vmatmul.mubr.bf16.gmra.mrb[0].mxu0 %v1511
      %v1660 = vpop.f32.mrb[0].mxu0
      %v1661 = vadd.f32 0.0, %v1660
      %v1662 = vpop.f32.mrb[0].mxu0
      %v1663 = vpop.f32.mrb[0].mxu0
      %v1664 = vadd.f32 0.0, %v1663
      %v1665 = vpop.f32.mrb[0].mxu0
      %1666 = vmatprep.mubr.bf16.mxu0 0
      %1667 = vmatmul.mubr.bf16.gmra.mrb[0].mxu0 %v1514
      %v1668 = vpop.f32.mrb[0].mxu0
      %v1669 = vadd.f32 0.0, %v1668
      %v1670 = vpop.f32.mrb[0].mxu0
      %v1671 = vpop.f32.mrb[0].mxu0
      %v1672 = vadd.f32 0.0, %v1671
      %v1673 = vpop.f32.mrb[0].mxu0
      %1674 = vmatprep.mubr.bf16.mxu0 0
      %1675 = vmatmul.mubr.bf16.gmra.mrb[0].mxu0 %v1517
      %v1676 = vpop.f32.mrb[0].mxu0
      %v1677 = vadd.f32 0.0, %v1676
      %v1678 = vpop.f32.mrb[0].mxu0
      %v1679 = vpop.f32.mrb[0].mxu0
      %v1680 = vadd.f32 0.0, %v1679
      %v1681 = vpop.f32.mrb[0].mxu0
      %1682 = vdwg.mxu0
      %v1683 = vadd.f32 %v1132, %v1557
      %v1684 = vadd.f32 %v1135, %v1560
      %v1685 = vadd.f32 %v1140, %v1565
      %v1686 = vadd.f32 %v1143, %v1568
      %v1687 = vadd.f32 %v1148, %v1573
      %v1688 = vadd.f32 %v1151, %v1576
      %v1689 = vadd.f32 %v1156, %v1581
      %v1690 = vadd.f32 %v1159, %v1584
      %v1691 = vadd.f32 %v1164, %v1589
      %v1692 = vadd.f32 %v1167, %v1592
      %v1693 = vadd.f32 %v1172, %v1597
      %v1694 = vadd.f32 %v1175, %v1600
      %v1695 = vadd.f32 %v1180, %v1605
      %v1696 = vadd.f32 %v1183, %v1608
      %v1697 = vadd.f32 %v1188, %v1613
      %v1698 = vadd.f32 %v1191, %v1616
      %v1699 = vadd.f32 %v1196, %v1621
      %v1700 = vadd.f32 %v1199, %v1624
      %v1701 = vadd.f32 %v1204, %v1629
      %v1702 = vadd.f32 %v1207, %v1632
      %v1703 = vadd.f32 %v1212, %v1637
      %v1704 = vadd.f32 %v1215, %v1640
      %v1705 = vadd.f32 %v1220, %v1645
      %v1706 = vadd.f32 %v1223, %v1648
      %v1707 = vadd.f32 %v1228, %v1653
      %v1708 = vadd.f32 %v1231, %v1656
      %v1709 = vadd.f32 %v1236, %v1661
      %v1710 = vadd.f32 %v1239, %v1664
      %v1711 = vadd.f32 %v1244, %v1669
      %v1712 = vadd.f32 %v1247, %v1672
      %v1713 = vadd.f32 %v1252, %v1677
      %v1714 = vadd.f32 %v1255, %v1680
      %s1715 = sadd.s32 %s262, 1
      %s1716 = smul.u32 %s1715, 3
      %s1717 = smul.addr %s1716, 4
      %s1718 = scalar_lea.vmem %s237, %s1717
      %v1719 = vld [vmem:[%s1718] sm:$0xf]
      %v1720 = vld [vmem:[%s1718 + $0x4] sm:$0xf]
      %v1721 = vld [vmem:[%s1718 + $0xc] sm:$0xf]
      %v1722 = vld [vmem:[%s1718 + $0x10] sm:$0xf]
      %v1723 = vld [vmem:[%s1718 + $0x18] sm:$0xf]
      %v1724 = vld [vmem:[%s1718 + $0x1c] sm:$0xf]
      %v1725 = vld [vmem:[%s1718 + $0x24] sm:$0xf]
      %v1726 = vld [vmem:[%s1718 + $0x28] sm:$0xf]
      %v1727 = vld [vmem:[%s1718 + $0x30] sm:$0xf]
      %v1728 = vld [vmem:[%s1718 + $0x34] sm:$0xf]
      %v1729 = vld [vmem:[%s1718 + $0x3c] sm:$0xf]
      %v1730 = vld [vmem:[%s1718 + $0x40] sm:$0xf]
      %v1731 = vld [vmem:[%s1718 + $0x48] sm:$0xf]
      %v1732 = vld [vmem:[%s1718 + $0x4c] sm:$0xf]
      %v1733 = vld [vmem:[%s1718 + $0x54] sm:$0xf]
      %v1734 = vld [vmem:[%s1718 + $0x58] sm:$0xf]
      %v1735 = vld [vmem:[%s1718 + $0x60] sm:$0xf]
      %v1736 = vld [vmem:[%s1718 + $0x64] sm:$0xf]
      %v1737 = vld [vmem:[%s1718 + $0x6c] sm:$0xf]
      %v1738 = vld [vmem:[%s1718 + $0x70] sm:$0xf]
      %v1739 = vld [vmem:[%s1718 + $0x78] sm:$0xf]
      %v1740 = vld [vmem:[%s1718 + $0x7c] sm:$0xf]
      %v1741 = vld [vmem:[%s1718 + $0x84] sm:$0xf]
      %v1742 = vld [vmem:[%s1718 + $0x88] sm:$0xf]
      %v1743 = vld [vmem:[%s1718 + $0x90] sm:$0xf]
      %v1744 = vld [vmem:[%s1718 + $0x94] sm:$0xf]
      %v1745 = vld [vmem:[%s1718 + $0x9c] sm:$0xf]
      %v1746 = vld [vmem:[%s1718 + $0xa0] sm:$0xf]
      %v1747 = vld [vmem:[%s1718 + $0xa8] sm:$0xf]
      %v1748 = vld [vmem:[%s1718 + $0xac] sm:$0xf]
      %v1749 = vld [vmem:[%s1718 + $0xb4] sm:$0xf]
      %v1750 = vld [vmem:[%s1718 + $0xb8] sm:$0xf]
      %s1751 = scalar_lea.vmem %s242, 6
      %v1752 = vld [vmem:[%s1751] sm:$0x3]
      %v1785 = vunpack.c.l.b16 %v1719
      %v1786 = vunpack.c.l.b16 %v1720
      %v1787 = vunpack.c.l.b16 %v1721
      %v1788 = vunpack.c.l.b16 %v1722
      %v1789 = vunpack.c.l.b16 %v1723
      %v1790 = vunpack.c.l.b16 %v1724
      %v1791 = vunpack.c.l.b16 %v1725
      %v1792 = vunpack.c.l.b16 %v1726
      %v1793 = vunpack.c.l.b16 %v1727
      %v1794 = vunpack.c.l.b16 %v1728
      %v1795 = vunpack.c.l.b16 %v1729
      %v1796 = vunpack.c.l.b16 %v1730
      %v1797 = vunpack.c.l.b16 %v1731
      %v1798 = vunpack.c.l.b16 %v1732
      %v1799 = vunpack.c.l.b16 %v1733
      %v1800 = vunpack.c.l.b16 %v1734
      %v1801 = vunpack.c.l.b16 %v1735
      %v1802 = vunpack.c.l.b16 %v1736
      %v1803 = vunpack.c.l.b16 %v1737
      %v1804 = vunpack.c.l.b16 %v1738
      %v1805 = vunpack.c.l.b16 %v1739
      %v1806 = vunpack.c.l.b16 %v1740
      %v1807 = vunpack.c.l.b16 %v1741
      %v1808 = vunpack.c.l.b16 %v1742
      %v1809 = vunpack.c.l.b16 %v1743
      %v1810 = vunpack.c.l.b16 %v1744
      %v1811 = vunpack.c.l.b16 %v1745
      %v1812 = vunpack.c.l.b16 %v1746
      %v1813 = vunpack.c.l.b16 %v1747
      %v1814 = vunpack.c.l.b16 %v1748
      %v1815 = vunpack.c.l.b16 %v1749
      %v1816 = vunpack.c.l.b16 %v1750
      %v1817 = vpack.c.b16 %v1786, %v1785
      %v1818 = vpack.c.b16 %v1788, %v1787
      %v1819 = vpack.c.b16 %v1790, %v1789
      %v1820 = vpack.c.b16 %v1792, %v1791
      %v1821 = vpack.c.b16 %v1794, %v1793
      %v1822 = vpack.c.b16 %v1796, %v1795
      %v1823 = vpack.c.b16 %v1798, %v1797
      %v1824 = vpack.c.b16 %v1800, %v1799
      %v1825 = vpack.c.b16 %v1802, %v1801
      %v1826 = vpack.c.b16 %v1804, %v1803
      %v1827 = vpack.c.b16 %v1806, %v1805
      %v1828 = vpack.c.b16 %v1808, %v1807
      %v1829 = vpack.c.b16 %v1810, %v1809
      %v1830 = vpack.c.b16 %v1812, %v1811
      %v1831 = vpack.c.b16 %v1814, %v1813
      %v1832 = vpack.c.b16 %v1816, %v1815
      %v1834 = vsel %vm752, %v1817, 0
      %v1837 = vsel %vm752, %v1818, 0
      %v1840 = vsel %vm752, %v1819, 0
      %v1843 = vsel %vm752, %v1820, 0
      %v1846 = vsel %vm752, %v1821, 0
      %v1849 = vsel %vm752, %v1822, 0
      %v1852 = vsel %vm752, %v1823, 0
      %v1855 = vsel %vm752, %v1824, 0
      %v1858 = vsel %vm752, %v1825, 0
      %v1861 = vsel %vm752, %v1826, 0
      %v1864 = vsel %vm752, %v1827, 0
      %v1867 = vsel %vm752, %v1828, 0
      %v1870 = vsel %vm752, %v1829, 0
      %v1873 = vsel %vm752, %v1830, 0
      %v1876 = vsel %vm752, %v1831, 0
      %v1879 = vsel %vm752, %v1832, 0
      %v1882 = vsel %vm801, %v1752, 0
      %1884 = vmatprep.subr.bf16.mxu0 0
      %1885 = vmatpush1.bf16.msra.mxu0 %v1882
      %1886 = vmatprep.subr.bf16.mxu0 0
      %1887 = vmatpush1.bf16.msra.mxu0 0
      %1888 = vmatprep.subr.bf16.mxu0 0
      %1889 = vmatpush1.bf16.msra.mxu0 0
      %1890 = vmatprep.subr.bf16.mxu0 0
      %1891 = vmatpush1.bf16.msra.mxu0 0
      %1892 = vmatprep.subr.bf16.mxu0 0
      %1893 = vmatpush1.bf16.msra.mxu0 0
      %1894 = vmatprep.subr.bf16.mxu0 0
      %1895 = vmatpush1.bf16.msra.mxu0 0
      %1896 = vmatprep.subr.bf16.mxu0 0
      %1897 = vmatpush1.bf16.msra.mxu0 0
      %1898 = vmatprep.subr.bf16.mxu0 0
      %1899 = vmatpush1.bf16.msra.mxu0 0
      %1900 = vmatprep.subr.bf16.mxu0 0
      %1901 = vmatpush1.bf16.msra.mxu0 0
      %1902 = vmatprep.subr.bf16.mxu0 0
      %1903 = vmatpush1.bf16.msra.mxu0 0
      %1904 = vmatprep.subr.bf16.mxu0 0
      %1905 = vmatpush1.bf16.msra.mxu0 0
      %1906 = vmatprep.subr.bf16.mxu0 0
      %1907 = vmatpush1.bf16.msra.mxu0 0
      %1908 = vmatprep.subr.bf16.mxu0 0
      %1909 = vmatpush1.bf16.msra.mxu0 0
      %1910 = vmatprep.subr.bf16.mxu0 0
      %1911 = vmatpush1.bf16.msra.mxu0 0
      %1912 = vmatprep.subr.bf16.mxu0 0
      %1913 = vmatpush1.bf16.msra.mxu0 0
      %1914 = vmatprep.subr.bf16.mxu0 0
      %1915 = vmatpush1.bf16.msra.mxu0 0
      %1916 = vmatprep.mubr.bf16.mxu0 0
      %1917 = vmatmul.mubr.bf16.gmra.mrb[0].mxu0 %v1834
      %v1918 = vpop.f32.mrb[0].mxu0
      %v1919 = vadd.f32 0.0, %v1918
      %v1920 = vpop.f32.mrb[0].mxu0
      %v1921 = vpop.f32.mrb[0].mxu0
      %v1922 = vadd.f32 0.0, %v1921
      %v1923 = vpop.f32.mrb[0].mxu0
      %1924 = vmatprep.mubr.bf16.mxu0 0
      %1925 = vmatmul.mubr.bf16.gmra.mrb[0].mxu0 %v1837
      %v1926 = vpop.f32.mrb[0].mxu0
      %v1927 = vadd.f32 0.0, %v1926
      %v1928 = vpop.f32.mrb[0].mxu0
      %v1929 = vpop.f32.mrb[0].mxu0
      %v1930 = vadd.f32 0.0, %v1929
      %v1931 = vpop.f32.mrb[0].mxu0
      %1932 = vmatprep.mubr.bf16.mxu0 0
      %1933 = vmatmul.mubr.bf16.gmra.mrb[0].mxu0 %v1840
      %v1934 = vpop.f32.mrb[0].mxu0
      %v1935 = vadd.f32 0.0, %v1934
      %v1936 = vpop.f32.mrb[0].mxu0
      %v1937 = vpop.f32.mrb[0].mxu0
      %v1938 = vadd.f32 0.0, %v1937
      %v1939 = vpop.f32.mrb[0].mxu0
      %1940 = vmatprep.mubr.bf16.mxu0 0
      %1941 = vmatmul.mubr.bf16.gmra.mrb[0].mxu0 %v1843
      %v1942 = vpop.f32.mrb[0].mxu0
      %v1943 = vadd.f32 0.0, %v1942
      %v1944 = vpop.f32.mrb[0].mxu0
      %v1945 = vpop.f32.mrb[0].mxu0
      %v1946 = vadd.f32 0.0, %v1945
      %v1947 = vpop.f32.mrb[0].mxu0
      %1948 = vmatprep.mubr.bf16.mxu0 0
      %1949 = vmatmul.mubr.bf16.gmra.mrb[0].mxu0 %v1846
      %v1950 = vpop.f32.mrb[0].mxu0
      %v1951 = vadd.f32 0.0, %v1950
      %v1952 = vpop.f32.mrb[0].mxu0
      %v1953 = vpop.f32.mrb[0].mxu0
      %v1954 = vadd.f32 0.0, %v1953
      %v1955 = vpop.f32.mrb[0].mxu0
      %1956 = vmatprep.mubr.bf16.mxu0 0
      %1957 = vmatmul.mubr.bf16.gmra.mrb[0].mxu0 %v1849
      %v1958 = vpop.f32.mrb[0].mxu0
      %v1959 = vadd.f32 0.0, %v1958
      %v1960 = vpop.f32.mrb[0].mxu0
      %v1961 = vpop.f32.mrb[0].mxu0
      %v1962 = vadd.f32 0.0, %v1961
      %v1963 = vpop.f32.mrb[0].mxu0
      %1964 = vmatprep.mubr.bf16.mxu0 0
      %1965 = vmatmul.mubr.bf16.gmra.mrb[0].mxu0 %v1852
      %v1966 = vpop.f32.mrb[0].mxu0
      %v1967 = vadd.f32 0.0, %v1966
      %v1968 = vpop.f32.mrb[0].mxu0
      %v1969 = vpop.f32.mrb[0].mxu0
      %v1970 = vadd.f32 0.0, %v1969
      %v1971 = vpop.f32.mrb[0].mxu0
      %1972 = vmatprep.mubr.bf16.mxu0 0
      %1973 = vmatmul.mubr.bf16.gmra.mrb[0].mxu0 %v1855
      %v1974 = vpop.f32.mrb[0].mxu0
      %v1975 = vadd.f32 0.0, %v1974
      %v1976 = vpop.f32.mrb[0].mxu0
      %v1977 = vpop.f32.mrb[0].mxu0
      %v1978 = vadd.f32 0.0, %v1977
      %v1979 = vpop.f32.mrb[0].mxu0
      %1980 = vmatprep.mubr.bf16.mxu0 0
      %1981 = vmatmul.mubr.bf16.gmra.mrb[0].mxu0 %v1858
      %v1982 = vpop.f32.mrb[0].mxu0
      %v1983 = vadd.f32 0.0, %v1982
      %v1984 = vpop.f32.mrb[0].mxu0
      %v1985 = vpop.f32.mrb[0].mxu0
      %v1986 = vadd.f32 0.0, %v1985
      %v1987 = vpop.f32.mrb[0].mxu0
      %1988 = vmatprep.mubr.bf16.mxu0 0
      %1989 = vmatmul.mubr.bf16.gmra.mrb[0].mxu0 %v1861
      %v1990 = vpop.f32.mrb[0].mxu0
      %v1991 = vadd.f32 0.0, %v1990
      %v1992 = vpop.f32.mrb[0].mxu0
      %v1993 = vpop.f32.mrb[0].mxu0
      %v1994 = vadd.f32 0.0, %v1993
      %v1995 = vpop.f32.mrb[0].mxu0
      %1996 = vmatprep.mubr.bf16.mxu0 0
      %1997 = vmatmul.mubr.bf16.gmra.mrb[0].mxu0 %v1864
      %v1998 = vpop.f32.mrb[0].mxu0
      %v1999 = vadd.f32 0.0, %v1998
      %v2000 = vpop.f32.mrb[0].mxu0
      %v2001 = vpop.f32.mrb[0].mxu0
      %v2002 = vadd.f32 0.0, %v2001
      %v2003 = vpop.f32.mrb[0].mxu0
      %2004 = vmatprep.mubr.bf16.mxu0 0
      %2005 = vmatmul.mubr.bf16.gmra.mrb[0].mxu0 %v1867
      %v2006 = vpop.f32.mrb[0].mxu0
      %v2007 = vadd.f32 0.0, %v2006
      %v2008 = vpop.f32.mrb[0].mxu0
      %v2009 = vpop.f32.mrb[0].mxu0
      %v2010 = vadd.f32 0.0, %v2009
      %v2011 = vpop.f32.mrb[0].mxu0
      %2012 = vmatprep.mubr.bf16.mxu0 0
      %2013 = vmatmul.mubr.bf16.gmra.mrb[0].mxu0 %v1870
      %v2014 = vpop.f32.mrb[0].mxu0
      %v2015 = vadd.f32 0.0, %v2014
      %v2016 = vpop.f32.mrb[0].mxu0
      %v2017 = vpop.f32.mrb[0].mxu0
      %v2018 = vadd.f32 0.0, %v2017
      %v2019 = vpop.f32.mrb[0].mxu0
      %2020 = vmatprep.mubr.bf16.mxu0 0
      %2021 = vmatmul.mubr.bf16.gmra.mrb[0].mxu0 %v1873
      %v2022 = vpop.f32.mrb[0].mxu0
      %v2023 = vadd.f32 0.0, %v2022
      %v2024 = vpop.f32.mrb[0].mxu0
      %v2025 = vpop.f32.mrb[0].mxu0
      %v2026 = vadd.f32 0.0, %v2025
      %v2027 = vpop.f32.mrb[0].mxu0
      %2028 = vmatprep.mubr.bf16.mxu0 0
      %2029 = vmatmul.mubr.bf16.gmra.mrb[0].mxu0 %v1876
      %v2030 = vpop.f32.mrb[0].mxu0
      %v2031 = vadd.f32 0.0, %v2030
      %v2032 = vpop.f32.mrb[0].mxu0
      %v2033 = vpop.f32.mrb[0].mxu0
      %v2034 = vadd.f32 0.0, %v2033
      %v2035 = vpop.f32.mrb[0].mxu0
      %2036 = vmatprep.mubr.bf16.mxu0 0
      %2037 = vmatmul.mubr.bf16.gmra.mrb[0].mxu0 %v1879
      %v2038 = vpop.f32.mrb[0].mxu0
      %v2039 = vadd.f32 0.0, %v2038
      %v2040 = vpop.f32.mrb[0].mxu0
      %v2041 = vpop.f32.mrb[0].mxu0
      %v2042 = vadd.f32 0.0, %v2041
      %v2043 = vpop.f32.mrb[0].mxu0
      %2044 = vdwg.mxu0
      %v2045 = vadd.f32 %v1683, %v1919
      %v2046 = vadd.f32 %v1684, %v1922
      %v2047 = vadd.f32 %v1685, %v1927
      %v2048 = vadd.f32 %v1686, %v1930
      %v2049 = vadd.f32 %v1687, %v1935
      %v2050 = vadd.f32 %v1688, %v1938
      %v2051 = vadd.f32 %v1689, %v1943
      %v2052 = vadd.f32 %v1690, %v1946
      %v2053 = vadd.f32 %v1691, %v1951
      %v2054 = vadd.f32 %v1692, %v1954
      %v2055 = vadd.f32 %v1693, %v1959
      %v2056 = vadd.f32 %v1694, %v1962
      %v2057 = vadd.f32 %v1695, %v1967
      %v2058 = vadd.f32 %v1696, %v1970
      %v2059 = vadd.f32 %v1697, %v1975
      %v2060 = vadd.f32 %v1698, %v1978
      %v2061 = vadd.f32 %v1699, %v1983
      %v2062 = vadd.f32 %v1700, %v1986
      %v2063 = vadd.f32 %v1701, %v1991
      %v2064 = vadd.f32 %v1702, %v1994
      %v2065 = vadd.f32 %v1703, %v1999
      %v2066 = vadd.f32 %v1704, %v2002
      %v2067 = vadd.f32 %v1705, %v2007
      %v2068 = vadd.f32 %v1706, %v2010
      %v2069 = vadd.f32 %v1707, %v2015
      %v2070 = vadd.f32 %v1708, %v2018
      %v2071 = vadd.f32 %v1709, %v2023
      %v2072 = vadd.f32 %v1710, %v2026
      %v2073 = vadd.f32 %v1711, %v2031
      %v2074 = vadd.f32 %v1712, %v2034
      %v2075 = vadd.f32 %v1713, %v2039
      %v2076 = vadd.f32 %v1714, %v2042
      %v2077 = vld [vmem:[%s1718] sm:$0xf]
      %v2078 = vld [vmem:[%s1718 + $0x4] sm:$0xf]
      %v2079 = vld [vmem:[%s1718 + $0x8] sm:$0x1]
      %v2080 = vld [vmem:[%s1718 + $0xc] sm:$0xf]
      %v2081 = vld [vmem:[%s1718 + $0x10] sm:$0xf]
      %v2082 = vld [vmem:[%s1718 + $0x14] sm:$0x1]
      %v2083 = vld [vmem:[%s1718 + $0x18] sm:$0xf]
      %v2084 = vld [vmem:[%s1718 + $0x1c] sm:$0xf]
      %v2085 = vld [vmem:[%s1718 + $0x20] sm:$0x1]
      %v2086 = vld [vmem:[%s1718 + $0x24] sm:$0xf]
      %v2087 = vld [vmem:[%s1718 + $0x28] sm:$0xf]
      %v2088 = vld [vmem:[%s1718 + $0x2c] sm:$0x1]
      %v2089 = vld [vmem:[%s1718 + $0x30] sm:$0xf]
      %v2090 = vld [vmem:[%s1718 + $0x34] sm:$0xf]
      %v2091 = vld [vmem:[%s1718 + $0x38] sm:$0x1]
      %v2092 = vld [vmem:[%s1718 + $0x3c] sm:$0xf]
      %v2093 = vld [vmem:[%s1718 + $0x40] sm:$0xf]
      %v2094 = vld [vmem:[%s1718 + $0x44] sm:$0x1]
      %v2095 = vld [vmem:[%s1718 + $0x48] sm:$0xf]
      %v2096 = vld [vmem:[%s1718 + $0x4c] sm:$0xf]
      %v2097 = vld [vmem:[%s1718 + $0x50] sm:$0x1]
      %v2098 = vld [vmem:[%s1718 + $0x54] sm:$0xf]
      %v2099 = vld [vmem:[%s1718 + $0x58] sm:$0xf]
      %v2100 = vld [vmem:[%s1718 + $0x5c] sm:$0x1]
      %v2101 = vld [vmem:[%s1718 + $0x60] sm:$0xf]
      %v2102 = vld [vmem:[%s1718 + $0x64] sm:$0xf]
      %v2103 = vld [vmem:[%s1718 + $0x68] sm:$0x1]
      %v2104 = vld [vmem:[%s1718 + $0x6c] sm:$0xf]
      %v2105 = vld [vmem:[%s1718 + $0x70] sm:$0xf]
      %v2106 = vld [vmem:[%s1718 + $0x74] sm:$0x1]
      %v2107 = vld [vmem:[%s1718 + $0x78] sm:$0xf]
      %v2108 = vld [vmem:[%s1718 + $0x7c] sm:$0xf]
      %v2109 = vld [vmem:[%s1718 + $0x80] sm:$0x1]
      %v2110 = vld [vmem:[%s1718 + $0x84] sm:$0xf]
      %v2111 = vld [vmem:[%s1718 + $0x88] sm:$0xf]
      %v2112 = vld [vmem:[%s1718 + $0x8c] sm:$0x1]
      %v2113 = vld [vmem:[%s1718 + $0x90] sm:$0xf]
      %v2114 = vld [vmem:[%s1718 + $0x94] sm:$0xf]
      %v2115 = vld [vmem:[%s1718 + $0x98] sm:$0x1]
      %v2116 = vld [vmem:[%s1718 + $0x9c] sm:$0xf]
      %v2117 = vld [vmem:[%s1718 + $0xa0] sm:$0xf]
      %v2118 = vld [vmem:[%s1718 + $0xa4] sm:$0x1]
      %v2119 = vld [vmem:[%s1718 + $0xa8] sm:$0xf]
      %v2120 = vld [vmem:[%s1718 + $0xac] sm:$0xf]
      %v2121 = vld [vmem:[%s1718 + $0xb0] sm:$0x1]
      %v2122 = vld [vmem:[%s1718 + $0xb4] sm:$0xf]
      %v2123 = vld [vmem:[%s1718 + $0xb8] sm:$0xf]
      %v2124 = vld [vmem:[%s1718 + $0xbc] sm:$0x1]
      %v2126 = vshrl.u32 %v2077, 16
      %v2128 = vrot.slane %v2126, 4
      %v2129 = vshll.u32 %v2077, 16
      %v2131 = vrot.slane %v2129, 5
      %v2132 = vor.u32 %v2128, %v2131
      %v2133 = vrot.slane %v2132, 4
      %v2135 = vshll.u32 %v2078, 16
      %v2137 = vrot.slane %v2135, 5
      %v2138 = vsel %vm317, %v2133, %v2137
      %v2139 = vshrl.u32 %v2078, 16
      %v2141 = vrot.slane %v2139, 4
      %v2142 = vor.u32 %v2141, %v2137
      %v2143 = vrot.slane %v2142, 4
      %v2145 = vshll.u32 %v2079, 16
      %v2147 = vrot.slane %v2145, 5
      %v2148 = vsel %vm317, %v2143, %v2147
      %v2150 = vshrl.u32 %v2080, 16
      %v2152 = vrot.slane %v2150, 4
      %v2153 = vshll.u32 %v2080, 16
      %v2155 = vrot.slane %v2153, 5
      %v2156 = vor.u32 %v2152, %v2155
      %v2157 = vrot.slane %v2156, 4
      %v2159 = vshll.u32 %v2081, 16
      %v2161 = vrot.slane %v2159, 5
      %v2162 = vsel %vm317, %v2157, %v2161
      %v2163 = vshrl.u32 %v2081, 16
      %v2165 = vrot.slane %v2163, 4
      %v2166 = vor.u32 %v2165, %v2161
      %v2167 = vrot.slane %v2166, 4
      %v2169 = vshll.u32 %v2082, 16
      %v2171 = vrot.slane %v2169, 5
      %v2172 = vsel %vm317, %v2167, %v2171
      %v2174 = vshrl.u32 %v2083, 16
      %v2176 = vrot.slane %v2174, 4
      %v2177 = vshll.u32 %v2083, 16
      %v2179 = vrot.slane %v2177, 5
      %v2180 = vor.u32 %v2176, %v2179
      %v2181 = vrot.slane %v2180, 4
      %v2183 = vshll.u32 %v2084, 16
      %v2185 = vrot.slane %v2183, 5
      %v2186 = vsel %vm317, %v2181, %v2185
      %v2187 = vshrl.u32 %v2084, 16
      %v2189 = vrot.slane %v2187, 4
      %v2190 = vor.u32 %v2189, %v2185
      %v2191 = vrot.slane %v2190, 4
      %v2193 = vshll.u32 %v2085, 16
      %v2195 = vrot.slane %v2193, 5
      %v2196 = vsel %vm317, %v2191, %v2195
      %v2198 = vshrl.u32 %v2086, 16
      %v2200 = vrot.slane %v2198, 4
      %v2201 = vshll.u32 %v2086, 16
      %v2203 = vrot.slane %v2201, 5
      %v2204 = vor.u32 %v2200, %v2203
      %v2205 = vrot.slane %v2204, 4
      %v2207 = vshll.u32 %v2087, 16
      %v2209 = vrot.slane %v2207, 5
      %v2210 = vsel %vm317, %v2205, %v2209
      %v2211 = vshrl.u32 %v2087, 16
      %v2213 = vrot.slane %v2211, 4
      %v2214 = vor.u32 %v2213, %v2209
      %v2215 = vrot.slane %v2214, 4
      %v2217 = vshll.u32 %v2088, 16
      %v2219 = vrot.slane %v2217, 5
      %v2220 = vsel %vm317, %v2215, %v2219
      %v2222 = vshrl.u32 %v2089, 16
      %v2224 = vrot.slane %v2222, 4
      %v2225 = vshll.u32 %v2089, 16
      %v2227 = vrot.slane %v2225, 5
      %v2228 = vor.u32 %v2224, %v2227
      %v2229 = vrot.slane %v2228, 4
      %v2231 = vshll.u32 %v2090, 16
      %v2233 = vrot.slane %v2231, 5
      %v2234 = vsel %vm317, %v2229, %v2233
      %v2235 = vshrl.u32 %v2090, 16
      %v2237 = vrot.slane %v2235, 4
      %v2238 = vor.u32 %v2237, %v2233
      %v2239 = vrot.slane %v2238, 4
      %v2241 = vshll.u32 %v2091, 16
      %v2243 = vrot.slane %v2241, 5
      %v2244 = vsel %vm317, %v2239, %v2243
      %v2246 = vshrl.u32 %v2092, 16
      %v2248 = vrot.slane %v2246, 4
      %v2249 = vshll.u32 %v2092, 16
      %v2251 = vrot.slane %v2249, 5
      %v2252 = vor.u32 %v2248, %v2251
      %v2253 = vrot.slane %v2252, 4
      %v2255 = vshll.u32 %v2093, 16
      %v2257 = vrot.slane %v2255, 5
      %v2258 = vsel %vm317, %v2253, %v2257
      %v2259 = vshrl.u32 %v2093, 16
      %v2261 = vrot.slane %v2259, 4
      %v2262 = vor.u32 %v2261, %v2257
      %v2263 = vrot.slane %v2262, 4
      %v2265 = vshll.u32 %v2094, 16
      %v2267 = vrot.slane %v2265, 5
      %v2268 = vsel %vm317, %v2263, %v2267
      %v2270 = vshrl.u32 %v2095, 16
      %v2272 = vrot.slane %v2270, 4
      %v2273 = vshll.u32 %v2095, 16
      %v2275 = vrot.slane %v2273, 5
      %v2276 = vor.u32 %v2272, %v2275
      %v2277 = vrot.slane %v2276, 4
      %v2279 = vshll.u32 %v2096, 16
      %v2281 = vrot.slane %v2279, 5
      %v2282 = vsel %vm317, %v2277, %v2281
      %v2283 = vshrl.u32 %v2096, 16
      %v2285 = vrot.slane %v2283, 4
      %v2286 = vor.u32 %v2285, %v2281
      %v2287 = vrot.slane %v2286, 4
      %v2289 = vshll.u32 %v2097, 16
      %v2291 = vrot.slane %v2289, 5
      %v2292 = vsel %vm317, %v2287, %v2291
      %v2294 = vshrl.u32 %v2098, 16
      %v2296 = vrot.slane %v2294, 4
      %v2297 = vshll.u32 %v2098, 16
      %v2299 = vrot.slane %v2297, 5
      %v2300 = vor.u32 %v2296, %v2299
      %v2301 = vrot.slane %v2300, 4
      %v2303 = vshll.u32 %v2099, 16
      %v2305 = vrot.slane %v2303, 5
      %v2306 = vsel %vm317, %v2301, %v2305
      %v2307 = vshrl.u32 %v2099, 16
      %v2309 = vrot.slane %v2307, 4
      %v2310 = vor.u32 %v2309, %v2305
      %v2311 = vrot.slane %v2310, 4
      %v2313 = vshll.u32 %v2100, 16
      %v2315 = vrot.slane %v2313, 5
      %v2316 = vsel %vm317, %v2311, %v2315
      %v2318 = vshrl.u32 %v2101, 16
      %v2320 = vrot.slane %v2318, 4
      %v2321 = vshll.u32 %v2101, 16
      %v2323 = vrot.slane %v2321, 5
      %v2324 = vor.u32 %v2320, %v2323
      %v2325 = vrot.slane %v2324, 4
      %v2327 = vshll.u32 %v2102, 16
      %v2329 = vrot.slane %v2327, 5
      %v2330 = vsel %vm317, %v2325, %v2329
      %v2331 = vshrl.u32 %v2102, 16
      %v2333 = vrot.slane %v2331, 4
      %v2334 = vor.u32 %v2333, %v2329
      %v2335 = vrot.slane %v2334, 4
      %v2337 = vshll.u32 %v2103, 16
      %v2339 = vrot.slane %v2337, 5
      %v2340 = vsel %vm317, %v2335, %v2339
      %v2342 = vshrl.u32 %v2104, 16
      %v2344 = vrot.slane %v2342, 4
      %v2345 = vshll.u32 %v2104, 16
      %v2347 = vrot.slane %v2345, 5
      %v2348 = vor.u32 %v2344, %v2347
      %v2349 = vrot.slane %v2348, 4
      %v2351 = vshll.u32 %v2105, 16
      %v2353 = vrot.slane %v2351, 5
      %v2354 = vsel %vm317, %v2349, %v2353
      %v2355 = vshrl.u32 %v2105, 16
      %v2357 = vrot.slane %v2355, 4
      %v2358 = vor.u32 %v2357, %v2353
      %v2359 = vrot.slane %v2358, 4
      %v2361 = vshll.u32 %v2106, 16
      %v2363 = vrot.slane %v2361, 5
      %v2364 = vsel %vm317, %v2359, %v2363
      %v2366 = vshrl.u32 %v2107, 16
      %v2368 = vrot.slane %v2366, 4
      %v2369 = vshll.u32 %v2107, 16
      %v2371 = vrot.slane %v2369, 5
      %v2372 = vor.u32 %v2368, %v2371
      %v2373 = vrot.slane %v2372, 4
      %v2375 = vshll.u32 %v2108, 16
      %v2377 = vrot.slane %v2375, 5
      %v2378 = vsel %vm317, %v2373, %v2377
      %v2379 = vshrl.u32 %v2108, 16
      %v2381 = vrot.slane %v2379, 4
      %v2382 = vor.u32 %v2381, %v2377
      %v2383 = vrot.slane %v2382, 4
      %v2385 = vshll.u32 %v2109, 16
      %v2387 = vrot.slane %v2385, 5
      %v2388 = vsel %vm317, %v2383, %v2387
      %v2390 = vshrl.u32 %v2110, 16
      %v2392 = vrot.slane %v2390, 4
      %v2393 = vshll.u32 %v2110, 16
      %v2395 = vrot.slane %v2393, 5
      %v2396 = vor.u32 %v2392, %v2395
      %v2397 = vrot.slane %v2396, 4
      %v2399 = vshll.u32 %v2111, 16
      %v2401 = vrot.slane %v2399, 5
      %v2402 = vsel %vm317, %v2397, %v2401
      %v2403 = vshrl.u32 %v2111, 16
      %v2405 = vrot.slane %v2403, 4
      %v2406 = vor.u32 %v2405, %v2401
      %v2407 = vrot.slane %v2406, 4
      %v2409 = vshll.u32 %v2112, 16
      %v2411 = vrot.slane %v2409, 5
      %v2412 = vsel %vm317, %v2407, %v2411
      %v2414 = vshrl.u32 %v2113, 16
      %v2416 = vrot.slane %v2414, 4
      %v2417 = vshll.u32 %v2113, 16
      %v2419 = vrot.slane %v2417, 5
      %v2420 = vor.u32 %v2416, %v2419
      %v2421 = vrot.slane %v2420, 4
      %v2423 = vshll.u32 %v2114, 16
      %v2425 = vrot.slane %v2423, 5
      %v2426 = vsel %vm317, %v2421, %v2425
      %v2427 = vshrl.u32 %v2114, 16
      %v2429 = vrot.slane %v2427, 4
      %v2430 = vor.u32 %v2429, %v2425
      %v2431 = vrot.slane %v2430, 4
      %v2433 = vshll.u32 %v2115, 16
      %v2435 = vrot.slane %v2433, 5
      %v2436 = vsel %vm317, %v2431, %v2435
      %v2438 = vshrl.u32 %v2116, 16
      %v2440 = vrot.slane %v2438, 4
      %v2441 = vshll.u32 %v2116, 16
      %v2443 = vrot.slane %v2441, 5
      %v2444 = vor.u32 %v2440, %v2443
      %v2445 = vrot.slane %v2444, 4
      %v2447 = vshll.u32 %v2117, 16
      %v2449 = vrot.slane %v2447, 5
      %v2450 = vsel %vm317, %v2445, %v2449
      %v2451 = vshrl.u32 %v2117, 16
      %v2453 = vrot.slane %v2451, 4
      %v2454 = vor.u32 %v2453, %v2449
      %v2455 = vrot.slane %v2454, 4
      %v2457 = vshll.u32 %v2118, 16
      %v2459 = vrot.slane %v2457, 5
      %v2460 = vsel %vm317, %v2455, %v2459
      %v2462 = vshrl.u32 %v2119, 16
      %v2464 = vrot.slane %v2462, 4
      %v2465 = vshll.u32 %v2119, 16
      %v2467 = vrot.slane %v2465, 5
      %v2468 = vor.u32 %v2464, %v2467
      %v2469 = vrot.slane %v2468, 4
      %v2471 = vshll.u32 %v2120, 16
      %v2473 = vrot.slane %v2471, 5
      %v2474 = vsel %vm317, %v2469, %v2473
      %v2475 = vshrl.u32 %v2120, 16
      %v2477 = vrot.slane %v2475, 4
      %v2478 = vor.u32 %v2477, %v2473
      %v2479 = vrot.slane %v2478, 4
      %v2481 = vshll.u32 %v2121, 16
      %v2483 = vrot.slane %v2481, 5
      %v2484 = vsel %vm317, %v2479, %v2483
      %v2486 = vshrl.u32 %v2122, 16
      %v2488 = vrot.slane %v2486, 4
      %v2489 = vshll.u32 %v2122, 16
      %v2491 = vrot.slane %v2489, 5
      %v2492 = vor.u32 %v2488, %v2491
      %v2493 = vrot.slane %v2492, 4
      %v2495 = vshll.u32 %v2123, 16
      %v2497 = vrot.slane %v2495, 5
      %v2498 = vsel %vm317, %v2493, %v2497
      %v2499 = vshrl.u32 %v2123, 16
      %v2501 = vrot.slane %v2499, 4
      %v2502 = vor.u32 %v2501, %v2497
      %v2503 = vrot.slane %v2502, 4
      %v2505 = vshll.u32 %v2124, 16
      %v2507 = vrot.slane %v2505, 5
      %v2508 = vsel %vm317, %v2503, %v2507
      %s2509 = scalar_lea.vmem %s242, 8
      %v2510 = vld [vmem:[%s2509] sm:$0x3]
      %v2511 = vunpack.c.l.b16 %v2138
      %v2512 = vunpack.c.l.b16 %v2148
      %v2513 = vunpack.c.l.b16 %v2162
      %v2514 = vunpack.c.l.b16 %v2172
      %v2515 = vunpack.c.l.b16 %v2186
      %v2516 = vunpack.c.l.b16 %v2196
      %v2517 = vunpack.c.l.b16 %v2210
      %v2518 = vunpack.c.l.b16 %v2220
      %v2519 = vunpack.c.l.b16 %v2234
      %v2520 = vunpack.c.l.b16 %v2244
      %v2521 = vunpack.c.l.b16 %v2258
      %v2522 = vunpack.c.l.b16 %v2268
      %v2523 = vunpack.c.l.b16 %v2282
      %v2524 = vunpack.c.l.b16 %v2292
      %v2525 = vunpack.c.l.b16 %v2306
      %v2526 = vunpack.c.l.b16 %v2316
      %v2527 = vunpack.c.l.b16 %v2330
      %v2528 = vunpack.c.l.b16 %v2340
      %v2529 = vunpack.c.l.b16 %v2354
      %v2530 = vunpack.c.l.b16 %v2364
      %v2531 = vunpack.c.l.b16 %v2378
      %v2532 = vunpack.c.l.b16 %v2388
      %v2533 = vunpack.c.l.b16 %v2402
      %v2534 = vunpack.c.l.b16 %v2412
      %v2535 = vunpack.c.l.b16 %v2426
      %v2536 = vunpack.c.l.b16 %v2436
      %v2537 = vunpack.c.l.b16 %v2450
      %v2538 = vunpack.c.l.b16 %v2460
      %v2539 = vunpack.c.l.b16 %v2474
      %v2540 = vunpack.c.l.b16 %v2484
      %v2541 = vunpack.c.l.b16 %v2498
      %v2542 = vunpack.c.l.b16 %v2508
      %v2543 = vpack.c.b16 %v2512, %v2511
      %v2544 = vpack.c.b16 %v2514, %v2513
      %v2545 = vpack.c.b16 %v2516, %v2515
      %v2546 = vpack.c.b16 %v2518, %v2517
      %v2547 = vpack.c.b16 %v2520, %v2519
      %v2548 = vpack.c.b16 %v2522, %v2521
      %v2549 = vpack.c.b16 %v2524, %v2523
      %v2550 = vpack.c.b16 %v2526, %v2525
      %v2551 = vpack.c.b16 %v2528, %v2527
      %v2552 = vpack.c.b16 %v2530, %v2529
      %v2553 = vpack.c.b16 %v2532, %v2531
      %v2554 = vpack.c.b16 %v2534, %v2533
      %v2555 = vpack.c.b16 %v2536, %v2535
      %v2556 = vpack.c.b16 %v2538, %v2537
      %v2557 = vpack.c.b16 %v2540, %v2539
      %v2558 = vpack.c.b16 %v2542, %v2541
      %v2560 = vsel %vm752, %v2543, 0
      %v2563 = vsel %vm752, %v2544, 0
      %v2566 = vsel %vm752, %v2545, 0
      %v2569 = vsel %vm752, %v2546, 0
      %v2572 = vsel %vm752, %v2547, 0
      %v2575 = vsel %vm752, %v2548, 0
      %v2578 = vsel %vm752, %v2549, 0
      %v2581 = vsel %vm752, %v2550, 0
      %v2584 = vsel %vm752, %v2551, 0
      %v2587 = vsel %vm752, %v2552, 0
      %v2590 = vsel %vm752, %v2553, 0
      %v2593 = vsel %vm752, %v2554, 0
      %v2596 = vsel %vm752, %v2555, 0
      %v2599 = vsel %vm752, %v2556, 0
      %v2602 = vsel %vm752, %v2557, 0
      %v2605 = vsel %vm752, %v2558, 0
      %v2608 = vsel %vm801, %v2510, 0
      %2610 = vmatprep.subr.bf16.mxu0 0
      %2611 = vmatpush1.bf16.msra.mxu0 %v2608
      %2612 = vmatprep.subr.bf16.mxu0 0
      %2613 = vmatpush1.bf16.msra.mxu0 0
      %2614 = vmatprep.subr.bf16.mxu0 0
      %2615 = vmatpush1.bf16.msra.mxu0 0
      %2616 = vmatprep.subr.bf16.mxu0 0
      %2617 = vmatpush1.bf16.msra.mxu0 0
      %2618 = vmatprep.subr.bf16.mxu0 0
      %2619 = vmatpush1.bf16.msra.mxu0 0
      %2620 = vmatprep.subr.bf16.mxu0 0
      %2621 = vmatpush1.bf16.msra.mxu0 0
      %2622 = vmatprep.subr.bf16.mxu0 0
      %2623 = vmatpush1.bf16.msra.mxu0 0
      %2624 = vmatprep.subr.bf16.mxu0 0
      %2625 = vmatpush1.bf16.msra.mxu0 0
      %2626 = vmatprep.subr.bf16.mxu0 0
      %2627 = vmatpush1.bf16.msra.mxu0 0
      %2628 = vmatprep.subr.bf16.mxu0 0
      %2629 = vmatpush1.bf16.msra.mxu0 0
      %2630 = vmatprep.subr.bf16.mxu0 0
      %2631 = vmatpush1.bf16.msra.mxu0 0
      %2632 = vmatprep.subr.bf16.mxu0 0
      %2633 = vmatpush1.bf16.msra.mxu0 0
      %2634 = vmatprep.subr.bf16.mxu0 0
      %2635 = vmatpush1.bf16.msra.mxu0 0
      %2636 = vmatprep.subr.bf16.mxu0 0
      %2637 = vmatpush1.bf16.msra.mxu0 0
      %2638 = vmatprep.subr.bf16.mxu0 0
      %2639 = vmatpush1.bf16.msra.mxu0 0
      %2640 = vmatprep.subr.bf16.mxu0 0
      %2641 = vmatpush1.bf16.msra.mxu0 0
      %2642 = vmatprep.mubr.bf16.mxu0 0
      %2643 = vmatmul.mubr.bf16.gmra.mrb[0].mxu0 %v2560
      %v2644 = vpop.f32.mrb[0].mxu0
      %v2645 = vadd.f32 0.0, %v2644
      %v2646 = vpop.f32.mrb[0].mxu0
      %v2647 = vpop.f32.mrb[0].mxu0
      %v2648 = vadd.f32 0.0, %v2647
      %v2649 = vpop.f32.mrb[0].mxu0
      %2650 = vmatprep.mubr.bf16.mxu0 0
      %2651 = vmatmul.mubr.bf16.gmra.mrb[0].mxu0 %v2563
      %v2652 = vpop.f32.mrb[0].mxu0
      %v2653 = vadd.f32 0.0, %v2652
      %v2654 = vpop.f32.mrb[0].mxu0
      %v2655 = vpop.f32.mrb[0].mxu0
      %v2656 = vadd.f32 0.0, %v2655
      %v2657 = vpop.f32.mrb[0].mxu0
      %2658 = vmatprep.mubr.bf16.mxu0 0
      %2659 = vmatmul.mubr.bf16.gmra.mrb[0].mxu0 %v2566
      %v2660 = vpop.f32.mrb[0].mxu0
      %v2661 = vadd.f32 0.0, %v2660
      %v2662 = vpop.f32.mrb[0].mxu0
      %v2663 = vpop.f32.mrb[0].mxu0
      %v2664 = vadd.f32 0.0, %v2663
      %v2665 = vpop.f32.mrb[0].mxu0
      %2666 = vmatprep.mubr.bf16.mxu0 0
      %2667 = vmatmul.mubr.bf16.gmra.mrb[0].mxu0 %v2569
      %v2668 = vpop.f32.mrb[0].mxu0
      %v2669 = vadd.f32 0.0, %v2668
      %v2670 = vpop.f32.mrb[0].mxu0
      %v2671 = vpop.f32.mrb[0].mxu0
      %v2672 = vadd.f32 0.0, %v2671
      %v2673 = vpop.f32.mrb[0].mxu0
      %2674 = vmatprep.mubr.bf16.mxu0 0
      %2675 = vmatmul.mubr.bf16.gmra.mrb[0].mxu0 %v2572
      %v2676 = vpop.f32.mrb[0].mxu0
      %v2677 = vadd.f32 0.0, %v2676
      %v2678 = vpop.f32.mrb[0].mxu0
      %v2679 = vpop.f32.mrb[0].mxu0
      %v2680 = vadd.f32 0.0, %v2679
      %v2681 = vpop.f32.mrb[0].mxu0
      %2682 = vmatprep.mubr.bf16.mxu0 0
      %2683 = vmatmul.mubr.bf16.gmra.mrb[0].mxu0 %v2575
      %v2684 = vpop.f32.mrb[0].mxu0
      %v2685 = vadd.f32 0.0, %v2684
      %v2686 = vpop.f32.mrb[0].mxu0
      %v2687 = vpop.f32.mrb[0].mxu0
      %v2688 = vadd.f32 0.0, %v2687
      %v2689 = vpop.f32.mrb[0].mxu0
      %2690 = vmatprep.mubr.bf16.mxu0 0
      %2691 = vmatmul.mubr.bf16.gmra.mrb[0].mxu0 %v2578
      %v2692 = vpop.f32.mrb[0].mxu0
      %v2693 = vadd.f32 0.0, %v2692
      %v2694 = vpop.f32.mrb[0].mxu0
      %v2695 = vpop.f32.mrb[0].mxu0
      %v2696 = vadd.f32 0.0, %v2695
      %v2697 = vpop.f32.mrb[0].mxu0
      %2698 = vmatprep.mubr.bf16.mxu0 0
      %2699 = vmatmul.mubr.bf16.gmra.mrb[0].mxu0 %v2581
      %v2700 = vpop.f32.mrb[0].mxu0
      %v2701 = vadd.f32 0.0, %v2700
      %v2702 = vpop.f32.mrb[0].mxu0
      %v2703 = vpop.f32.mrb[0].mxu0
      %v2704 = vadd.f32 0.0, %v2703
      %v2705 = vpop.f32.mrb[0].mxu0
      %2706 = vmatprep.mubr.bf16.mxu0 0
      %2707 = vmatmul.mubr.bf16.gmra.mrb[0].mxu0 %v2584
      %v2708 = vpop.f32.mrb[0].mxu0
      %v2709 = vadd.f32 0.0, %v2708
      %v2710 = vpop.f32.mrb[0].mxu0
      %v2711 = vpop.f32.mrb[0].mxu0
      %v2712 = vadd.f32 0.0, %v2711
      %v2713 = vpop.f32.mrb[0].mxu0
      %2714 = vmatprep.mubr.bf16.mxu0 0
      %2715 = vmatmul.mubr.bf16.gmra.mrb[0].mxu0 %v2587
      %v2716 = vpop.f32.mrb[0].mxu0
      %v2717 = vadd.f32 0.0, %v2716
      %v2718 = vpop.f32.mrb[0].mxu0
      %v2719 = vpop.f32.mrb[0].mxu0
      %v2720 = vadd.f32 0.0, %v2719
      %v2721 = vpop.f32.mrb[0].mxu0
      %2722 = vmatprep.mubr.bf16.mxu0 0
      %2723 = vmatmul.mubr.bf16.gmra.mrb[0].mxu0 %v2590
      %v2724 = vpop.f32.mrb[0].mxu0
      %v2725 = vadd.f32 0.0, %v2724
      %v2726 = vpop.f32.mrb[0].mxu0
      %v2727 = vpop.f32.mrb[0].mxu0
      %v2728 = vadd.f32 0.0, %v2727
      %v2729 = vpop.f32.mrb[0].mxu0
      %2730 = vmatprep.mubr.bf16.mxu0 0
      %2731 = vmatmul.mubr.bf16.gmra.mrb[0].mxu0 %v2593
      %v2732 = vpop.f32.mrb[0].mxu0
      %v2733 = vadd.f32 0.0, %v2732
      %v2734 = vpop.f32.mrb[0].mxu0
      %v2735 = vpop.f32.mrb[0].mxu0
      %v2736 = vadd.f32 0.0, %v2735
      %v2737 = vpop.f32.mrb[0].mxu0
      %2738 = vmatprep.mubr.bf16.mxu0 0
      %2739 = vmatmul.mubr.bf16.gmra.mrb[0].mxu0 %v2596
      %v2740 = vpop.f32.mrb[0].mxu0
      %v2741 = vadd.f32 0.0, %v2740
      %v2742 = vpop.f32.mrb[0].mxu0
      %v2743 = vpop.f32.mrb[0].mxu0
      %v2744 = vadd.f32 0.0, %v2743
      %v2745 = vpop.f32.mrb[0].mxu0
      %2746 = vmatprep.mubr.bf16.mxu0 0
      %2747 = vmatmul.mubr.bf16.gmra.mrb[0].mxu0 %v2599
      %v2748 = vpop.f32.mrb[0].mxu0
      %v2749 = vadd.f32 0.0, %v2748
      %v2750 = vpop.f32.mrb[0].mxu0
      %v2751 = vpop.f32.mrb[0].mxu0
      %v2752 = vadd.f32 0.0, %v2751
      %v2753 = vpop.f32.mrb[0].mxu0
      %2754 = vmatprep.mubr.bf16.mxu0 0
      %2755 = vmatmul.mubr.bf16.gmra.mrb[0].mxu0 %v2602
      %v2756 = vpop.f32.mrb[0].mxu0
      %v2757 = vadd.f32 0.0, %v2756
      %v2758 = vpop.f32.mrb[0].mxu0
      %v2759 = vpop.f32.mrb[0].mxu0
      %v2760 = vadd.f32 0.0, %v2759
      %v2761 = vpop.f32.mrb[0].mxu0
      %2762 = vmatprep.mubr.bf16.mxu0 0
      %2763 = vmatmul.mubr.bf16.gmra.mrb[0].mxu0 %v2605
      %v2764 = vpop.f32.mrb[0].mxu0
      %v2765 = vadd.f32 0.0, %v2764
      %v2766 = vpop.f32.mrb[0].mxu0
      %v2767 = vpop.f32.mrb[0].mxu0
      %v2768 = vadd.f32 0.0, %v2767
      %v2769 = vpop.f32.mrb[0].mxu0
      %2770 = vdwg.mxu0
      %v2771 = vadd.f32 %v2045, %v2645
      %v2772 = vadd.f32 %v2046, %v2648
      %v2773 = vadd.f32 %v2047, %v2653
      %v2774 = vadd.f32 %v2048, %v2656
      %v2775 = vadd.f32 %v2049, %v2661
      %v2776 = vadd.f32 %v2050, %v2664
      %v2777 = vadd.f32 %v2051, %v2669
      %v2778 = vadd.f32 %v2052, %v2672
      %v2779 = vadd.f32 %v2053, %v2677
      %v2780 = vadd.f32 %v2054, %v2680
      %v2781 = vadd.f32 %v2055, %v2685
      %v2782 = vadd.f32 %v2056, %v2688
      %v2783 = vadd.f32 %v2057, %v2693
      %v2784 = vadd.f32 %v2058, %v2696
      %v2785 = vadd.f32 %v2059, %v2701
      %v2786 = vadd.f32 %v2060, %v2704
      %v2787 = vadd.f32 %v2061, %v2709
      %v2788 = vadd.f32 %v2062, %v2712
      %v2789 = vadd.f32 %v2063, %v2717
      %v2790 = vadd.f32 %v2064, %v2720
      %v2791 = vadd.f32 %v2065, %v2725
      %v2792 = vadd.f32 %v2066, %v2728
      %v2793 = vadd.f32 %v2067, %v2733
      %v2794 = vadd.f32 %v2068, %v2736
      %v2795 = vadd.f32 %v2069, %v2741
      %v2796 = vadd.f32 %v2070, %v2744
      %v2797 = vadd.f32 %v2071, %v2749
      %v2798 = vadd.f32 %v2072, %v2752
      %v2799 = vadd.f32 %v2073, %v2757
      %v2800 = vadd.f32 %v2074, %v2760
      %v2801 = vadd.f32 %v2075, %v2765
      %v2802 = vadd.f32 %v2076, %v2768
      %v2803 = vld [vmem:[%s1718] sm:$0xe]
      %v2804 = vld [vmem:[%s1718 + $0xc] sm:$0xe]
      %v2805 = vld [vmem:[%s1718 + $0x18] sm:$0xe]
      %v2806 = vld [vmem:[%s1718 + $0x24] sm:$0xe]
      %v2807 = vld [vmem:[%s1718 + $0x30] sm:$0xe]
      %v2808 = vld [vmem:[%s1718 + $0x3c] sm:$0xe]
      %v2809 = vld [vmem:[%s1718 + $0x48] sm:$0xe]
      %v2810 = vld [vmem:[%s1718 + $0x54] sm:$0xe]
      %v2811 = vld [vmem:[%s1718 + $0x60] sm:$0xe]
      %v2812 = vld [vmem:[%s1718 + $0x6c] sm:$0xe]
      %v2813 = vld [vmem:[%s1718 + $0x78] sm:$0xe]
      %v2814 = vld [vmem:[%s1718 + $0x84] sm:$0xe]
      %v2815 = vld [vmem:[%s1718 + $0x90] sm:$0xe]
      %v2816 = vld [vmem:[%s1718 + $0x9c] sm:$0xe]
      %v2817 = vld [vmem:[%s1718 + $0xa8] sm:$0xe]
      %v2818 = vld [vmem:[%s1718 + $0xb4] sm:$0xe]
      %v2867 = vrot.slane %v2803, 5
      %v2868 = vrot.slane %v2867, 4
      %v2869 = vrot.slane %v2078, 5
      %v2870 = vsel %vm1308, %v2868, %v2869
      %v2871 = vrot.slane %v2869, 4
      %v2872 = vrot.slane %v2079, 5
      %v2873 = vsel %vm1308, %v2871, %v2872
      %v2874 = vrot.slane %v2804, 5
      %v2875 = vrot.slane %v2874, 4
      %v2876 = vrot.slane %v2081, 5
      %v2877 = vsel %vm1308, %v2875, %v2876
      %v2878 = vrot.slane %v2876, 4
      %v2879 = vrot.slane %v2082, 5
      %v2880 = vsel %vm1308, %v2878, %v2879
      %v2881 = vrot.slane %v2805, 5
      %v2882 = vrot.slane %v2881, 4
      %v2883 = vrot.slane %v2084, 5
      %v2884 = vsel %vm1308, %v2882, %v2883
      %v2885 = vrot.slane %v2883, 4
      %v2886 = vrot.slane %v2085, 5
      %v2887 = vsel %vm1308, %v2885, %v2886
      %v2888 = vrot.slane %v2806, 5
      %v2889 = vrot.slane %v2888, 4
      %v2890 = vrot.slane %v2087, 5
      %v2891 = vsel %vm1308, %v2889, %v2890
      %v2892 = vrot.slane %v2890, 4
      %v2893 = vrot.slane %v2088, 5
      %v2894 = vsel %vm1308, %v2892, %v2893
      %v2895 = vrot.slane %v2807, 5
      %v2896 = vrot.slane %v2895, 4
      %v2897 = vrot.slane %v2090, 5
      %v2898 = vsel %vm1308, %v2896, %v2897
      %v2899 = vrot.slane %v2897, 4
      %v2900 = vrot.slane %v2091, 5
      %v2901 = vsel %vm1308, %v2899, %v2900
      %v2902 = vrot.slane %v2808, 5
      %v2903 = vrot.slane %v2902, 4
      %v2904 = vrot.slane %v2093, 5
      %v2905 = vsel %vm1308, %v2903, %v2904
      %v2906 = vrot.slane %v2904, 4
      %v2907 = vrot.slane %v2094, 5
      %v2908 = vsel %vm1308, %v2906, %v2907
      %v2909 = vrot.slane %v2809, 5
      %v2910 = vrot.slane %v2909, 4
      %v2911 = vrot.slane %v2096, 5
      %v2912 = vsel %vm1308, %v2910, %v2911
      %v2913 = vrot.slane %v2911, 4
      %v2914 = vrot.slane %v2097, 5
      %v2915 = vsel %vm1308, %v2913, %v2914
      %v2916 = vrot.slane %v2810, 5
      %v2917 = vrot.slane %v2916, 4
      %v2918 = vrot.slane %v2099, 5
      %v2919 = vsel %vm1308, %v2917, %v2918
      %v2920 = vrot.slane %v2918, 4
      %v2921 = vrot.slane %v2100, 5
      %v2922 = vsel %vm1308, %v2920, %v2921
      %v2923 = vrot.slane %v2811, 5
      %v2924 = vrot.slane %v2923, 4
      %v2925 = vrot.slane %v2102, 5
      %v2926 = vsel %vm1308, %v2924, %v2925
      %v2927 = vrot.slane %v2925, 4
      %v2928 = vrot.slane %v2103, 5
      %v2929 = vsel %vm1308, %v2927, %v2928
      %v2930 = vrot.slane %v2812, 5
      %v2931 = vrot.slane %v2930, 4
      %v2932 = vrot.slane %v2105, 5
      %v2933 = vsel %vm1308, %v2931, %v2932
      %v2934 = vrot.slane %v2932, 4
      %v2935 = vrot.slane %v2106, 5
      %v2936 = vsel %vm1308, %v2934, %v2935
      %v2937 = vrot.slane %v2813, 5
      %v2938 = vrot.slane %v2937, 4
      %v2939 = vrot.slane %v2108, 5
      %v2940 = vsel %vm1308, %v2938, %v2939
      %v2941 = vrot.slane %v2939, 4
      %v2942 = vrot.slane %v2109, 5
      %v2943 = vsel %vm1308, %v2941, %v2942
      %v2944 = vrot.slane %v2814, 5
      %v2945 = vrot.slane %v2944, 4
      %v2946 = vrot.slane %v2111, 5
      %v2947 = vsel %vm1308, %v2945, %v2946
      %v2948 = vrot.slane %v2946, 4
      %v2949 = vrot.slane %v2112, 5
      %v2950 = vsel %vm1308, %v2948, %v2949
      %v2951 = vrot.slane %v2815, 5
      %v2952 = vrot.slane %v2951, 4
      %v2953 = vrot.slane %v2114, 5
      %v2954 = vsel %vm1308, %v2952, %v2953
      %v2955 = vrot.slane %v2953, 4
      %v2956 = vrot.slane %v2115, 5
      %v2957 = vsel %vm1308, %v2955, %v2956
      %v2958 = vrot.slane %v2816, 5
      %v2959 = vrot.slane %v2958, 4
      %v2960 = vrot.slane %v2117, 5
      %v2961 = vsel %vm1308, %v2959, %v2960
      %v2962 = vrot.slane %v2960, 4
      %v2963 = vrot.slane %v2118, 5
      %v2964 = vsel %vm1308, %v2962, %v2963
      %v2965 = vrot.slane %v2817, 5
      %v2966 = vrot.slane %v2965, 4
      %v2967 = vrot.slane %v2120, 5
      %v2968 = vsel %vm1308, %v2966, %v2967
      %v2969 = vrot.slane %v2967, 4
      %v2970 = vrot.slane %v2121, 5
      %v2971 = vsel %vm1308, %v2969, %v2970
      %v2972 = vrot.slane %v2818, 5
      %v2973 = vrot.slane %v2972, 4
      %v2974 = vrot.slane %v2123, 5
      %v2975 = vsel %vm1308, %v2973, %v2974
      %v2976 = vrot.slane %v2974, 4
      %v2977 = vrot.slane %v2124, 5
      %v2978 = vsel %vm1308, %v2976, %v2977
      %s2979 = scalar_lea.vmem %s242, 10
      %v2980 = vld [vmem:[%s2979] sm:$0x3]
      %v2981 = vunpack.c.l.b16 %v2870
      %v2982 = vunpack.c.l.b16 %v2873
      %v2983 = vunpack.c.l.b16 %v2877
      %v2984 = vunpack.c.l.b16 %v2880
      %v2985 = vunpack.c.l.b16 %v2884
      %v2986 = vunpack.c.l.b16 %v2887
      %v2987 = vunpack.c.l.b16 %v2891
      %v2988 = vunpack.c.l.b16 %v2894
      %v2989 = vunpack.c.l.b16 %v2898
      %v2990 = vunpack.c.l.b16 %v2901
      %v2991 = vunpack.c.l.b16 %v2905
      %v2992 = vunpack.c.l.b16 %v2908
      %v2993 = vunpack.c.l.b16 %v2912
      %v2994 = vunpack.c.l.b16 %v2915
      %v2995 = vunpack.c.l.b16 %v2919
      %v2996 = vunpack.c.l.b16 %v2922
      %v2997 = vunpack.c.l.b16 %v2926
      %v2998 = vunpack.c.l.b16 %v2929
      %v2999 = vunpack.c.l.b16 %v2933
      %v3000 = vunpack.c.l.b16 %v2936
      %v3001 = vunpack.c.l.b16 %v2940
      %v3002 = vunpack.c.l.b16 %v2943
      %v3003 = vunpack.c.l.b16 %v2947
      %v3004 = vunpack.c.l.b16 %v2950
      %v3005 = vunpack.c.l.b16 %v2954
      %v3006 = vunpack.c.l.b16 %v2957
      %v3007 = vunpack.c.l.b16 %v2961
      %v3008 = vunpack.c.l.b16 %v2964
      %v3009 = vunpack.c.l.b16 %v2968
      %v3010 = vunpack.c.l.b16 %v2971
      %v3011 = vunpack.c.l.b16 %v2975
      %v3012 = vunpack.c.l.b16 %v2978
      %v3013 = vpack.c.b16 %v2982, %v2981
      %v3014 = vpack.c.b16 %v2984, %v2983
      %v3015 = vpack.c.b16 %v2986, %v2985
      %v3016 = vpack.c.b16 %v2988, %v2987
      %v3017 = vpack.c.b16 %v2990, %v2989
      %v3018 = vpack.c.b16 %v2992, %v2991
      %v3019 = vpack.c.b16 %v2994, %v2993
      %v3020 = vpack.c.b16 %v2996, %v2995
      %v3021 = vpack.c.b16 %v2998, %v2997
      %v3022 = vpack.c.b16 %v3000, %v2999
      %v3023 = vpack.c.b16 %v3002, %v3001
      %v3024 = vpack.c.b16 %v3004, %v3003
      %v3025 = vpack.c.b16 %v3006, %v3005
      %v3026 = vpack.c.b16 %v3008, %v3007
      %v3027 = vpack.c.b16 %v3010, %v3009
      %v3028 = vpack.c.b16 %v3012, %v3011
      %v3030 = vsel %vm752, %v3013, 0
      %v3033 = vsel %vm752, %v3014, 0
      %v3036 = vsel %vm752, %v3015, 0
      %v3039 = vsel %vm752, %v3016, 0
      %v3042 = vsel %vm752, %v3017, 0
      %v3045 = vsel %vm752, %v3018, 0
      %v3048 = vsel %vm752, %v3019, 0
      %v3051 = vsel %vm752, %v3020, 0
      %v3054 = vsel %vm752, %v3021, 0
      %v3057 = vsel %vm752, %v3022, 0
      %v3060 = vsel %vm752, %v3023, 0
      %v3063 = vsel %vm752, %v3024, 0
      %v3066 = vsel %vm752, %v3025, 0
      %v3069 = vsel %vm752, %v3026, 0
      %v3072 = vsel %vm752, %v3027, 0
      %v3075 = vsel %vm752, %v3028, 0
      %v3078 = vsel %vm801, %v2980, 0
      %3080 = vmatprep.subr.bf16.mxu0 0
      %3081 = vmatpush1.bf16.msra.mxu0 %v3078
      %3082 = vmatprep.subr.bf16.mxu0 0
      %3083 = vmatpush1.bf16.msra.mxu0 0
      %3084 = vmatprep.subr.bf16.mxu0 0
      %3085 = vmatpush1.bf16.msra.mxu0 0
      %3086 = vmatprep.subr.bf16.mxu0 0
      %3087 = vmatpush1.bf16.msra.mxu0 0
      %3088 = vmatprep.subr.bf16.mxu0 0
      %3089 = vmatpush1.bf16.msra.mxu0 0
      %3090 = vmatprep.subr.bf16.mxu0 0
      %3091 = vmatpush1.bf16.msra.mxu0 0
      %3092 = vmatprep.subr.bf16.mxu0 0
      %3093 = vmatpush1.bf16.msra.mxu0 0
      %3094 = vmatprep.subr.bf16.mxu0 0
      %3095 = vmatpush1.bf16.msra.mxu0 0
      %3096 = vmatprep.subr.bf16.mxu0 0
      %3097 = vmatpush1.bf16.msra.mxu0 0
      %3098 = vmatprep.subr.bf16.mxu0 0
      %3099 = vmatpush1.bf16.msra.mxu0 0
      %3100 = vmatprep.subr.bf16.mxu0 0
      %3101 = vmatpush1.bf16.msra.mxu0 0
      %3102 = vmatprep.subr.bf16.mxu0 0
      %3103 = vmatpush1.bf16.msra.mxu0 0
      %3104 = vmatprep.subr.bf16.mxu0 0
      %3105 = vmatpush1.bf16.msra.mxu0 0
      %3106 = vmatprep.subr.bf16.mxu0 0
      %3107 = vmatpush1.bf16.msra.mxu0 0
      %3108 = vmatprep.subr.bf16.mxu0 0
      %3109 = vmatpush1.bf16.msra.mxu0 0
      %3110 = vmatprep.subr.bf16.mxu0 0
      %3111 = vmatpush1.bf16.msra.mxu0 0
      %3112 = vmatprep.mubr.bf16.mxu0 0
      %3113 = vmatmul.mubr.bf16.gmra.mrb[0].mxu0 %v3030
      %v3114 = vpop.f32.mrb[0].mxu0
      %v3115 = vadd.f32 0.0, %v3114
      %v3116 = vpop.f32.mrb[0].mxu0
      %v3117 = vpop.f32.mrb[0].mxu0
      %v3118 = vadd.f32 0.0, %v3117
      %v3119 = vpop.f32.mrb[0].mxu0
      %3120 = vmatprep.mubr.bf16.mxu0 0
      %3121 = vmatmul.mubr.bf16.gmra.mrb[0].mxu0 %v3033
      %v3122 = vpop.f32.mrb[0].mxu0
      %v3123 = vadd.f32 0.0, %v3122
      %v3124 = vpop.f32.mrb[0].mxu0
      %v3125 = vpop.f32.mrb[0].mxu0
      %v3126 = vadd.f32 0.0, %v3125
      %v3127 = vpop.f32.mrb[0].mxu0
      %3128 = vmatprep.mubr.bf16.mxu0 0
      %3129 = vmatmul.mubr.bf16.gmra.mrb[0].mxu0 %v3036
      %v3130 = vpop.f32.mrb[0].mxu0
      %v3131 = vadd.f32 0.0, %v3130
      %v3132 = vpop.f32.mrb[0].mxu0
      %v3133 = vpop.f32.mrb[0].mxu0
      %v3134 = vadd.f32 0.0, %v3133
      %v3135 = vpop.f32.mrb[0].mxu0
      %3136 = vmatprep.mubr.bf16.mxu0 0
      %3137 = vmatmul.mubr.bf16.gmra.mrb[0].mxu0 %v3039
      %v3138 = vpop.f32.mrb[0].mxu0
      %v3139 = vadd.f32 0.0, %v3138
      %v3140 = vpop.f32.mrb[0].mxu0
      %v3141 = vpop.f32.mrb[0].mxu0
      %v3142 = vadd.f32 0.0, %v3141
      %v3143 = vpop.f32.mrb[0].mxu0
      %3144 = vmatprep.mubr.bf16.mxu0 0
      %3145 = vmatmul.mubr.bf16.gmra.mrb[0].mxu0 %v3042
      %v3146 = vpop.f32.mrb[0].mxu0
      %v3147 = vadd.f32 0.0, %v3146
      %v3148 = vpop.f32.mrb[0].mxu0
      %v3149 = vpop.f32.mrb[0].mxu0
      %v3150 = vadd.f32 0.0, %v3149
      %v3151 = vpop.f32.mrb[0].mxu0
      %3152 = vmatprep.mubr.bf16.mxu0 0
      %3153 = vmatmul.mubr.bf16.gmra.mrb[0].mxu0 %v3045
      %v3154 = vpop.f32.mrb[0].mxu0
      %v3155 = vadd.f32 0.0, %v3154
      %v3156 = vpop.f32.mrb[0].mxu0
      %v3157 = vpop.f32.mrb[0].mxu0
      %v3158 = vadd.f32 0.0, %v3157
      %v3159 = vpop.f32.mrb[0].mxu0
      %3160 = vmatprep.mubr.bf16.mxu0 0
      %3161 = vmatmul.mubr.bf16.gmra.mrb[0].mxu0 %v3048
      %v3162 = vpop.f32.mrb[0].mxu0
      %v3163 = vadd.f32 0.0, %v3162
      %v3164 = vpop.f32.mrb[0].mxu0
      %v3165 = vpop.f32.mrb[0].mxu0
      %v3166 = vadd.f32 0.0, %v3165
      %v3167 = vpop.f32.mrb[0].mxu0
      %3168 = vmatprep.mubr.bf16.mxu0 0
      %3169 = vmatmul.mubr.bf16.gmra.mrb[0].mxu0 %v3051
      %v3170 = vpop.f32.mrb[0].mxu0
      %v3171 = vadd.f32 0.0, %v3170
      %v3172 = vpop.f32.mrb[0].mxu0
      %v3173 = vpop.f32.mrb[0].mxu0
      %v3174 = vadd.f32 0.0, %v3173
      %v3175 = vpop.f32.mrb[0].mxu0
      %3176 = vmatprep.mubr.bf16.mxu0 0
      %3177 = vmatmul.mubr.bf16.gmra.mrb[0].mxu0 %v3054
      %v3178 = vpop.f32.mrb[0].mxu0
      %v3179 = vadd.f32 0.0, %v3178
      %v3180 = vpop.f32.mrb[0].mxu0
      %v3181 = vpop.f32.mrb[0].mxu0
      %v3182 = vadd.f32 0.0, %v3181
      %v3183 = vpop.f32.mrb[0].mxu0
      %3184 = vmatprep.mubr.bf16.mxu0 0
      %3185 = vmatmul.mubr.bf16.gmra.mrb[0].mxu0 %v3057
      %v3186 = vpop.f32.mrb[0].mxu0
      %v3187 = vadd.f32 0.0, %v3186
      %v3188 = vpop.f32.mrb[0].mxu0
      %v3189 = vpop.f32.mrb[0].mxu0
      %v3190 = vadd.f32 0.0, %v3189
      %v3191 = vpop.f32.mrb[0].mxu0
      %3192 = vmatprep.mubr.bf16.mxu0 0
      %3193 = vmatmul.mubr.bf16.gmra.mrb[0].mxu0 %v3060
      %v3194 = vpop.f32.mrb[0].mxu0
      %v3195 = vadd.f32 0.0, %v3194
      %v3196 = vpop.f32.mrb[0].mxu0
      %v3197 = vpop.f32.mrb[0].mxu0
      %v3198 = vadd.f32 0.0, %v3197
      %v3199 = vpop.f32.mrb[0].mxu0
      %3200 = vmatprep.mubr.bf16.mxu0 0
      %3201 = vmatmul.mubr.bf16.gmra.mrb[0].mxu0 %v3063
      %v3202 = vpop.f32.mrb[0].mxu0
      %v3203 = vadd.f32 0.0, %v3202
      %v3204 = vpop.f32.mrb[0].mxu0
      %v3205 = vpop.f32.mrb[0].mxu0
      %v3206 = vadd.f32 0.0, %v3205
      %v3207 = vpop.f32.mrb[0].mxu0
      %3208 = vmatprep.mubr.bf16.mxu0 0
      %3209 = vmatmul.mubr.bf16.gmra.mrb[0].mxu0 %v3066
      %v3210 = vpop.f32.mrb[0].mxu0
      %v3211 = vadd.f32 0.0, %v3210
      %v3212 = vpop.f32.mrb[0].mxu0
      %v3213 = vpop.f32.mrb[0].mxu0
      %v3214 = vadd.f32 0.0, %v3213
      %v3215 = vpop.f32.mrb[0].mxu0
      %3216 = vmatprep.mubr.bf16.mxu0 0
      %3217 = vmatmul.mubr.bf16.gmra.mrb[0].mxu0 %v3069
      %v3218 = vpop.f32.mrb[0].mxu0
      %v3219 = vadd.f32 0.0, %v3218
      %v3220 = vpop.f32.mrb[0].mxu0
      %v3221 = vpop.f32.mrb[0].mxu0
      %v3222 = vadd.f32 0.0, %v3221
      %v3223 = vpop.f32.mrb[0].mxu0
      %3224 = vmatprep.mubr.bf16.mxu0 0
      %3225 = vmatmul.mubr.bf16.gmra.mrb[0].mxu0 %v3072
      %v3226 = vpop.f32.mrb[0].mxu0
      %v3227 = vadd.f32 0.0, %v3226
      %v3228 = vpop.f32.mrb[0].mxu0
      %v3229 = vpop.f32.mrb[0].mxu0
      %v3230 = vadd.f32 0.0, %v3229
      %v3231 = vpop.f32.mrb[0].mxu0
      %3232 = vmatprep.mubr.bf16.mxu0 0
      %3233 = vmatmul.mubr.bf16.gmra.mrb[0].mxu0 %v3075
      %v3234 = vpop.f32.mrb[0].mxu0
      %v3235 = vadd.f32 0.0, %v3234
      %v3236 = vpop.f32.mrb[0].mxu0
      %v3237 = vpop.f32.mrb[0].mxu0
      %v3238 = vadd.f32 0.0, %v3237
      %v3239 = vpop.f32.mrb[0].mxu0
      %3240 = vdwg.mxu0
      %v3241 = vadd.f32 %v2771, %v3115
      %v3242 = vadd.f32 %v2772, %v3118
      %v3243 = vadd.f32 %v2773, %v3123
      %v3244 = vadd.f32 %v2774, %v3126
      %v3245 = vadd.f32 %v2775, %v3131
      %v3246 = vadd.f32 %v2776, %v3134
      %v3247 = vadd.f32 %v2777, %v3139
      %v3248 = vadd.f32 %v2778, %v3142
      %v3249 = vadd.f32 %v2779, %v3147
      %v3250 = vadd.f32 %v2780, %v3150
      %v3251 = vadd.f32 %v2781, %v3155
      %v3252 = vadd.f32 %v2782, %v3158
      %v3253 = vadd.f32 %v2783, %v3163
      %v3254 = vadd.f32 %v2784, %v3166
      %v3255 = vadd.f32 %v2785, %v3171
      %v3256 = vadd.f32 %v2786, %v3174
      %v3257 = vadd.f32 %v2787, %v3179
      %v3258 = vadd.f32 %v2788, %v3182
      %v3259 = vadd.f32 %v2789, %v3187
      %v3260 = vadd.f32 %v2790, %v3190
      %v3261 = vadd.f32 %v2791, %v3195
      %v3262 = vadd.f32 %v2792, %v3198
      %v3263 = vadd.f32 %v2793, %v3203
      %v3264 = vadd.f32 %v2794, %v3206
      %v3265 = vadd.f32 %v2795, %v3211
      %v3266 = vadd.f32 %v2796, %v3214
      %v3267 = vadd.f32 %v2797, %v3219
      %v3268 = vadd.f32 %v2798, %v3222
      %v3269 = vadd.f32 %v2799, %v3227
      %v3270 = vadd.f32 %v2800, %v3230
      %v3271 = vadd.f32 %v2801, %v3235
      %v3272 = vadd.f32 %v2802, %v3238
      %s3273 = sadd.s32 %s262, 2
      %s3274 = smul.u32 %s3273, 3
      %s3275 = smul.addr %s3274, 4
      %s3276 = scalar_lea.vmem %s237, %s3275
      %v3277 = vld [vmem:[%s3276] sm:$0xf]
      %v3278 = vld [vmem:[%s3276 + $0x4] sm:$0xf]
      %v3279 = vld [vmem:[%s3276 + $0xc] sm:$0xf]
      %v3280 = vld [vmem:[%s3276 + $0x10] sm:$0xf]
      %v3281 = vld [vmem:[%s3276 + $0x18] sm:$0xf]
      %v3282 = vld [vmem:[%s3276 + $0x1c] sm:$0xf]
      %v3283 = vld [vmem:[%s3276 + $0x24] sm:$0xf]
      %v3284 = vld [vmem:[%s3276 + $0x28] sm:$0xf]
      %v3285 = vld [vmem:[%s3276 + $0x30] sm:$0xf]
      %v3286 = vld [vmem:[%s3276 + $0x34] sm:$0xf]
      %v3287 = vld [vmem:[%s3276 + $0x3c] sm:$0xf]
      %v3288 = vld [vmem:[%s3276 + $0x40] sm:$0xf]
      %v3289 = vld [vmem:[%s3276 + $0x48] sm:$0xf]
      %v3290 = vld [vmem:[%s3276 + $0x4c] sm:$0xf]
      %v3291 = vld [vmem:[%s3276 + $0x54] sm:$0xf]
      %v3292 = vld [vmem:[%s3276 + $0x58] sm:$0xf]
      %v3293 = vld [vmem:[%s3276 + $0x60] sm:$0xf]
      %v3294 = vld [vmem:[%s3276 + $0x64] sm:$0xf]
      %v3295 = vld [vmem:[%s3276 + $0x6c] sm:$0xf]
      %v3296 = vld [vmem:[%s3276 + $0x70] sm:$0xf]
      %v3297 = vld [vmem:[%s3276 + $0x78] sm:$0xf]
      %v3298 = vld [vmem:[%s3276 + $0x7c] sm:$0xf]
      %v3299 = vld [vmem:[%s3276 + $0x84] sm:$0xf]
      %v3300 = vld [vmem:[%s3276 + $0x88] sm:$0xf]
      %v3301 = vld [vmem:[%s3276 + $0x90] sm:$0xf]
      %v3302 = vld [vmem:[%s3276 + $0x94] sm:$0xf]
      %v3303 = vld [vmem:[%s3276 + $0x9c] sm:$0xf]
      %v3304 = vld [vmem:[%s3276 + $0xa0] sm:$0xf]
      %v3305 = vld [vmem:[%s3276 + $0xa8] sm:$0xf]
      %v3306 = vld [vmem:[%s3276 + $0xac] sm:$0xf]
      %v3307 = vld [vmem:[%s3276 + $0xb4] sm:$0xf]
      %v3308 = vld [vmem:[%s3276 + $0xb8] sm:$0xf]
      %s3309 = scalar_lea.vmem %s242, 12
      %v3310 = vld [vmem:[%s3309] sm:$0x3]
      %v3343 = vunpack.c.l.b16 %v3277
      %v3344 = vunpack.c.l.b16 %v3278
      %v3345 = vunpack.c.l.b16 %v3279
      %v3346 = vunpack.c.l.b16 %v3280
      %v3347 = vunpack.c.l.b16 %v3281
      %v3348 = vunpack.c.l.b16 %v3282
      %v3349 = vunpack.c.l.b16 %v3283
      %v3350 = vunpack.c.l.b16 %v3284
      %v3351 = vunpack.c.l.b16 %v3285
      %v3352 = vunpack.c.l.b16 %v3286
      %v3353 = vunpack.c.l.b16 %v3287
      %v3354 = vunpack.c.l.b16 %v3288
      %v3355 = vunpack.c.l.b16 %v3289
      %v3356 = vunpack.c.l.b16 %v3290
      %v3357 = vunpack.c.l.b16 %v3291
      %v3358 = vunpack.c.l.b16 %v3292
      %v3359 = vunpack.c.l.b16 %v3293
      %v3360 = vunpack.c.l.b16 %v3294
      %v3361 = vunpack.c.l.b16 %v3295
      %v3362 = vunpack.c.l.b16 %v3296
      %v3363 = vunpack.c.l.b16 %v3297
      %v3364 = vunpack.c.l.b16 %v3298
      %v3365 = vunpack.c.l.b16 %v3299
      %v3366 = vunpack.c.l.b16 %v3300
      %v3367 = vunpack.c.l.b16 %v3301
      %v3368 = vunpack.c.l.b16 %v3302
      %v3369 = vunpack.c.l.b16 %v3303
      %v3370 = vunpack.c.l.b16 %v3304
      %v3371 = vunpack.c.l.b16 %v3305
      %v3372 = vunpack.c.l.b16 %v3306
      %v3373 = vunpack.c.l.b16 %v3307
      %v3374 = vunpack.c.l.b16 %v3308
      %v3375 = vpack.c.b16 %v3344, %v3343
      %v3376 = vpack.c.b16 %v3346, %v3345
      %v3377 = vpack.c.b16 %v3348, %v3347
      %v3378 = vpack.c.b16 %v3350, %v3349
      %v3379 = vpack.c.b16 %v3352, %v3351
      %v3380 = vpack.c.b16 %v3354, %v3353
      %v3381 = vpack.c.b16 %v3356, %v3355
      %v3382 = vpack.c.b16 %v3358, %v3357
      %v3383 = vpack.c.b16 %v3360, %v3359
      %v3384 = vpack.c.b16 %v3362, %v3361
      %v3385 = vpack.c.b16 %v3364, %v3363
      %v3386 = vpack.c.b16 %v3366, %v3365
      %v3387 = vpack.c.b16 %v3368, %v3367
      %v3388 = vpack.c.b16 %v3370, %v3369
      %v3389 = vpack.c.b16 %v3372, %v3371
      %v3390 = vpack.c.b16 %v3374, %v3373
      %v3392 = vsel %vm752, %v3375, 0
      %v3395 = vsel %vm752, %v3376, 0
      %v3398 = vsel %vm752, %v3377, 0
      %v3401 = vsel %vm752, %v3378, 0
      %v3404 = vsel %vm752, %v3379, 0
      %v3407 = vsel %vm752, %v3380, 0
      %v3410 = vsel %vm752, %v3381, 0
      %v3413 = vsel %vm752, %v3382, 0
      %v3416 = vsel %vm752, %v3383, 0
      %v3419 = vsel %vm752, %v3384, 0
      %v3422 = vsel %vm752, %v3385, 0
      %v3425 = vsel %vm752, %v3386, 0
      %v3428 = vsel %vm752, %v3387, 0
      %v3431 = vsel %vm752, %v3388, 0
      %v3434 = vsel %vm752, %v3389, 0
      %v3437 = vsel %vm752, %v3390, 0
      %v3440 = vsel %vm801, %v3310, 0
      %3442 = vmatprep.subr.bf16.mxu0 0
      %3443 = vmatpush1.bf16.msra.mxu0 %v3440
      %3444 = vmatprep.subr.bf16.mxu0 0
      %3445 = vmatpush1.bf16.msra.mxu0 0
      %3446 = vmatprep.subr.bf16.mxu0 0
      %3447 = vmatpush1.bf16.msra.mxu0 0
      %3448 = vmatprep.subr.bf16.mxu0 0
      %3449 = vmatpush1.bf16.msra.mxu0 0
      %3450 = vmatprep.subr.bf16.mxu0 0
      %3451 = vmatpush1.bf16.msra.mxu0 0
      %3452 = vmatprep.subr.bf16.mxu0 0
      %3453 = vmatpush1.bf16.msra.mxu0 0
      %3454 = vmatprep.subr.bf16.mxu0 0
      %3455 = vmatpush1.bf16.msra.mxu0 0
      %3456 = vmatprep.subr.bf16.mxu0 0
      %3457 = vmatpush1.bf16.msra.mxu0 0
      %3458 = vmatprep.subr.bf16.mxu0 0
      %3459 = vmatpush1.bf16.msra.mxu0 0
      %3460 = vmatprep.subr.bf16.mxu0 0
      %3461 = vmatpush1.bf16.msra.mxu0 0
      %3462 = vmatprep.subr.bf16.mxu0 0
      %3463 = vmatpush1.bf16.msra.mxu0 0
      %3464 = vmatprep.subr.bf16.mxu0 0
      %3465 = vmatpush1.bf16.msra.mxu0 0
      %3466 = vmatprep.subr.bf16.mxu0 0
      %3467 = vmatpush1.bf16.msra.mxu0 0
      %3468 = vmatprep.subr.bf16.mxu0 0
      %3469 = vmatpush1.bf16.msra.mxu0 0
      %3470 = vmatprep.subr.bf16.mxu0 0
      %3471 = vmatpush1.bf16.msra.mxu0 0
      %3472 = vmatprep.subr.bf16.mxu0 0
      %3473 = vmatpush1.bf16.msra.mxu0 0
      %3474 = vmatprep.mubr.bf16.mxu0 0
      %3475 = vmatmul.mubr.bf16.gmra.mrb[0].mxu0 %v3392
      %v3476 = vpop.f32.mrb[0].mxu0
      %v3477 = vadd.f32 0.0, %v3476
      %v3478 = vpop.f32.mrb[0].mxu0
      %v3479 = vpop.f32.mrb[0].mxu0
      %v3480 = vadd.f32 0.0, %v3479
      %v3481 = vpop.f32.mrb[0].mxu0
      %3482 = vmatprep.mubr.bf16.mxu0 0
      %3483 = vmatmul.mubr.bf16.gmra.mrb[0].mxu0 %v3395
      %v3484 = vpop.f32.mrb[0].mxu0
      %v3485 = vadd.f32 0.0, %v3484
      %v3486 = vpop.f32.mrb[0].mxu0
      %v3487 = vpop.f32.mrb[0].mxu0
      %v3488 = vadd.f32 0.0, %v3487
      %v3489 = vpop.f32.mrb[0].mxu0
      %3490 = vmatprep.mubr.bf16.mxu0 0
      %3491 = vmatmul.mubr.bf16.gmra.mrb[0].mxu0 %v3398
      %v3492 = vpop.f32.mrb[0].mxu0
      %v3493 = vadd.f32 0.0, %v3492
      %v3494 = vpop.f32.mrb[0].mxu0
      %v3495 = vpop.f32.mrb[0].mxu0
      %v3496 = vadd.f32 0.0, %v3495
      %v3497 = vpop.f32.mrb[0].mxu0
      %3498 = vmatprep.mubr.bf16.mxu0 0
      %3499 = vmatmul.mubr.bf16.gmra.mrb[0].mxu0 %v3401
      %v3500 = vpop.f32.mrb[0].mxu0
      %v3501 = vadd.f32 0.0, %v3500
      %v3502 = vpop.f32.mrb[0].mxu0
      %v3503 = vpop.f32.mrb[0].mxu0
      %v3504 = vadd.f32 0.0, %v3503
      %v3505 = vpop.f32.mrb[0].mxu0
      %3506 = vmatprep.mubr.bf16.mxu0 0
      %3507 = vmatmul.mubr.bf16.gmra.mrb[0].mxu0 %v3404
      %v3508 = vpop.f32.mrb[0].mxu0
      %v3509 = vadd.f32 0.0, %v3508
      %v3510 = vpop.f32.mrb[0].mxu0
      %v3511 = vpop.f32.mrb[0].mxu0
      %v3512 = vadd.f32 0.0, %v3511
      %v3513 = vpop.f32.mrb[0].mxu0
      %3514 = vmatprep.mubr.bf16.mxu0 0
      %3515 = vmatmul.mubr.bf16.gmra.mrb[0].mxu0 %v3407
      %v3516 = vpop.f32.mrb[0].mxu0
      %v3517 = vadd.f32 0.0, %v3516
      %v3518 = vpop.f32.mrb[0].mxu0
      %v3519 = vpop.f32.mrb[0].mxu0
      %v3520 = vadd.f32 0.0, %v3519
      %v3521 = vpop.f32.mrb[0].mxu0
      %3522 = vmatprep.mubr.bf16.mxu0 0
      %3523 = vmatmul.mubr.bf16.gmra.mrb[0].mxu0 %v3410
      %v3524 = vpop.f32.mrb[0].mxu0
      %v3525 = vadd.f32 0.0, %v3524
      %v3526 = vpop.f32.mrb[0].mxu0
      %v3527 = vpop.f32.mrb[0].mxu0
      %v3528 = vadd.f32 0.0, %v3527
      %v3529 = vpop.f32.mrb[0].mxu0
      %3530 = vmatprep.mubr.bf16.mxu0 0
      %3531 = vmatmul.mubr.bf16.gmra.mrb[0].mxu0 %v3413
      %v3532 = vpop.f32.mrb[0].mxu0
      %v3533 = vadd.f32 0.0, %v3532
      %v3534 = vpop.f32.mrb[0].mxu0
      %v3535 = vpop.f32.mrb[0].mxu0
      %v3536 = vadd.f32 0.0, %v3535
      %v3537 = vpop.f32.mrb[0].mxu0
      %3538 = vmatprep.mubr.bf16.mxu0 0
      %3539 = vmatmul.mubr.bf16.gmra.mrb[0].mxu0 %v3416
      %v3540 = vpop.f32.mrb[0].mxu0
      %v3541 = vadd.f32 0.0, %v3540
      %v3542 = vpop.f32.mrb[0].mxu0
      %v3543 = vpop.f32.mrb[0].mxu0
      %v3544 = vadd.f32 0.0, %v3543
      %v3545 = vpop.f32.mrb[0].mxu0
      %3546 = vmatprep.mubr.bf16.mxu0 0
      %3547 = vmatmul.mubr.bf16.gmra.mrb[0].mxu0 %v3419
      %v3548 = vpop.f32.mrb[0].mxu0
      %v3549 = vadd.f32 0.0, %v3548
      %v3550 = vpop.f32.mrb[0].mxu0
      %v3551 = vpop.f32.mrb[0].mxu0
      %v3552 = vadd.f32 0.0, %v3551
      %v3553 = vpop.f32.mrb[0].mxu0
      %3554 = vmatprep.mubr.bf16.mxu0 0
      %3555 = vmatmul.mubr.bf16.gmra.mrb[0].mxu0 %v3422
      %v3556 = vpop.f32.mrb[0].mxu0
      %v3557 = vadd.f32 0.0, %v3556
      %v3558 = vpop.f32.mrb[0].mxu0
      %v3559 = vpop.f32.mrb[0].mxu0
      %v3560 = vadd.f32 0.0, %v3559
      %v3561 = vpop.f32.mrb[0].mxu0
      %3562 = vmatprep.mubr.bf16.mxu0 0
      %3563 = vmatmul.mubr.bf16.gmra.mrb[0].mxu0 %v3425
      %v3564 = vpop.f32.mrb[0].mxu0
      %v3565 = vadd.f32 0.0, %v3564
      %v3566 = vpop.f32.mrb[0].mxu0
      %v3567 = vpop.f32.mrb[0].mxu0
      %v3568 = vadd.f32 0.0, %v3567
      %v3569 = vpop.f32.mrb[0].mxu0
      %3570 = vmatprep.mubr.bf16.mxu0 0
      %3571 = vmatmul.mubr.bf16.gmra.mrb[0].mxu0 %v3428
      %v3572 = vpop.f32.mrb[0].mxu0
      %v3573 = vadd.f32 0.0, %v3572
      %v3574 = vpop.f32.mrb[0].mxu0
      %v3575 = vpop.f32.mrb[0].mxu0
      %v3576 = vadd.f32 0.0, %v3575
      %v3577 = vpop.f32.mrb[0].mxu0
      %3578 = vmatprep.mubr.bf16.mxu0 0
      %3579 = vmatmul.mubr.bf16.gmra.mrb[0].mxu0 %v3431
      %v3580 = vpop.f32.mrb[0].mxu0
      %v3581 = vadd.f32 0.0, %v3580
      %v3582 = vpop.f32.mrb[0].mxu0
      %v3583 = vpop.f32.mrb[0].mxu0
      %v3584 = vadd.f32 0.0, %v3583
      %v3585 = vpop.f32.mrb[0].mxu0
      %3586 = vmatprep.mubr.bf16.mxu0 0
      %3587 = vmatmul.mubr.bf16.gmra.mrb[0].mxu0 %v3434
      %v3588 = vpop.f32.mrb[0].mxu0
      %v3589 = vadd.f32 0.0, %v3588
      %v3590 = vpop.f32.mrb[0].mxu0
      %v3591 = vpop.f32.mrb[0].mxu0
      %v3592 = vadd.f32 0.0, %v3591
      %v3593 = vpop.f32.mrb[0].mxu0
      %3594 = vmatprep.mubr.bf16.mxu0 0
      %3595 = vmatmul.mubr.bf16.gmra.mrb[0].mxu0 %v3437
      %v3596 = vpop.f32.mrb[0].mxu0
      %v3597 = vadd.f32 0.0, %v3596
      %v3598 = vpop.f32.mrb[0].mxu0
      %v3599 = vpop.f32.mrb[0].mxu0
      %v3600 = vadd.f32 0.0, %v3599
      %v3601 = vpop.f32.mrb[0].mxu0
      %3602 = vdwg.mxu0
      %v3603 = vadd.f32 %v3241, %v3477
      %v3604 = vadd.f32 %v3242, %v3480
      %v3605 = vadd.f32 %v3243, %v3485
      %v3606 = vadd.f32 %v3244, %v3488
      %v3607 = vadd.f32 %v3245, %v3493
      %v3608 = vadd.f32 %v3246, %v3496
      %v3609 = vadd.f32 %v3247, %v3501
      %v3610 = vadd.f32 %v3248, %v3504
      %v3611 = vadd.f32 %v3249, %v3509
      %v3612 = vadd.f32 %v3250, %v3512
      %v3613 = vadd.f32 %v3251, %v3517
      %v3614 = vadd.f32 %v3252, %v3520
      %v3615 = vadd.f32 %v3253, %v3525
      %v3616 = vadd.f32 %v3254, %v3528
      %v3617 = vadd.f32 %v3255, %v3533
      %v3618 = vadd.f32 %v3256, %v3536
      %v3619 = vadd.f32 %v3257, %v3541
      %v3620 = vadd.f32 %v3258, %v3544
      %v3621 = vadd.f32 %v3259, %v3549
      %v3622 = vadd.f32 %v3260, %v3552
      %v3623 = vadd.f32 %v3261, %v3557
      %v3624 = vadd.f32 %v3262, %v3560
      %v3625 = vadd.f32 %v3263, %v3565
      %v3626 = vadd.f32 %v3264, %v3568
      %v3627 = vadd.f32 %v3265, %v3573
      %v3628 = vadd.f32 %v3266, %v3576
      %v3629 = vadd.f32 %v3267, %v3581
      %v3630 = vadd.f32 %v3268, %v3584
      %v3631 = vadd.f32 %v3269, %v3589
      %v3632 = vadd.f32 %v3270, %v3592
      %v3633 = vadd.f32 %v3271, %v3597
      %v3634 = vadd.f32 %v3272, %v3600
      %v3635 = vld [vmem:[%s3276] sm:$0xf]
      %v3636 = vld [vmem:[%s3276 + $0x4] sm:$0xf]
      %v3637 = vld [vmem:[%s3276 + $0x8] sm:$0x1]
      %v3638 = vld [vmem:[%s3276 + $0xc] sm:$0xf]
      %v3639 = vld [vmem:[%s3276 + $0x10] sm:$0xf]
      %v3640 = vld [vmem:[%s3276 + $0x14] sm:$0x1]
      %v3641 = vld [vmem:[%s3276 + $0x18] sm:$0xf]
      %v3642 = vld [vmem:[%s3276 + $0x1c] sm:$0xf]
      %v3643 = vld [vmem:[%s3276 + $0x20] sm:$0x1]
      %v3644 = vld [vmem:[%s3276 + $0x24] sm:$0xf]
      %v3645 = vld [vmem:[%s3276 + $0x28] sm:$0xf]
      %v3646 = vld [vmem:[%s3276 + $0x2c] sm:$0x1]
      %v3647 = vld [vmem:[%s3276 + $0x30] sm:$0xf]
      %v3648 = vld [vmem:[%s3276 + $0x34] sm:$0xf]
      %v3649 = vld [vmem:[%s3276 + $0x38] sm:$0x1]
      %v3650 = vld [vmem:[%s3276 + $0x3c] sm:$0xf]
      %v3651 = vld [vmem:[%s3276 + $0x40] sm:$0xf]
      %v3652 = vld [vmem:[%s3276 + $0x44] sm:$0x1]
      %v3653 = vld [vmem:[%s3276 + $0x48] sm:$0xf]
      %v3654 = vld [vmem:[%s3276 + $0x4c] sm:$0xf]
      %v3655 = vld [vmem:[%s3276 + $0x50] sm:$0x1]
      %v3656 = vld [vmem:[%s3276 + $0x54] sm:$0xf]
      %v3657 = vld [vmem:[%s3276 + $0x58] sm:$0xf]
      %v3658 = vld [vmem:[%s3276 + $0x5c] sm:$0x1]
      %v3659 = vld [vmem:[%s3276 + $0x60] sm:$0xf]
      %v3660 = vld [vmem:[%s3276 + $0x64] sm:$0xf]
      %v3661 = vld [vmem:[%s3276 + $0x68] sm:$0x1]
      %v3662 = vld [vmem:[%s3276 + $0x6c] sm:$0xf]
      %v3663 = vld [vmem:[%s3276 + $0x70] sm:$0xf]
      %v3664 = vld [vmem:[%s3276 + $0x74] sm:$0x1]
      %v3665 = vld [vmem:[%s3276 + $0x78] sm:$0xf]
      %v3666 = vld [vmem:[%s3276 + $0x7c] sm:$0xf]
      %v3667 = vld [vmem:[%s3276 + $0x80] sm:$0x1]
      %v3668 = vld [vmem:[%s3276 + $0x84] sm:$0xf]
      %v3669 = vld [vmem:[%s3276 + $0x88] sm:$0xf]
      %v3670 = vld [vmem:[%s3276 + $0x8c] sm:$0x1]
      %v3671 = vld [vmem:[%s3276 + $0x90] sm:$0xf]
      %v3672 = vld [vmem:[%s3276 + $0x94] sm:$0xf]
      %v3673 = vld [vmem:[%s3276 + $0x98] sm:$0x1]
      %v3674 = vld [vmem:[%s3276 + $0x9c] sm:$0xf]
      %v3675 = vld [vmem:[%s3276 + $0xa0] sm:$0xf]
      %v3676 = vld [vmem:[%s3276 + $0xa4] sm:$0x1]
      %v3677 = vld [vmem:[%s3276 + $0xa8] sm:$0xf]
      %v3678 = vld [vmem:[%s3276 + $0xac] sm:$0xf]
      %v3679 = vld [vmem:[%s3276 + $0xb0] sm:$0x1]
      %v3680 = vld [vmem:[%s3276 + $0xb4] sm:$0xf]
      %v3681 = vld [vmem:[%s3276 + $0xb8] sm:$0xf]
      %v3682 = vld [vmem:[%s3276 + $0xbc] sm:$0x1]
      %v3684 = vshrl.u32 %v3635, 16
      %v3686 = vrot.slane %v3684, 4
      %v3687 = vshll.u32 %v3635, 16
      %v3689 = vrot.slane %v3687, 5
      %v3690 = vor.u32 %v3686, %v3689
      %v3691 = vrot.slane %v3690, 4
      %v3693 = vshll.u32 %v3636, 16
      %v3695 = vrot.slane %v3693, 5
      %v3696 = vsel %vm317, %v3691, %v3695
      %v3697 = vshrl.u32 %v3636, 16
      %v3699 = vrot.slane %v3697, 4
      %v3700 = vor.u32 %v3699, %v3695
      %v3701 = vrot.slane %v3700, 4
      %v3703 = vshll.u32 %v3637, 16
      %v3705 = vrot.slane %v3703, 5
      %v3706 = vsel %vm317, %v3701, %v3705
      %v3708 = vshrl.u32 %v3638, 16
      %v3710 = vrot.slane %v3708, 4
      %v3711 = vshll.u32 %v3638, 16
      %v3713 = vrot.slane %v3711, 5
      %v3714 = vor.u32 %v3710, %v3713
      %v3715 = vrot.slane %v3714, 4
      %v3717 = vshll.u32 %v3639, 16
      %v3719 = vrot.slane %v3717, 5
      %v3720 = vsel %vm317, %v3715, %v3719
      %v3721 = vshrl.u32 %v3639, 16
      %v3723 = vrot.slane %v3721, 4
      %v3724 = vor.u32 %v3723, %v3719
      %v3725 = vrot.slane %v3724, 4
      %v3727 = vshll.u32 %v3640, 16
      %v3729 = vrot.slane %v3727, 5
      %v3730 = vsel %vm317, %v3725, %v3729
      %v3732 = vshrl.u32 %v3641, 16
      %v3734 = vrot.slane %v3732, 4
      %v3735 = vshll.u32 %v3641, 16
      %v3737 = vrot.slane %v3735, 5
      %v3738 = vor.u32 %v3734, %v3737
      %v3739 = vrot.slane %v3738, 4
      %v3741 = vshll.u32 %v3642, 16
      %v3743 = vrot.slane %v3741, 5
      %v3744 = vsel %vm317, %v3739, %v3743
      %v3745 = vshrl.u32 %v3642, 16
      %v3747 = vrot.slane %v3745, 4
      %v3748 = vor.u32 %v3747, %v3743
      %v3749 = vrot.slane %v3748, 4
      %v3751 = vshll.u32 %v3643, 16
      %v3753 = vrot.slane %v3751, 5
      %v3754 = vsel %vm317, %v3749, %v3753
      %v3756 = vshrl.u32 %v3644, 16
      %v3758 = vrot.slane %v3756, 4
      %v3759 = vshll.u32 %v3644, 16
      %v3761 = vrot.slane %v3759, 5
      %v3762 = vor.u32 %v3758, %v3761
      %v3763 = vrot.slane %v3762, 4
      %v3765 = vshll.u32 %v3645, 16
      %v3767 = vrot.slane %v3765, 5
      %v3768 = vsel %vm317, %v3763, %v3767
      %v3769 = vshrl.u32 %v3645, 16
      %v3771 = vrot.slane %v3769, 4
      %v3772 = vor.u32 %v3771, %v3767
      %v3773 = vrot.slane %v3772, 4
      %v3775 = vshll.u32 %v3646, 16
      %v3777 = vrot.slane %v3775, 5
      %v3778 = vsel %vm317, %v3773, %v3777
      %v3780 = vshrl.u32 %v3647, 16
      %v3782 = vrot.slane %v3780, 4
      %v3783 = vshll.u32 %v3647, 16
      %v3785 = vrot.slane %v3783, 5
      %v3786 = vor.u32 %v3782, %v3785
      %v3787 = vrot.slane %v3786, 4
      %v3789 = vshll.u32 %v3648, 16
      %v3791 = vrot.slane %v3789, 5
      %v3792 = vsel %vm317, %v3787, %v3791
      %v3793 = vshrl.u32 %v3648, 16
      %v3795 = vrot.slane %v3793, 4
      %v3796 = vor.u32 %v3795, %v3791
      %v3797 = vrot.slane %v3796, 4
      %v3799 = vshll.u32 %v3649, 16
      %v3801 = vrot.slane %v3799, 5
      %v3802 = vsel %vm317, %v3797, %v3801
      %v3804 = vshrl.u32 %v3650, 16
      %v3806 = vrot.slane %v3804, 4
      %v3807 = vshll.u32 %v3650, 16
      %v3809 = vrot.slane %v3807, 5
      %v3810 = vor.u32 %v3806, %v3809
      %v3811 = vrot.slane %v3810, 4
      %v3813 = vshll.u32 %v3651, 16
      %v3815 = vrot.slane %v3813, 5
      %v3816 = vsel %vm317, %v3811, %v3815
      %v3817 = vshrl.u32 %v3651, 16
      %v3819 = vrot.slane %v3817, 4
      %v3820 = vor.u32 %v3819, %v3815
      %v3821 = vrot.slane %v3820, 4
      %v3823 = vshll.u32 %v3652, 16
      %v3825 = vrot.slane %v3823, 5
      %v3826 = vsel %vm317, %v3821, %v3825
      %v3828 = vshrl.u32 %v3653, 16
      %v3830 = vrot.slane %v3828, 4
      %v3831 = vshll.u32 %v3653, 16
      %v3833 = vrot.slane %v3831, 5
      %v3834 = vor.u32 %v3830, %v3833
      %v3835 = vrot.slane %v3834, 4
      %v3837 = vshll.u32 %v3654, 16
      %v3839 = vrot.slane %v3837, 5
      %v3840 = vsel %vm317, %v3835, %v3839
      %v3841 = vshrl.u32 %v3654, 16
      %v3843 = vrot.slane %v3841, 4
      %v3844 = vor.u32 %v3843, %v3839
      %v3845 = vrot.slane %v3844, 4
      %v3847 = vshll.u32 %v3655, 16
      %v3849 = vrot.slane %v3847, 5
      %v3850 = vsel %vm317, %v3845, %v3849
      %v3852 = vshrl.u32 %v3656, 16
      %v3854 = vrot.slane %v3852, 4
      %v3855 = vshll.u32 %v3656, 16
      %v3857 = vrot.slane %v3855, 5
      %v3858 = vor.u32 %v3854, %v3857
      %v3859 = vrot.slane %v3858, 4
      %v3861 = vshll.u32 %v3657, 16
      %v3863 = vrot.slane %v3861, 5
      %v3864 = vsel %vm317, %v3859, %v3863
      %v3865 = vshrl.u32 %v3657, 16
      %v3867 = vrot.slane %v3865, 4
      %v3868 = vor.u32 %v3867, %v3863
      %v3869 = vrot.slane %v3868, 4
      %v3871 = vshll.u32 %v3658, 16
      %v3873 = vrot.slane %v3871, 5
      %v3874 = vsel %vm317, %v3869, %v3873
      %v3876 = vshrl.u32 %v3659, 16
      %v3878 = vrot.slane %v3876, 4
      %v3879 = vshll.u32 %v3659, 16
      %v3881 = vrot.slane %v3879, 5
      %v3882 = vor.u32 %v3878, %v3881
      %v3883 = vrot.slane %v3882, 4
      %v3885 = vshll.u32 %v3660, 16
      %v3887 = vrot.slane %v3885, 5
      %v3888 = vsel %vm317, %v3883, %v3887
      %v3889 = vshrl.u32 %v3660, 16
      %v3891 = vrot.slane %v3889, 4
      %v3892 = vor.u32 %v3891, %v3887
      %v3893 = vrot.slane %v3892, 4
      %v3895 = vshll.u32 %v3661, 16
      %v3897 = vrot.slane %v3895, 5
      %v3898 = vsel %vm317, %v3893, %v3897
      %v3900 = vshrl.u32 %v3662, 16
      %v3902 = vrot.slane %v3900, 4
      %v3903 = vshll.u32 %v3662, 16
      %v3905 = vrot.slane %v3903, 5
      %v3906 = vor.u32 %v3902, %v3905
      %v3907 = vrot.slane %v3906, 4
      %v3909 = vshll.u32 %v3663, 16
      %v3911 = vrot.slane %v3909, 5
      %v3912 = vsel %vm317, %v3907, %v3911
      %v3913 = vshrl.u32 %v3663, 16
      %v3915 = vrot.slane %v3913, 4
      %v3916 = vor.u32 %v3915, %v3911
      %v3917 = vrot.slane %v3916, 4
      %v3919 = vshll.u32 %v3664, 16
      %v3921 = vrot.slane %v3919, 5
      %v3922 = vsel %vm317, %v3917, %v3921
      %v3924 = vshrl.u32 %v3665, 16
      %v3926 = vrot.slane %v3924, 4
      %v3927 = vshll.u32 %v3665, 16
      %v3929 = vrot.slane %v3927, 5
      %v3930 = vor.u32 %v3926, %v3929
      %v3931 = vrot.slane %v3930, 4
      %v3933 = vshll.u32 %v3666, 16
      %v3935 = vrot.slane %v3933, 5
      %v3936 = vsel %vm317, %v3931, %v3935
      %v3937 = vshrl.u32 %v3666, 16
      %v3939 = vrot.slane %v3937, 4
      %v3940 = vor.u32 %v3939, %v3935
      %v3941 = vrot.slane %v3940, 4
      %v3943 = vshll.u32 %v3667, 16
      %v3945 = vrot.slane %v3943, 5
      %v3946 = vsel %vm317, %v3941, %v3945
      %v3948 = vshrl.u32 %v3668, 16
      %v3950 = vrot.slane %v3948, 4
      %v3951 = vshll.u32 %v3668, 16
      %v3953 = vrot.slane %v3951, 5
      %v3954 = vor.u32 %v3950, %v3953
      %v3955 = vrot.slane %v3954, 4
      %v3957 = vshll.u32 %v3669, 16
      %v3959 = vrot.slane %v3957, 5
      %v3960 = vsel %vm317, %v3955, %v3959
      %v3961 = vshrl.u32 %v3669, 16
      %v3963 = vrot.slane %v3961, 4
      %v3964 = vor.u32 %v3963, %v3959
      %v3965 = vrot.slane %v3964, 4
      %v3967 = vshll.u32 %v3670, 16
      %v3969 = vrot.slane %v3967, 5
      %v3970 = vsel %vm317, %v3965, %v3969
      %v3972 = vshrl.u32 %v3671, 16
      %v3974 = vrot.slane %v3972, 4
      %v3975 = vshll.u32 %v3671, 16
      %v3977 = vrot.slane %v3975, 5
      %v3978 = vor.u32 %v3974, %v3977
      %v3979 = vrot.slane %v3978, 4
      %v3981 = vshll.u32 %v3672, 16
      %v3983 = vrot.slane %v3981, 5
      %v3984 = vsel %vm317, %v3979, %v3983
      %v3985 = vshrl.u32 %v3672, 16
      %v3987 = vrot.slane %v3985, 4
      %v3988 = vor.u32 %v3987, %v3983
      %v3989 = vrot.slane %v3988, 4
      %v3991 = vshll.u32 %v3673, 16
      %v3993 = vrot.slane %v3991, 5
      %v3994 = vsel %vm317, %v3989, %v3993
      %v3996 = vshrl.u32 %v3674, 16
      %v3998 = vrot.slane %v3996, 4
      %v3999 = vshll.u32 %v3674, 16
      %v4001 = vrot.slane %v3999, 5
      %v4002 = vor.u32 %v3998, %v4001
      %v4003 = vrot.slane %v4002, 4
      %v4005 = vshll.u32 %v3675, 16
      %v4007 = vrot.slane %v4005, 5
      %v4008 = vsel %vm317, %v4003, %v4007
      %v4009 = vshrl.u32 %v3675, 16
      %v4011 = vrot.slane %v4009, 4
      %v4012 = vor.u32 %v4011, %v4007
      %v4013 = vrot.slane %v4012, 4
      %v4015 = vshll.u32 %v3676, 16
      %v4017 = vrot.slane %v4015, 5
      %v4018 = vsel %vm317, %v4013, %v4017
      %v4020 = vshrl.u32 %v3677, 16
      %v4022 = vrot.slane %v4020, 4
      %v4023 = vshll.u32 %v3677, 16
      %v4025 = vrot.slane %v4023, 5
      %v4026 = vor.u32 %v4022, %v4025
      %v4027 = vrot.slane %v4026, 4
      %v4029 = vshll.u32 %v3678, 16
      %v4031 = vrot.slane %v4029, 5
      %v4032 = vsel %vm317, %v4027, %v4031
      %v4033 = vshrl.u32 %v3678, 16
      %v4035 = vrot.slane %v4033, 4
      %v4036 = vor.u32 %v4035, %v4031
      %v4037 = vrot.slane %v4036, 4
      %v4039 = vshll.u32 %v3679, 16
      %v4041 = vrot.slane %v4039, 5
      %v4042 = vsel %vm317, %v4037, %v4041
      %v4044 = vshrl.u32 %v3680, 16
      %v4046 = vrot.slane %v4044, 4
      %v4047 = vshll.u32 %v3680, 16
      %v4049 = vrot.slane %v4047, 5
      %v4050 = vor.u32 %v4046, %v4049
      %v4051 = vrot.slane %v4050, 4
      %v4053 = vshll.u32 %v3681, 16
      %v4055 = vrot.slane %v4053, 5
      %v4056 = vsel %vm317, %v4051, %v4055
      %v4057 = vshrl.u32 %v3681, 16
      %v4059 = vrot.slane %v4057, 4
      %v4060 = vor.u32 %v4059, %v4055
      %v4061 = vrot.slane %v4060, 4
      %v4063 = vshll.u32 %v3682, 16
      %v4065 = vrot.slane %v4063, 5
      %v4066 = vsel %vm317, %v4061, %v4065
      %s4067 = scalar_lea.vmem %s242, 14
      %v4068 = vld [vmem:[%s4067] sm:$0x3]
      %v4069 = vunpack.c.l.b16 %v3696
      %v4070 = vunpack.c.l.b16 %v3706
      %v4071 = vunpack.c.l.b16 %v3720
      %v4072 = vunpack.c.l.b16 %v3730
      %v4073 = vunpack.c.l.b16 %v3744
      %v4074 = vunpack.c.l.b16 %v3754
      %v4075 = vunpack.c.l.b16 %v3768
      %v4076 = vunpack.c.l.b16 %v3778
      %v4077 = vunpack.c.l.b16 %v3792
      %v4078 = vunpack.c.l.b16 %v3802
      %v4079 = vunpack.c.l.b16 %v3816
      %v4080 = vunpack.c.l.b16 %v3826
      %v4081 = vunpack.c.l.b16 %v3840
      %v4082 = vunpack.c.l.b16 %v3850
      %v4083 = vunpack.c.l.b16 %v3864
      %v4084 = vunpack.c.l.b16 %v3874
      %v4085 = vunpack.c.l.b16 %v3888
      %v4086 = vunpack.c.l.b16 %v3898
      %v4087 = vunpack.c.l.b16 %v3912
      %v4088 = vunpack.c.l.b16 %v3922
      %v4089 = vunpack.c.l.b16 %v3936
      %v4090 = vunpack.c.l.b16 %v3946
      %v4091 = vunpack.c.l.b16 %v3960
      %v4092 = vunpack.c.l.b16 %v3970
      %v4093 = vunpack.c.l.b16 %v3984
      %v4094 = vunpack.c.l.b16 %v3994
      %v4095 = vunpack.c.l.b16 %v4008
      %v4096 = vunpack.c.l.b16 %v4018
      %v4097 = vunpack.c.l.b16 %v4032
      %v4098 = vunpack.c.l.b16 %v4042
      %v4099 = vunpack.c.l.b16 %v4056
      %v4100 = vunpack.c.l.b16 %v4066
      %v4101 = vpack.c.b16 %v4070, %v4069
      %v4102 = vpack.c.b16 %v4072, %v4071
      %v4103 = vpack.c.b16 %v4074, %v4073
      %v4104 = vpack.c.b16 %v4076, %v4075
      %v4105 = vpack.c.b16 %v4078, %v4077
      %v4106 = vpack.c.b16 %v4080, %v4079
      %v4107 = vpack.c.b16 %v4082, %v4081
      %v4108 = vpack.c.b16 %v4084, %v4083
      %v4109 = vpack.c.b16 %v4086, %v4085
      %v4110 = vpack.c.b16 %v4088, %v4087
      %v4111 = vpack.c.b16 %v4090, %v4089
      %v4112 = vpack.c.b16 %v4092, %v4091
      %v4113 = vpack.c.b16 %v4094, %v4093
      %v4114 = vpack.c.b16 %v4096, %v4095
      %v4115 = vpack.c.b16 %v4098, %v4097
      %v4116 = vpack.c.b16 %v4100, %v4099
      %v4118 = vsel %vm752, %v4101, 0
      %v4121 = vsel %vm752, %v4102, 0
      %v4124 = vsel %vm752, %v4103, 0
      %v4127 = vsel %vm752, %v4104, 0
      %v4130 = vsel %vm752, %v4105, 0
      %v4133 = vsel %vm752, %v4106, 0
      %v4136 = vsel %vm752, %v4107, 0
      %v4139 = vsel %vm752, %v4108, 0
      %v4142 = vsel %vm752, %v4109, 0
      %v4145 = vsel %vm752, %v4110, 0
      %v4148 = vsel %vm752, %v4111, 0
      %v4151 = vsel %vm752, %v4112, 0
      %v4154 = vsel %vm752, %v4113, 0
      %v4157 = vsel %vm752, %v4114, 0
      %v4160 = vsel %vm752, %v4115, 0
      %v4163 = vsel %vm752, %v4116, 0
      %v4166 = vsel %vm801, %v4068, 0
      %4168 = vmatprep.subr.bf16.mxu0 0
      %4169 = vmatpush1.bf16.msra.mxu0 %v4166
      %4170 = vmatprep.subr.bf16.mxu0 0
      %4171 = vmatpush1.bf16.msra.mxu0 0
      %4172 = vmatprep.subr.bf16.mxu0 0
      %4173 = vmatpush1.bf16.msra.mxu0 0
      %4174 = vmatprep.subr.bf16.mxu0 0
      %4175 = vmatpush1.bf16.msra.mxu0 0
      %4176 = vmatprep.subr.bf16.mxu0 0
      %4177 = vmatpush1.bf16.msra.mxu0 0
      %4178 = vmatprep.subr.bf16.mxu0 0
      %4179 = vmatpush1.bf16.msra.mxu0 0
      %4180 = vmatprep.subr.bf16.mxu0 0
      %4181 = vmatpush1.bf16.msra.mxu0 0
      %4182 = vmatprep.subr.bf16.mxu0 0
      %4183 = vmatpush1.bf16.msra.mxu0 0
      %4184 = vmatprep.subr.bf16.mxu0 0
      %4185 = vmatpush1.bf16.msra.mxu0 0
      %4186 = vmatprep.subr.bf16.mxu0 0
      %4187 = vmatpush1.bf16.msra.mxu0 0
      %4188 = vmatprep.subr.bf16.mxu0 0
      %4189 = vmatpush1.bf16.msra.mxu0 0
      %4190 = vmatprep.subr.bf16.mxu0 0
      %4191 = vmatpush1.bf16.msra.mxu0 0
      %4192 = vmatprep.subr.bf16.mxu0 0
      %4193 = vmatpush1.bf16.msra.mxu0 0
      %4194 = vmatprep.subr.bf16.mxu0 0
      %4195 = vmatpush1.bf16.msra.mxu0 0
      %4196 = vmatprep.subr.bf16.mxu0 0
      %4197 = vmatpush1.bf16.msra.mxu0 0
      %4198 = vmatprep.subr.bf16.mxu0 0
      %4199 = vmatpush1.bf16.msra.mxu0 0
      %4200 = vmatprep.mubr.bf16.mxu0 0
      %4201 = vmatmul.mubr.bf16.gmra.mrb[0].mxu0 %v4118
      %v4202 = vpop.f32.mrb[0].mxu0
      %v4203 = vadd.f32 0.0, %v4202
      %v4204 = vpop.f32.mrb[0].mxu0
      %v4205 = vpop.f32.mrb[0].mxu0
      %v4206 = vadd.f32 0.0, %v4205
      %v4207 = vpop.f32.mrb[0].mxu0
      %4208 = vmatprep.mubr.bf16.mxu0 0
      %4209 = vmatmul.mubr.bf16.gmra.mrb[0].mxu0 %v4121
      %v4210 = vpop.f32.mrb[0].mxu0
      %v4211 = vadd.f32 0.0, %v4210
      %v4212 = vpop.f32.mrb[0].mxu0
      %v4213 = vpop.f32.mrb[0].mxu0
      %v4214 = vadd.f32 0.0, %v4213
      %v4215 = vpop.f32.mrb[0].mxu0
      %4216 = vmatprep.mubr.bf16.mxu0 0
      %4217 = vmatmul.mubr.bf16.gmra.mrb[0].mxu0 %v4124
      %v4218 = vpop.f32.mrb[0].mxu0
      %v4219 = vadd.f32 0.0, %v4218
      %v4220 = vpop.f32.mrb[0].mxu0
      %v4221 = vpop.f32.mrb[0].mxu0
      %v4222 = vadd.f32 0.0, %v4221
      %v4223 = vpop.f32.mrb[0].mxu0
      %4224 = vmatprep.mubr.bf16.mxu0 0
      %4225 = vmatmul.mubr.bf16.gmra.mrb[0].mxu0 %v4127
      %v4226 = vpop.f32.mrb[0].mxu0
      %v4227 = vadd.f32 0.0, %v4226
      %v4228 = vpop.f32.mrb[0].mxu0
      %v4229 = vpop.f32.mrb[0].mxu0
      %v4230 = vadd.f32 0.0, %v4229
      %v4231 = vpop.f32.mrb[0].mxu0
      %4232 = vmatprep.mubr.bf16.mxu0 0
      %4233 = vmatmul.mubr.bf16.gmra.mrb[0].mxu0 %v4130
      %v4234 = vpop.f32.mrb[0].mxu0
      %v4235 = vadd.f32 0.0, %v4234
      %v4236 = vpop.f32.mrb[0].mxu0
      %v4237 = vpop.f32.mrb[0].mxu0
      %v4238 = vadd.f32 0.0, %v4237
      %v4239 = vpop.f32.mrb[0].mxu0
      %4240 = vmatprep.mubr.bf16.mxu0 0
      %4241 = vmatmul.mubr.bf16.gmra.mrb[0].mxu0 %v4133
      %v4242 = vpop.f32.mrb[0].mxu0
      %v4243 = vadd.f32 0.0, %v4242
      %v4244 = vpop.f32.mrb[0].mxu0
      %v4245 = vpop.f32.mrb[0].mxu0
      %v4246 = vadd.f32 0.0, %v4245
      %v4247 = vpop.f32.mrb[0].mxu0
      %4248 = vmatprep.mubr.bf16.mxu0 0
      %4249 = vmatmul.mubr.bf16.gmra.mrb[0].mxu0 %v4136
      %v4250 = vpop.f32.mrb[0].mxu0
      %v4251 = vadd.f32 0.0, %v4250
      %v4252 = vpop.f32.mrb[0].mxu0
      %v4253 = vpop.f32.mrb[0].mxu0
      %v4254 = vadd.f32 0.0, %v4253
      %v4255 = vpop.f32.mrb[0].mxu0
      %4256 = vmatprep.mubr.bf16.mxu0 0
      %4257 = vmatmul.mubr.bf16.gmra.mrb[0].mxu0 %v4139
      %v4258 = vpop.f32.mrb[0].mxu0
      %v4259 = vadd.f32 0.0, %v4258
      %v4260 = vpop.f32.mrb[0].mxu0
      %v4261 = vpop.f32.mrb[0].mxu0
      %v4262 = vadd.f32 0.0, %v4261
      %v4263 = vpop.f32.mrb[0].mxu0
      %4264 = vmatprep.mubr.bf16.mxu0 0
      %4265 = vmatmul.mubr.bf16.gmra.mrb[0].mxu0 %v4142
      %v4266 = vpop.f32.mrb[0].mxu0
      %v4267 = vadd.f32 0.0, %v4266
      %v4268 = vpop.f32.mrb[0].mxu0
      %v4269 = vpop.f32.mrb[0].mxu0
      %v4270 = vadd.f32 0.0, %v4269
      %v4271 = vpop.f32.mrb[0].mxu0
      %4272 = vmatprep.mubr.bf16.mxu0 0
      %4273 = vmatmul.mubr.bf16.gmra.mrb[0].mxu0 %v4145
      %v4274 = vpop.f32.mrb[0].mxu0
      %v4275 = vadd.f32 0.0, %v4274
      %v4276 = vpop.f32.mrb[0].mxu0
      %v4277 = vpop.f32.mrb[0].mxu0
      %v4278 = vadd.f32 0.0, %v4277
      %v4279 = vpop.f32.mrb[0].mxu0
      %4280 = vmatprep.mubr.bf16.mxu0 0
      %4281 = vmatmul.mubr.bf16.gmra.mrb[0].mxu0 %v4148
      %v4282 = vpop.f32.mrb[0].mxu0
      %v4283 = vadd.f32 0.0, %v4282
      %v4284 = vpop.f32.mrb[0].mxu0
      %v4285 = vpop.f32.mrb[0].mxu0
      %v4286 = vadd.f32 0.0, %v4285
      %v4287 = vpop.f32.mrb[0].mxu0
      %4288 = vmatprep.mubr.bf16.mxu0 0
      %4289 = vmatmul.mubr.bf16.gmra.mrb[0].mxu0 %v4151
      %v4290 = vpop.f32.mrb[0].mxu0
      %v4291 = vadd.f32 0.0, %v4290
      %v4292 = vpop.f32.mrb[0].mxu0
      %v4293 = vpop.f32.mrb[0].mxu0
      %v4294 = vadd.f32 0.0, %v4293
      %v4295 = vpop.f32.mrb[0].mxu0
      %4296 = vmatprep.mubr.bf16.mxu0 0
      %4297 = vmatmul.mubr.bf16.gmra.mrb[0].mxu0 %v4154
      %v4298 = vpop.f32.mrb[0].mxu0
      %v4299 = vadd.f32 0.0, %v4298
      %v4300 = vpop.f32.mrb[0].mxu0
      %v4301 = vpop.f32.mrb[0].mxu0
      %v4302 = vadd.f32 0.0, %v4301
      %v4303 = vpop.f32.mrb[0].mxu0
      %4304 = vmatprep.mubr.bf16.mxu0 0
      %4305 = vmatmul.mubr.bf16.gmra.mrb[0].mxu0 %v4157
      %v4306 = vpop.f32.mrb[0].mxu0
      %v4307 = vadd.f32 0.0, %v4306
      %v4308 = vpop.f32.mrb[0].mxu0
      %v4309 = vpop.f32.mrb[0].mxu0
      %v4310 = vadd.f32 0.0, %v4309
      %v4311 = vpop.f32.mrb[0].mxu0
      %4312 = vmatprep.mubr.bf16.mxu0 0
      %4313 = vmatmul.mubr.bf16.gmra.mrb[0].mxu0 %v4160
      %v4314 = vpop.f32.mrb[0].mxu0
      %v4315 = vadd.f32 0.0, %v4314
      %v4316 = vpop.f32.mrb[0].mxu0
      %v4317 = vpop.f32.mrb[0].mxu0
      %v4318 = vadd.f32 0.0, %v4317
      %v4319 = vpop.f32.mrb[0].mxu0
      %4320 = vmatprep.mubr.bf16.mxu0 0
      %4321 = vmatmul.mubr.bf16.gmra.mrb[0].mxu0 %v4163
      %v4322 = vpop.f32.mrb[0].mxu0
      %v4323 = vadd.f32 0.0, %v4322
      %v4324 = vpop.f32.mrb[0].mxu0
      %v4325 = vpop.f32.mrb[0].mxu0
      %v4326 = vadd.f32 0.0, %v4325
      %v4327 = vpop.f32.mrb[0].mxu0
      %4328 = vdwg.mxu0
      %v4329 = vadd.f32 %v3603, %v4203
      %v4330 = vadd.f32 %v3604, %v4206
      %v4331 = vadd.f32 %v3605, %v4211
      %v4332 = vadd.f32 %v3606, %v4214
      %v4333 = vadd.f32 %v3607, %v4219
      %v4334 = vadd.f32 %v3608, %v4222
      %v4335 = vadd.f32 %v3609, %v4227
      %v4336 = vadd.f32 %v3610, %v4230
      %v4337 = vadd.f32 %v3611, %v4235
      %v4338 = vadd.f32 %v3612, %v4238
      %v4339 = vadd.f32 %v3613, %v4243
      %v4340 = vadd.f32 %v3614, %v4246
      %v4341 = vadd.f32 %v3615, %v4251
      %v4342 = vadd.f32 %v3616, %v4254
      %v4343 = vadd.f32 %v3617, %v4259
      %v4344 = vadd.f32 %v3618, %v4262
      %v4345 = vadd.f32 %v3619, %v4267
      %v4346 = vadd.f32 %v3620, %v4270
      %v4347 = vadd.f32 %v3621, %v4275
      %v4348 = vadd.f32 %v3622, %v4278
      %v4349 = vadd.f32 %v3623, %v4283
      %v4350 = vadd.f32 %v3624, %v4286
      %v4351 = vadd.f32 %v3625, %v4291
      %v4352 = vadd.f32 %v3626, %v4294
      %v4353 = vadd.f32 %v3627, %v4299
      %v4354 = vadd.f32 %v3628, %v4302
      %v4355 = vadd.f32 %v3629, %v4307
      %v4356 = vadd.f32 %v3630, %v4310
      %v4357 = vadd.f32 %v3631, %v4315
      %v4358 = vadd.f32 %v3632, %v4318
      %v4359 = vadd.f32 %v3633, %v4323
      %v4360 = vadd.f32 %v3634, %v4326
      %v4361 = vld [vmem:[%s3276] sm:$0xe]
      %v4362 = vld [vmem:[%s3276 + $0xc] sm:$0xe]
      %v4363 = vld [vmem:[%s3276 + $0x18] sm:$0xe]
      %v4364 = vld [vmem:[%s3276 + $0x24] sm:$0xe]
      %v4365 = vld [vmem:[%s3276 + $0x30] sm:$0xe]
      %v4366 = vld [vmem:[%s3276 + $0x3c] sm:$0xe]
      %v4367 = vld [vmem:[%s3276 + $0x48] sm:$0xe]
      %v4368 = vld [vmem:[%s3276 + $0x54] sm:$0xe]
      %v4369 = vld [vmem:[%s3276 + $0x60] sm:$0xe]
      %v4370 = vld [vmem:[%s3276 + $0x6c] sm:$0xe]
      %v4371 = vld [vmem:[%s3276 + $0x78] sm:$0xe]
      %v4372 = vld [vmem:[%s3276 + $0x84] sm:$0xe]
      %v4373 = vld [vmem:[%s3276 + $0x90] sm:$0xe]
      %v4374 = vld [vmem:[%s3276 + $0x9c] sm:$0xe]
      %v4375 = vld [vmem:[%s3276 + $0xa8] sm:$0xe]
      %v4376 = vld [vmem:[%s3276 + $0xb4] sm:$0xe]
      %v4425 = vrot.slane %v4361, 5
      %v4426 = vrot.slane %v4425, 4
      %v4427 = vrot.slane %v3636, 5
      %v4428 = vsel %vm1308, %v4426, %v4427
      %v4429 = vrot.slane %v4427, 4
      %v4430 = vrot.slane %v3637, 5
      %v4431 = vsel %vm1308, %v4429, %v4430
      %v4432 = vrot.slane %v4362, 5
      %v4433 = vrot.slane %v4432, 4
      %v4434 = vrot.slane %v3639, 5
      %v4435 = vsel %vm1308, %v4433, %v4434
      %v4436 = vrot.slane %v4434, 4
      %v4437 = vrot.slane %v3640, 5
      %v4438 = vsel %vm1308, %v4436, %v4437
      %v4439 = vrot.slane %v4363, 5
      %v4440 = vrot.slane %v4439, 4
      %v4441 = vrot.slane %v3642, 5
      %v4442 = vsel %vm1308, %v4440, %v4441
      %v4443 = vrot.slane %v4441, 4
      %v4444 = vrot.slane %v3643, 5
      %v4445 = vsel %vm1308, %v4443, %v4444
      %v4446 = vrot.slane %v4364, 5
      %v4447 = vrot.slane %v4446, 4
      %v4448 = vrot.slane %v3645, 5
      %v4449 = vsel %vm1308, %v4447, %v4448
      %v4450 = vrot.slane %v4448, 4
      %v4451 = vrot.slane %v3646, 5
      %v4452 = vsel %vm1308, %v4450, %v4451
      %v4453 = vrot.slane %v4365, 5
      %v4454 = vrot.slane %v4453, 4
      %v4455 = vrot.slane %v3648, 5
      %v4456 = vsel %vm1308, %v4454, %v4455
      %v4457 = vrot.slane %v4455, 4
      %v4458 = vrot.slane %v3649, 5
      %v4459 = vsel %vm1308, %v4457, %v4458
      %v4460 = vrot.slane %v4366, 5
      %v4461 = vrot.slane %v4460, 4
      %v4462 = vrot.slane %v3651, 5
      %v4463 = vsel %vm1308, %v4461, %v4462
      %v4464 = vrot.slane %v4462, 4
      %v4465 = vrot.slane %v3652, 5
      %v4466 = vsel %vm1308, %v4464, %v4465
      %v4467 = vrot.slane %v4367, 5
      %v4468 = vrot.slane %v4467, 4
      %v4469 = vrot.slane %v3654, 5
      %v4470 = vsel %vm1308, %v4468, %v4469
      %v4471 = vrot.slane %v4469, 4
      %v4472 = vrot.slane %v3655, 5
      %v4473 = vsel %vm1308, %v4471, %v4472
      %v4474 = vrot.slane %v4368, 5
      %v4475 = vrot.slane %v4474, 4
      %v4476 = vrot.slane %v3657, 5
      %v4477 = vsel %vm1308, %v4475, %v4476
      %v4478 = vrot.slane %v4476, 4
      %v4479 = vrot.slane %v3658, 5
      %v4480 = vsel %vm1308, %v4478, %v4479
      %v4481 = vrot.slane %v4369, 5
      %v4482 = vrot.slane %v4481, 4
      %v4483 = vrot.slane %v3660, 5
      %v4484 = vsel %vm1308, %v4482, %v4483
      %v4485 = vrot.slane %v4483, 4
      %v4486 = vrot.slane %v3661, 5
      %v4487 = vsel %vm1308, %v4485, %v4486
      %v4488 = vrot.slane %v4370, 5
      %v4489 = vrot.slane %v4488, 4
      %v4490 = vrot.slane %v3663, 5
      %v4491 = vsel %vm1308, %v4489, %v4490
      %v4492 = vrot.slane %v4490, 4
      %v4493 = vrot.slane %v3664, 5
      %v4494 = vsel %vm1308, %v4492, %v4493
      %v4495 = vrot.slane %v4371, 5
      %v4496 = vrot.slane %v4495, 4
      %v4497 = vrot.slane %v3666, 5
      %v4498 = vsel %vm1308, %v4496, %v4497
      %v4499 = vrot.slane %v4497, 4
      %v4500 = vrot.slane %v3667, 5
      %v4501 = vsel %vm1308, %v4499, %v4500
      %v4502 = vrot.slane %v4372, 5
      %v4503 = vrot.slane %v4502, 4
      %v4504 = vrot.slane %v3669, 5
      %v4505 = vsel %vm1308, %v4503, %v4504
      %v4506 = vrot.slane %v4504, 4
      %v4507 = vrot.slane %v3670, 5
      %v4508 = vsel %vm1308, %v4506, %v4507
      %v4509 = vrot.slane %v4373, 5
      %v4510 = vrot.slane %v4509, 4
      %v4511 = vrot.slane %v3672, 5
      %v4512 = vsel %vm1308, %v4510, %v4511
      %v4513 = vrot.slane %v4511, 4
      %v4514 = vrot.slane %v3673, 5
      %v4515 = vsel %vm1308, %v4513, %v4514
      %v4516 = vrot.slane %v4374, 5
      %v4517 = vrot.slane %v4516, 4
      %v4518 = vrot.slane %v3675, 5
      %v4519 = vsel %vm1308, %v4517, %v4518
      %v4520 = vrot.slane %v4518, 4
      %v4521 = vrot.slane %v3676, 5
      %v4522 = vsel %vm1308, %v4520, %v4521
      %v4523 = vrot.slane %v4375, 5
      %v4524 = vrot.slane %v4523, 4
      %v4525 = vrot.slane %v3678, 5
      %v4526 = vsel %vm1308, %v4524, %v4525
      %v4527 = vrot.slane %v4525, 4
      %v4528 = vrot.slane %v3679, 5
      %v4529 = vsel %vm1308, %v4527, %v4528
      %v4530 = vrot.slane %v4376, 5
      %v4531 = vrot.slane %v4530, 4
      %v4532 = vrot.slane %v3681, 5
      %v4533 = vsel %vm1308, %v4531, %v4532
      %v4534 = vrot.slane %v4532, 4
      %v4535 = vrot.slane %v3682, 5
      %v4536 = vsel %vm1308, %v4534, %v4535
      %s4537 = scalar_lea.vmem %s242, 16
      %v4538 = vld [vmem:[%s4537] sm:$0x3]
      %v4539 = vunpack.c.l.b16 %v4428
      %v4540 = vunpack.c.l.b16 %v4431
      %v4541 = vunpack.c.l.b16 %v4435
      %v4542 = vunpack.c.l.b16 %v4438
      %v4543 = vunpack.c.l.b16 %v4442
      %v4544 = vunpack.c.l.b16 %v4445
      %v4545 = vunpack.c.l.b16 %v4449
      %v4546 = vunpack.c.l.b16 %v4452
      %v4547 = vunpack.c.l.b16 %v4456
      %v4548 = vunpack.c.l.b16 %v4459
      %v4549 = vunpack.c.l.b16 %v4463
      %v4550 = vunpack.c.l.b16 %v4466
      %v4551 = vunpack.c.l.b16 %v4470
      %v4552 = vunpack.c.l.b16 %v4473
      %v4553 = vunpack.c.l.b16 %v4477
      %v4554 = vunpack.c.l.b16 %v4480
      %v4555 = vunpack.c.l.b16 %v4484
      %v4556 = vunpack.c.l.b16 %v4487
      %v4557 = vunpack.c.l.b16 %v4491
      %v4558 = vunpack.c.l.b16 %v4494
      %v4559 = vunpack.c.l.b16 %v4498
      %v4560 = vunpack.c.l.b16 %v4501
      %v4561 = vunpack.c.l.b16 %v4505
      %v4562 = vunpack.c.l.b16 %v4508
      %v4563 = vunpack.c.l.b16 %v4512
      %v4564 = vunpack.c.l.b16 %v4515
      %v4565 = vunpack.c.l.b16 %v4519
      %v4566 = vunpack.c.l.b16 %v4522
      %v4567 = vunpack.c.l.b16 %v4526
      %v4568 = vunpack.c.l.b16 %v4529
      %v4569 = vunpack.c.l.b16 %v4533
      %v4570 = vunpack.c.l.b16 %v4536
      %v4571 = vpack.c.b16 %v4540, %v4539
      %v4572 = vpack.c.b16 %v4542, %v4541
      %v4573 = vpack.c.b16 %v4544, %v4543
      %v4574 = vpack.c.b16 %v4546, %v4545
      %v4575 = vpack.c.b16 %v4548, %v4547
      %v4576 = vpack.c.b16 %v4550, %v4549
      %v4577 = vpack.c.b16 %v4552, %v4551
      %v4578 = vpack.c.b16 %v4554, %v4553
      %v4579 = vpack.c.b16 %v4556, %v4555
      %v4580 = vpack.c.b16 %v4558, %v4557
      %v4581 = vpack.c.b16 %v4560, %v4559
      %v4582 = vpack.c.b16 %v4562, %v4561
      %v4583 = vpack.c.b16 %v4564, %v4563
      %v4584 = vpack.c.b16 %v4566, %v4565
      %v4585 = vpack.c.b16 %v4568, %v4567
      %v4586 = vpack.c.b16 %v4570, %v4569
      %v4588 = vsel %vm752, %v4571, 0
      %v4591 = vsel %vm752, %v4572, 0
      %v4594 = vsel %vm752, %v4573, 0
      %v4597 = vsel %vm752, %v4574, 0
      %v4600 = vsel %vm752, %v4575, 0
      %v4603 = vsel %vm752, %v4576, 0
      %v4606 = vsel %vm752, %v4577, 0
      %v4609 = vsel %vm752, %v4578, 0
      %v4612 = vsel %vm752, %v4579, 0
      %v4615 = vsel %vm752, %v4580, 0
      %v4618 = vsel %vm752, %v4581, 0
      %v4621 = vsel %vm752, %v4582, 0
      %v4624 = vsel %vm752, %v4583, 0
      %v4627 = vsel %vm752, %v4584, 0
      %v4630 = vsel %vm752, %v4585, 0
      %v4633 = vsel %vm752, %v4586, 0
      %v4636 = vsel %vm801, %v4538, 0
      %4638 = vmatprep.subr.bf16.mxu0 0
      %4639 = vmatpush1.bf16.msra.mxu0 %v4636
      %4640 = vmatprep.subr.bf16.mxu0 0
      %4641 = vmatpush1.bf16.msra.mxu0 0
      %4642 = vmatprep.subr.bf16.mxu0 0
      %4643 = vmatpush1.bf16.msra.mxu0 0
      %4644 = vmatprep.subr.bf16.mxu0 0
      %4645 = vmatpush1.bf16.msra.mxu0 0
      %4646 = vmatprep.subr.bf16.mxu0 0
      %4647 = vmatpush1.bf16.msra.mxu0 0
      %4648 = vmatprep.subr.bf16.mxu0 0
      %4649 = vmatpush1.bf16.msra.mxu0 0
      %4650 = vmatprep.subr.bf16.mxu0 0
      %4651 = vmatpush1.bf16.msra.mxu0 0
      %4652 = vmatprep.subr.bf16.mxu0 0
      %4653 = vmatpush1.bf16.msra.mxu0 0
      %4654 = vmatprep.subr.bf16.mxu0 0
      %4655 = vmatpush1.bf16.msra.mxu0 0
      %4656 = vmatprep.subr.bf16.mxu0 0
      %4657 = vmatpush1.bf16.msra.mxu0 0
      %4658 = vmatprep.subr.bf16.mxu0 0
      %4659 = vmatpush1.bf16.msra.mxu0 0
      %4660 = vmatprep.subr.bf16.mxu0 0
      %4661 = vmatpush1.bf16.msra.mxu0 0
      %4662 = vmatprep.subr.bf16.mxu0 0
      %4663 = vmatpush1.bf16.msra.mxu0 0
      %4664 = vmatprep.subr.bf16.mxu0 0
      %4665 = vmatpush1.bf16.msra.mxu0 0
      %4666 = vmatprep.subr.bf16.mxu0 0
      %4667 = vmatpush1.bf16.msra.mxu0 0
      %4668 = vmatprep.subr.bf16.mxu0 0
      %4669 = vmatpush1.bf16.msra.mxu0 0
      %4670 = vmatprep.mubr.bf16.mxu0 0
      %4671 = vmatmul.mubr.bf16.gmra.mrb[0].mxu0 %v4588
      %v4672 = vpop.f32.mrb[0].mxu0
      %v4673 = vadd.f32 0.0, %v4672
      %v4674 = vpop.f32.mrb[0].mxu0
      %v4675 = vpop.f32.mrb[0].mxu0
      %v4676 = vadd.f32 0.0, %v4675
      %v4677 = vpop.f32.mrb[0].mxu0
      %4678 = vmatprep.mubr.bf16.mxu0 0
      %4679 = vmatmul.mubr.bf16.gmra.mrb[0].mxu0 %v4591
      %v4680 = vpop.f32.mrb[0].mxu0
      %v4681 = vadd.f32 0.0, %v4680
      %v4682 = vpop.f32.mrb[0].mxu0
      %v4683 = vpop.f32.mrb[0].mxu0
      %v4684 = vadd.f32 0.0, %v4683
      %v4685 = vpop.f32.mrb[0].mxu0
      %4686 = vmatprep.mubr.bf16.mxu0 0
      %4687 = vmatmul.mubr.bf16.gmra.mrb[0].mxu0 %v4594
      %v4688 = vpop.f32.mrb[0].mxu0
      %v4689 = vadd.f32 0.0, %v4688
      %v4690 = vpop.f32.mrb[0].mxu0
      %v4691 = vpop.f32.mrb[0].mxu0
      %v4692 = vadd.f32 0.0, %v4691
      %v4693 = vpop.f32.mrb[0].mxu0
      %4694 = vmatprep.mubr.bf16.mxu0 0
      %4695 = vmatmul.mubr.bf16.gmra.mrb[0].mxu0 %v4597
      %v4696 = vpop.f32.mrb[0].mxu0
      %v4697 = vadd.f32 0.0, %v4696
      %v4698 = vpop.f32.mrb[0].mxu0
      %v4699 = vpop.f32.mrb[0].mxu0
      %v4700 = vadd.f32 0.0, %v4699
      %v4701 = vpop.f32.mrb[0].mxu0
      %4702 = vmatprep.mubr.bf16.mxu0 0
      %4703 = vmatmul.mubr.bf16.gmra.mrb[0].mxu0 %v4600
      %v4704 = vpop.f32.mrb[0].mxu0
      %v4705 = vadd.f32 0.0, %v4704
      %v4706 = vpop.f32.mrb[0].mxu0
      %v4707 = vpop.f32.mrb[0].mxu0
      %v4708 = vadd.f32 0.0, %v4707
      %v4709 = vpop.f32.mrb[0].mxu0
      %4710 = vmatprep.mubr.bf16.mxu0 0
      %4711 = vmatmul.mubr.bf16.gmra.mrb[0].mxu0 %v4603
      %v4712 = vpop.f32.mrb[0].mxu0
      %v4713 = vadd.f32 0.0, %v4712
      %v4714 = vpop.f32.mrb[0].mxu0
      %v4715 = vpop.f32.mrb[0].mxu0
      %v4716 = vadd.f32 0.0, %v4715
      %v4717 = vpop.f32.mrb[0].mxu0
      %4718 = vmatprep.mubr.bf16.mxu0 0
      %4719 = vmatmul.mubr.bf16.gmra.mrb[0].mxu0 %v4606
      %v4720 = vpop.f32.mrb[0].mxu0
      %v4721 = vadd.f32 0.0, %v4720
      %v4722 = vpop.f32.mrb[0].mxu0
      %v4723 = vpop.f32.mrb[0].mxu0
      %v4724 = vadd.f32 0.0, %v4723
      %v4725 = vpop.f32.mrb[0].mxu0
      %4726 = vmatprep.mubr.bf16.mxu0 0
      %4727 = vmatmul.mubr.bf16.gmra.mrb[0].mxu0 %v4609
      %v4728 = vpop.f32.mrb[0].mxu0
      %v4729 = vadd.f32 0.0, %v4728
      %v4730 = vpop.f32.mrb[0].mxu0
      %v4731 = vpop.f32.mrb[0].mxu0
      %v4732 = vadd.f32 0.0, %v4731
      %v4733 = vpop.f32.mrb[0].mxu0
      %4734 = vmatprep.mubr.bf16.mxu0 0
      %4735 = vmatmul.mubr.bf16.gmra.mrb[0].mxu0 %v4612
      %v4736 = vpop.f32.mrb[0].mxu0
      %v4737 = vadd.f32 0.0, %v4736
      %v4738 = vpop.f32.mrb[0].mxu0
      %v4739 = vpop.f32.mrb[0].mxu0
      %v4740 = vadd.f32 0.0, %v4739
      %v4741 = vpop.f32.mrb[0].mxu0
      %4742 = vmatprep.mubr.bf16.mxu0 0
      %4743 = vmatmul.mubr.bf16.gmra.mrb[0].mxu0 %v4615
      %v4744 = vpop.f32.mrb[0].mxu0
      %v4745 = vadd.f32 0.0, %v4744
      %v4746 = vpop.f32.mrb[0].mxu0
      %v4747 = vpop.f32.mrb[0].mxu0
      %v4748 = vadd.f32 0.0, %v4747
      %v4749 = vpop.f32.mrb[0].mxu0
      %4750 = vmatprep.mubr.bf16.mxu0 0
      %4751 = vmatmul.mubr.bf16.gmra.mrb[0].mxu0 %v4618
      %v4752 = vpop.f32.mrb[0].mxu0
      %v4753 = vadd.f32 0.0, %v4752
      %v4754 = vpop.f32.mrb[0].mxu0
      %v4755 = vpop.f32.mrb[0].mxu0
      %v4756 = vadd.f32 0.0, %v4755
      %v4757 = vpop.f32.mrb[0].mxu0
      %4758 = vmatprep.mubr.bf16.mxu0 0
      %4759 = vmatmul.mubr.bf16.gmra.mrb[0].mxu0 %v4621
      %v4760 = vpop.f32.mrb[0].mxu0
      %v4761 = vadd.f32 0.0, %v4760
      %v4762 = vpop.f32.mrb[0].mxu0
      %v4763 = vpop.f32.mrb[0].mxu0
      %v4764 = vadd.f32 0.0, %v4763
      %v4765 = vpop.f32.mrb[0].mxu0
      %4766 = vmatprep.mubr.bf16.mxu0 0
      %4767 = vmatmul.mubr.bf16.gmra.mrb[0].mxu0 %v4624
      %v4768 = vpop.f32.mrb[0].mxu0
      %v4769 = vadd.f32 0.0, %v4768
      %v4770 = vpop.f32.mrb[0].mxu0
      %v4771 = vpop.f32.mrb[0].mxu0
      %v4772 = vadd.f32 0.0, %v4771
      %v4773 = vpop.f32.mrb[0].mxu0
      %4774 = vmatprep.mubr.bf16.mxu0 0
      %4775 = vmatmul.mubr.bf16.gmra.mrb[0].mxu0 %v4627
      %v4776 = vpop.f32.mrb[0].mxu0
      %v4777 = vadd.f32 0.0, %v4776
      %v4778 = vpop.f32.mrb[0].mxu0
      %v4779 = vpop.f32.mrb[0].mxu0
      %v4780 = vadd.f32 0.0, %v4779
      %v4781 = vpop.f32.mrb[0].mxu0
      %4782 = vmatprep.mubr.bf16.mxu0 0
      %4783 = vmatmul.mubr.bf16.gmra.mrb[0].mxu0 %v4630
      %v4784 = vpop.f32.mrb[0].mxu0
      %v4785 = vadd.f32 0.0, %v4784
      %v4786 = vpop.f32.mrb[0].mxu0
      %v4787 = vpop.f32.mrb[0].mxu0
      %v4788 = vadd.f32 0.0, %v4787
      %v4789 = vpop.f32.mrb[0].mxu0
      %4790 = vmatprep.mubr.bf16.mxu0 0
      %4791 = vmatmul.mubr.bf16.gmra.mrb[0].mxu0 %v4633
      %v4792 = vpop.f32.mrb[0].mxu0
      %v4793 = vadd.f32 0.0, %v4792
      %v4794 = vpop.f32.mrb[0].mxu0
      %v4795 = vpop.f32.mrb[0].mxu0
      %v4796 = vadd.f32 0.0, %v4795
      %v4797 = vpop.f32.mrb[0].mxu0
      %4798 = vdwg.mxu0
      %v4799 = vadd.f32 %v4329, %v4673
      %v4800 = vadd.f32 %v4330, %v4676
      %v4801 = vadd.f32 %v4331, %v4681
      %v4802 = vadd.f32 %v4332, %v4684
      %v4803 = vadd.f32 %v4333, %v4689
      %v4804 = vadd.f32 %v4334, %v4692
      %v4805 = vadd.f32 %v4335, %v4697
      %v4806 = vadd.f32 %v4336, %v4700
      %v4807 = vadd.f32 %v4337, %v4705
      %v4808 = vadd.f32 %v4338, %v4708
      %v4809 = vadd.f32 %v4339, %v4713
      %v4810 = vadd.f32 %v4340, %v4716
      %v4811 = vadd.f32 %v4341, %v4721
      %v4812 = vadd.f32 %v4342, %v4724
      %v4813 = vadd.f32 %v4343, %v4729
      %v4814 = vadd.f32 %v4344, %v4732
      %v4815 = vadd.f32 %v4345, %v4737
      %v4816 = vadd.f32 %v4346, %v4740
      %v4817 = vadd.f32 %v4347, %v4745
      %v4818 = vadd.f32 %v4348, %v4748
      %v4819 = vadd.f32 %v4349, %v4753
      %v4820 = vadd.f32 %v4350, %v4756
      %v4821 = vadd.f32 %v4351, %v4761
      %v4822 = vadd.f32 %v4352, %v4764
      %v4823 = vadd.f32 %v4353, %v4769
      %v4824 = vadd.f32 %v4354, %v4772
      %v4825 = vadd.f32 %v4355, %v4777
      %v4826 = vadd.f32 %v4356, %v4780
      %v4827 = vadd.f32 %v4357, %v4785
      %v4828 = vadd.f32 %v4358, %v4788
      %v4829 = vadd.f32 %v4359, %v4793
      %v4830 = vadd.f32 %v4360, %v4796
      %v4831 = vld [vmem:[%s245] sm:$0x1]
      %v4833 = vlaneseq
      %v4834 = vshrl.u32 %v4833, 7
      %v4835 = vsub.s32 0, %v4834
      %v4836 = vrot.slane %v4831, %v4835
      %v4838 = vadd.f32 %v4799, %v4836
      %v4839 = vadd.f32 %v4800, %v4836
      %v4840 = vadd.f32 %v4801, %v4836
      %v4841 = vadd.f32 %v4802, %v4836
      %v4842 = vadd.f32 %v4803, %v4836
      %v4843 = vadd.f32 %v4804, %v4836
      %v4844 = vadd.f32 %v4805, %v4836
      %v4845 = vadd.f32 %v4806, %v4836
      %v4846 = vadd.f32 %v4807, %v4836
      %v4847 = vadd.f32 %v4808, %v4836
      %v4848 = vadd.f32 %v4809, %v4836
      %v4849 = vadd.f32 %v4810, %v4836
      %v4850 = vadd.f32 %v4811, %v4836
      %v4851 = vadd.f32 %v4812, %v4836
      %v4852 = vadd.f32 %v4813, %v4836
      %v4853 = vadd.f32 %v4814, %v4836
      %v4854 = vadd.f32 %v4815, %v4836
      %v4855 = vadd.f32 %v4816, %v4836
      %v4856 = vadd.f32 %v4817, %v4836
      %v4857 = vadd.f32 %v4818, %v4836
      %v4858 = vadd.f32 %v4819, %v4836
      %v4859 = vadd.f32 %v4820, %v4836
      %v4860 = vadd.f32 %v4821, %v4836
      %v4861 = vadd.f32 %v4822, %v4836
      %v4862 = vadd.f32 %v4823, %v4836
      %v4863 = vadd.f32 %v4824, %v4836
      %v4864 = vadd.f32 %v4825, %v4836
      %v4865 = vadd.f32 %v4826, %v4836
      %v4866 = vadd.f32 %v4827, %v4836
      %v4867 = vadd.f32 %v4828, %v4836
      %v4868 = vadd.f32 %v4829, %v4836
      %v4869 = vadd.f32 %v4830, %v4836
      %v4870 = vmax.f32 %v4838, 0.0
      %v4871 = vmax.f32 %v4839, 0.0
      %v4872 = vmax.f32 %v4840, 0.0
      %v4873 = vmax.f32 %v4841, 0.0
      %v4874 = vmax.f32 %v4842, 0.0
      %v4875 = vmax.f32 %v4843, 0.0
      %v4876 = vmax.f32 %v4844, 0.0
      %v4877 = vmax.f32 %v4845, 0.0
      %v4878 = vmax.f32 %v4846, 0.0
      %v4879 = vmax.f32 %v4847, 0.0
      %v4880 = vmax.f32 %v4848, 0.0
      %v4881 = vmax.f32 %v4849, 0.0
      %v4882 = vmax.f32 %v4850, 0.0
      %v4883 = vmax.f32 %v4851, 0.0
      %v4884 = vmax.f32 %v4852, 0.0
      %v4885 = vmax.f32 %v4853, 0.0
      %v4886 = vmax.f32 %v4854, 0.0
      %v4887 = vmax.f32 %v4855, 0.0
      %v4888 = vmax.f32 %v4856, 0.0
      %v4889 = vmax.f32 %v4857, 0.0
      %v4890 = vmax.f32 %v4858, 0.0
      %v4891 = vmax.f32 %v4859, 0.0
      %v4892 = vmax.f32 %v4860, 0.0
      %v4893 = vmax.f32 %v4861, 0.0
      %v4894 = vmax.f32 %v4862, 0.0
      %v4895 = vmax.f32 %v4863, 0.0
      %v4896 = vmax.f32 %v4864, 0.0
      %v4897 = vmax.f32 %v4865, 0.0
      %v4898 = vmax.f32 %v4866, 0.0
      %v4899 = vmax.f32 %v4867, 0.0
      %v4900 = vmax.f32 %v4868, 0.0
      %v4901 = vmax.f32 %v4869, 0.0
      %v4902 = vpack.c.bf16 %v4871, %v4870
      %v4903 = vpack.c.bf16 %v4873, %v4872
      %v4904 = vpack.c.bf16 %v4875, %v4874
      %v4905 = vpack.c.bf16 %v4877, %v4876
      %v4906 = vpack.c.bf16 %v4879, %v4878
      %v4907 = vpack.c.bf16 %v4881, %v4880
      %v4908 = vpack.c.bf16 %v4883, %v4882
      %v4909 = vpack.c.bf16 %v4885, %v4884
      %v4910 = vpack.c.bf16 %v4887, %v4886
      %v4911 = vpack.c.bf16 %v4889, %v4888
      %v4912 = vpack.c.bf16 %v4891, %v4890
      %v4913 = vpack.c.bf16 %v4893, %v4892
      %v4914 = vpack.c.bf16 %v4895, %v4894
      %v4915 = vpack.c.bf16 %v4897, %v4896
      %v4916 = vpack.c.bf16 %v4899, %v4898
      %v4917 = vpack.c.bf16 %v4901, %v4900
      %v4934 = vunpack.c.l.b16 %v4902
      %v4935 = vunpack.c.h.b16 %v4902
      %v4936 = vunpack.c.l.b16 %v4903
      %v4937 = vunpack.c.h.b16 %v4903
      %v4938 = vunpack.c.l.b16 %v4904
      %v4939 = vunpack.c.h.b16 %v4904
      %v4940 = vunpack.c.l.b16 %v4905
      %v4941 = vunpack.c.h.b16 %v4905
      %v4942 = vunpack.c.l.b16 %v4906
      %v4943 = vunpack.c.h.b16 %v4906
      %v4944 = vunpack.c.l.b16 %v4907
      %v4945 = vunpack.c.h.b16 %v4907
      %v4946 = vunpack.c.l.b16 %v4908
      %v4947 = vunpack.c.h.b16 %v4908
      %v4948 = vunpack.c.l.b16 %v4909
      %v4949 = vunpack.c.h.b16 %v4909
      %v4950 = vunpack.c.l.b16 %v4910
      %v4951 = vunpack.c.h.b16 %v4910
      %v4952 = vunpack.c.l.b16 %v4911
      %v4953 = vunpack.c.h.b16 %v4911
      %v4954 = vunpack.c.l.b16 %v4912
      %v4955 = vunpack.c.h.b16 %v4912
      %v4956 = vunpack.c.l.b16 %v4913
      %v4957 = vunpack.c.h.b16 %v4913
      %v4958 = vunpack.c.l.b16 %v4914
      %v4959 = vunpack.c.h.b16 %v4914
      %v4960 = vunpack.c.l.b16 %v4915
      %v4961 = vunpack.c.h.b16 %v4915
      %v4962 = vunpack.c.l.b16 %v4916
      %v4963 = vunpack.c.h.b16 %v4916
      %v4964 = vunpack.c.l.b16 %v4917
      %v4965 = vunpack.c.h.b16 %v4917
      %v4966 = vpack.c.b16 %v4934, %v4934
      %v4967 = vpack.c.b16 %v4935, %v4935
      %v4968 = vpack.c.b16 %v4936, %v4936
      %v4969 = vpack.c.b16 %v4937, %v4937
      %v4970 = vpack.c.b16 %v4938, %v4938
      %v4971 = vpack.c.b16 %v4939, %v4939
      %v4972 = vpack.c.b16 %v4940, %v4940
      %v4973 = vpack.c.b16 %v4941, %v4941
      %v4974 = vpack.c.b16 %v4942, %v4942
      %v4975 = vpack.c.b16 %v4943, %v4943
      %v4976 = vpack.c.b16 %v4944, %v4944
      %v4977 = vpack.c.b16 %v4945, %v4945
      %v4978 = vpack.c.b16 %v4946, %v4946
      %v4979 = vpack.c.b16 %v4947, %v4947
      %v4980 = vpack.c.b16 %v4948, %v4948
      %v4981 = vpack.c.b16 %v4949, %v4949
      %v4982 = vpack.c.b16 %v4950, %v4950
      %v4983 = vpack.c.b16 %v4951, %v4951
      %v4984 = vpack.c.b16 %v4952, %v4952
      %v4985 = vpack.c.b16 %v4953, %v4953
      %v4986 = vpack.c.b16 %v4954, %v4954
      %v4987 = vpack.c.b16 %v4955, %v4955
      %v4988 = vpack.c.b16 %v4956, %v4956
      %v4989 = vpack.c.b16 %v4957, %v4957
      %v4990 = vpack.c.b16 %v4958, %v4958
      %v4991 = vpack.c.b16 %v4959, %v4959
      %v4992 = vpack.c.b16 %v4960, %v4960
      %v4993 = vpack.c.b16 %v4961, %v4961
      %v4994 = vpack.c.b16 %v4962, %v4962
      %v4995 = vpack.c.b16 %v4963, %v4963
      %v4996 = vpack.c.b16 %v4964, %v4964
      %v4997 = vpack.c.b16 %v4965, %v4965
      %5030 = vst [vmem:[%s259] sm:$0xf] %v4966
      %5031 = vst [vmem:[%s259 + $0x4] sm:$0xf] %v4967
      %5032 = vst [vmem:[%s259 + $0x8] sm:$0xf] %v4968
      %5033 = vst [vmem:[%s259 + $0xc] sm:$0xf] %v4969
      %5034 = vst [vmem:[%s259 + $0x10] sm:$0xf] %v4970
      %5035 = vst [vmem:[%s259 + $0x14] sm:$0xf] %v4971
      %5036 = vst [vmem:[%s259 + $0x18] sm:$0xf] %v4972
      %5037 = vst [vmem:[%s259 + $0x1c] sm:$0xf] %v4973
      %5038 = vst [vmem:[%s259 + $0x20] sm:$0xf] %v4974
      %5039 = vst [vmem:[%s259 + $0x24] sm:$0xf] %v4975
      %5040 = vst [vmem:[%s259 + $0x28] sm:$0xf] %v4976
      %5041 = vst [vmem:[%s259 + $0x2c] sm:$0xf] %v4977
      %5042 = vst [vmem:[%s259 + $0x30] sm:$0xf] %v4978
      %5043 = vst [vmem:[%s259 + $0x34] sm:$0xf] %v4979
      %5044 = vst [vmem:[%s259 + $0x38] sm:$0xf] %v4980
      %5045 = vst [vmem:[%s259 + $0x3c] sm:$0xf] %v4981
      %5046 = vst [vmem:[%s259 + $0x40] sm:$0xf] %v4982
      %5047 = vst [vmem:[%s259 + $0x44] sm:$0xf] %v4983
      %5048 = vst [vmem:[%s259 + $0x48] sm:$0xf] %v4984
      %5049 = vst [vmem:[%s259 + $0x4c] sm:$0xf] %v4985
      %5050 = vst [vmem:[%s259 + $0x50] sm:$0xf] %v4986
      %5051 = vst [vmem:[%s259 + $0x54] sm:$0xf] %v4987
      %5052 = vst [vmem:[%s259 + $0x58] sm:$0xf] %v4988
      %5053 = vst [vmem:[%s259 + $0x5c] sm:$0xf] %v4989
      %5054 = vst [vmem:[%s259 + $0x60] sm:$0xf] %v4990
      %5055 = vst [vmem:[%s259 + $0x64] sm:$0xf] %v4991
      %5056 = vst [vmem:[%s259 + $0x68] sm:$0xf] %v4992
      %5057 = vst [vmem:[%s259 + $0x6c] sm:$0xf] %v4993
      %5058 = vst [vmem:[%s259 + $0x70] sm:$0xf] %v4994
      %5059 = vst [vmem:[%s259 + $0x74] sm:$0xf] %v4995
      %5060 = vst [vmem:[%s259 + $0x78] sm:$0xf] %v4996
      %5061 = vst [vmem:[%s259 + $0x7c] sm:$0xf] %v4997
      %s5062 = smul.u32 16, %s21
      %p5063 = scmp.lt.s32.totalorder %s19, 1
      %s5064 = scalar_select %p5063, %s19, 1
      %p5065 = scmp.lt.s32.totalorder %s20, 0
      %s5066 = scalar_select %p5065, %s20, 0
      %p5067 = scmp.lt.s32.totalorder %s5062, 15
      %s5068 = scalar_select %p5067, %s5062, 15
      %s5069 = smul.addr %s5068, 2
      %s5070 = smul.addr %s5066, 32
      %s5071 = sadd.s32 %s5069, %s5070
      %s5072 = smul.addr %s5064, 32
      %s5073 = sadd.s32 %s5071, %s5072
      %s5074 = smul.addr %s5073, 4
      %s5075 = scalar_lea.vmem %s3, %s5074
      // Predicated region
      $region33: #{conv_block_forward.1} parent=31 // pred_check
        %p5076 = pneg %p135
      $region34: #{conv_block_forward.1} parent=31 // pred_check_branch
        %5078 = sbr.rel (%p5076) target = $region36
      $region35: #{conv_block_forward.1} parent=31 // pred_region
        %s5079 = smul.u32 16, %s21
      $region36: #{conv_block_forward.1} parent=31 // pred_fallthru
        _
    $region32: #{conv_block_forward.1} parent=5 // pred_fallthru
      _
    %p5080 = scmp.le.s32.totalorder 2, %s9
    // Predicated region
    $region37: #{conv_block_forward.1} parent=5 // pred_check
      %p5081 = pneg %p5080
    $region38: #{conv_block_forward.1} parent=5 // pred_check_branch
      %5083 = sbr.rel (%p5081) target = $region40
    $region39: #{conv_block_forward.1} parent=5 // pred_region
      %s5084 = ssub.s32 %s9, 2
      // Predicated region
      $region41: #{conv_block_forward.1} parent=39 // pred_check
        %p5085 = pneg %p141
      $region42: #{conv_block_forward.1} parent=39 // pred_check_branch
        %5087 = sbr.rel (%p5085) target = $region44
      $region43: #{conv_block_forward.1} parent=39 // pred_region
        %s5088 = smul.u32 16, %s24
        %p5089 = scmp.lt.s32.totalorder %s22, 1
        %s5090 = scalar_select %p5089, %s22, 1
        %p5091 = scmp.lt.s32.totalorder %s23, 0
        %s5092 = scalar_select %p5091, %s23, 0
        %p5093 = scmp.lt.s32.totalorder %s5088, 15
        %s5094 = scalar_select %p5093, %s5088, 15
        %s5095 = smul.addr %s5094, 2
        %s5096 = smul.addr %s5092, 32
        %s5097 = sadd.s32 %s5095, %s5096
        %s5098 = smul.addr %s5090, 32
        %s5099 = sadd.s32 %s5097, %s5098
        %s5100 = smul.addr %s5099, 4
        %s5101 = scalar_lea.vmem %s3, %s5100
      $region44: #{conv_block_forward.1} parent=39 // pred_fallthru
        _
    $region40: #{conv_block_forward.1} parent=5 // pred_fallthru
      _
  $region6: #{conv_block_forward.1} parent=0 // loop_footer
    %s13 = sadd.s32 1, %s9
  $region7: #{conv_block_forward.1} parent=0 // loop_footer_branch
    %8 = sbr.rel target = $region3
  $region8: #{conv_block_forward.1} parent=0 // loop_exit
    _

</llo_original>
